<compile_context>
chip_gen: v5e
topology: v5e:2x2
jax: 0.10.0
libtpu: 0.0.40
codegen_flags: <defaults>
</compile_context>

<pallas_src>
import functools

import jax
import jax.numpy as jnp
from jax import lax
from jax.experimental import pallas as pl
from jax.experimental.pallas import tpu as pltpu


def _convstar_kernel(x_ref, h_ref, w_ref, b_ref, out_ref, st_ref, acc_ref,
                     *, H, W, K, C_in, C_hid, block_b):
    """One batch tile (block_b images) per grid step.

    x_ref   : (block_b, H, W, C_in)       inputs, NHWC
    h_ref   : (block_b, H, W, C_hid)      previous state, NHWC
    w_ref   : (K, K, C_st, N)             fused weight, cols = [gate | update | prev-pass | pad]
    b_ref   : (1, N)                      fused bias        [b_gate | b_update | 0 | 0]
    out_ref : (block_b, C_hid, H*W)       new state, channel-major (NCHW, lane-dense)
    st_ref  : (block_b, Hp, Wp, C_st)     VMEM scratch: zero-padded [h | x] activation block
    acc_ref : (block_b*H*W, N)            VMEM accumulator
    """
    p = K // 2
    C_st = C_in + C_hid
    HW = H * W
    M = block_b * HW
    N = acc_ref.shape[1]

    # ---- Build the zero-padded [h | x] activation block in VMEM (no HBM pad/concat).
    st_ref[...] = jnp.zeros_like(st_ref)                       # halo (and interior) zero
    st_ref[:, p:p + H, p:p + W, :C_hid] = h_ref[...]           # big block: lane offset 0 (aligned)
    st_ref[:, p:p + H, p:p + W, C_hid:] = x_ref[...]           # small block takes the lane shift

    # ---- K*K shifted taps, each a single (M, C_st) x (C_st, N) MXU contraction.
    # Fused output columns: [gate | update | prev passthrough | zero pad].
    # The W (sublane) shift is hoisted to the outer loop (only K-1 shifted loads);
    # the H shift is tile-granular and free.  Bias is folded into the first tap and
    # all taps accumulate into the VMEM scratch accumulator.
    first = True
    for kj in range(K):
        col = st_ref[:, :, kj:kj + W, :]                       # (block_b, Hp, W, C_st)
        for ki in range(K):
            win = col[:, ki:ki + H].reshape(M, C_st)           # relayout-free while W % 8 == 0
            tap = jnp.dot(win, w_ref[ki, kj],
                          preferred_element_type=jnp.float32)
            if first:
                acc_ref[...] = tap + jnp.broadcast_to(b_ref[...], (M, N))
                first = False
            else:
                acc_ref[...] += tap

    # ---- Single transpose to channel-major; lane-dense epilogue + NCHW store.
    acc_t = jnp.transpose(acc_ref[...])                        # (N, M): (8,128)-aligned both ways
    gain = jax.nn.sigmoid(acc_t[:C_hid])                       # (C_hid, M)
    update = jnp.tanh(acc_t[C_hid:2 * C_hid])                  # (C_hid, M)
    prev = acc_t[2 * C_hid:3 * C_hid]                          # (C_hid, M) == prev_state exactly
    new_state = gain * prev + (1.0 - gain) * update            # (C_hid, M), 100% lane occupancy

    for bt in range(block_b):                                  # lane-aligned (HW-multiple) slices
        out_ref[bt] = new_state[:, bt * HW:(bt + 1) * HW]


def _pick_block_b(B, HW, target_rows=2048):
    """Largest divisor of B keeping the per-step matmul M-dim at <= ~target_rows."""
    cap = max(1, target_rows // HW)
    best = 1
    for d in range(1, B + 1):
        if B % d == 0 and d <= cap:
            best = d
    return best


def convstar_cell_forward(inputs_nchw, prev_state_nchw,
                          w_gate, b_gate, w_update, b_update, kernel_size,
                          *, block_b=None):
    """ConvSTARCell.forward.  inputs / prev_state / output are NCHW (PyTorch layout).

    Conv weights are HWIO with PyTorch's channel order:
      w_gate   (K, K, C_in + C_hid, C_hid)  -- input channels ordered [x, h]
      w_update (K, K, C_in, C_hid)
    """
    B, C_in, H, W = inputs_nchw.shape
    C_hid = w_gate.shape[-1]
    K = int(kernel_size)
    assert K % 2 == 1, (
        "Only odd kernel_size matches PyTorch Conv2d(padding=K//2) with a same-sized output.")
    assert w_gate.shape[2] == C_in + C_hid and w_update.shape[2] == C_in
    p = K // 2
    C_st = C_in + C_hid
    Hp, Wp = H + 2 * p, W + 2 * p
    HW = H * W

    if block_b is None:
        # NOTE: on v7x (2 TCs) with small B you may want to cap block_b so the grid
        # keeps >= 2 parallel steps; at 16x16 the per-step overhead dominates instead.
        block_b = _pick_block_b(B, HW)
    assert B % block_b == 0
    M = block_b * HW

    # Fused output width: [gate | update | prev passthrough] rounded up to a lane multiple
    # (128) so the accumulator and its transpose are natively (8,128)-tiled.
    N = ((3 * C_hid + 127) // 128) * 128

    # NCHW -> NHWC activation streams.  No concat / pad materialization: the padded
    # [h | x] block is assembled inside the kernel's VMEM scratch.
    x = jnp.transpose(inputs_nchw, (0, 2, 3, 1)).astype(jnp.float32)
    if prev_state_nchw is None:
        h = jnp.zeros((B, H, W, C_hid), jnp.float32)
    else:
        h = jnp.transpose(prev_state_nchw, (0, 2, 3, 1)).astype(jnp.float32)

    # Fused weight.  Scratch channel order is [h, x] (h first so its interior write is
    # lane-aligned); reorder the gate weight's input channels accordingly.
    wg = w_gate.astype(jnp.float32)
    wu = w_update.astype(jnp.float32)
    gate_cols = jnp.concatenate([wg[:, :, C_in:, :], wg[:, :, :C_in, :]], axis=2)  # (K,K,C_st,C_hid)
    # Update conv only sees x: zero-extend over the h rows.  (Fine while 2*C_hid stays
    # below native MXU width; split back into two contractions once C_hid >= 128.)
    upd_cols = jnp.concatenate(
        [jnp.zeros((K, K, C_hid, C_hid), jnp.float32), wu], axis=2)                # (K,K,C_st,C_hid)
    # Passthrough: identity over the h channels at the centre tap only, so the fused conv's
    # third column block reproduces prev_state exactly (centre-tap reads are always interior).
    pass_cols = jnp.zeros((K, K, C_st, C_hid), jnp.float32)
    pass_cols = pass_cols.at[p, p, :C_hid, :].set(jnp.eye(C_hid, dtype=jnp.float32))
    pad_cols = jnp.zeros((K, K, C_st, N - 3 * C_hid), jnp.float32)
    w_fused = jnp.concatenate([gate_cols, upd_cols, pass_cols, pad_cols], axis=3)  # (K,K,C_st,N)

    b_fused = jnp.concatenate([
        b_gate.astype(jnp.float32), b_update.astype(jnp.float32),
        jnp.zeros((N - 2 * C_hid,), jnp.float32)]).reshape(1, N)

    kernel = functools.partial(_convstar_kernel, H=H, W=W, K=K,
                               C_in=C_in, C_hid=C_hid, block_b=block_b)

    out = pl.pallas_call(
        kernel,
        out_shape=jax.ShapeDtypeStruct((B, C_hid, HW), jnp.float32),
        grid_spec=pltpu.PrefetchScalarGridSpec(
            num_scalar_prefetch=0,
            grid=(B // block_b,),
            in_specs=[
                pl.BlockSpec((block_b, H, W, C_in), lambda b: (b, 0, 0, 0)),
                pl.BlockSpec((block_b, H, W, C_hid), lambda b: (b, 0, 0, 0)),
                # Constant index maps: fused weight / bias stay VMEM-resident across steps.
                pl.BlockSpec((K, K, C_st, N), lambda b: (0, 0, 0, 0)),
                pl.BlockSpec((1, N), lambda b: (0, 0)),
            ],
            out_specs=pl.BlockSpec((block_b, C_hid, HW), lambda b: (b, 0, 0)),
            scratch_shapes=[
                pltpu.VMEM((block_b, Hp, Wp, C_st), jnp.float32),   # padded [h | x] block
                pltpu.VMEM((M, N), jnp.float32),                    # fused accumulator
            ],
        ),
        compiler_params=pltpu.CompilerParams(
            dimension_semantics=("parallel",),        # batch-tile axis: megacore / 2-TC friendly
            vmem_limit_bytes=48 * 1024 * 1024,        # explicit; v7x physical VMEM is 64 MiB
        ),
    )(x, h, w_fused, b_fused)

    # (B, C_hid, H*W) -> (B, C_hid, H, W): contiguous reshape only — no output transpose.
    return out.reshape(B, C_hid, H, W)


def _reference_forward(inputs_nchw, prev_state_nchw,
                       w_gate, b_gate, w_update, b_update):
    """Pure-JAX reference (lax.conv) for validation."""
    x = jnp.transpose(inputs_nchw, (0, 2, 3, 1)).astype(jnp.float32)
    h = jnp.transpose(prev_state_nchw, (0, 2, 3, 1)).astype(jnp.float32)
    dn = ('NHWC', 'HWIO', 'NHWC')
    stacked = jnp.concatenate([x, h], axis=-1)
    gate = lax.conv_general_dilated(stacked, w_gate, (1, 1), 'SAME',
                                    dimension_numbers=dn) + b_gate
    upd = lax.conv_general_dilated(x, w_update, (1, 1), 'SAME',
                                   dimension_numbers=dn) + b_update
    gain = jax.nn.sigmoid(gate)
    update = jnp.tanh(upd)
    new_state = gain * h + (1.0 - gain) * update
    return jnp.transpose(new_state, (0, 3, 1, 2))


if __name__ == "__main__":
    # Small deterministic configuration.
    B, C_in, H, W = 2, 4, 16, 16
    C_hid, K = 32, 3

    key = jax.random.PRNGKey(0)
    k_x, k_h, k_wg, k_wu = jax.random.split(key, 4)

    # Inputs in NCHW (PyTorch convention).
    x = jax.random.normal(k_x, (B, C_in, H, W), jnp.float32)
    prev_state = jax.random.normal(k_h, (B, C_hid, H, W), jnp.float32)

    # Parameters (deterministic, orthogonal weights like the module's init).
    ortho = jax.nn.initializers.orthogonal()
    w_gate = ortho(k_wg, (K, K, C_in + C_hid, C_hid), jnp.float32)   # HWIO, in-ch order [x, h]
    w_update = ortho(k_wu, (K, K, C_in, C_hid), jnp.float32)         # HWIO
    b_gate = jnp.ones((C_hid,), jnp.float32)      # torch: constant_(gate.bias, 1.0)
    b_update = jnp.zeros((C_hid,), jnp.float32)   # torch: constant_(update.bias, 0.0)

    out = convstar_cell_forward(x, prev_state, w_gate, b_gate,
                                w_update, b_update, K)
    out = jax.block_until_ready(out)

    ref = _reference_forward(x, prev_state, w_gate, b_gate, w_update, b_update)
    assert out.shape == (B, C_hid, H, W)
    assert jnp.allclose(out, ref, atol=1e-4, rtol=1e-4), \
        float(jnp.max(jnp.abs(out - ref)))

    print("KERNEL_OK")
</pallas_src>

<mosaic_0001>
module attributes {stable_mosaic.version = 11 : i64} {
  func.func @_convstar_kernel(%arg0: i32, %arg1: memref<2x16x16x4xf32, #tpu.memory_space<vmem>>, %arg2: memref<2x16x16x32xf32, #tpu.memory_space<vmem>>, %arg3: memref<3x3x36x128xf32, #tpu.memory_space<vmem>>, %arg4: memref<1x128xf32, #tpu.memory_space<vmem>>, %arg5: memref<2x32x256xf32, #tpu.memory_space<vmem>>, %arg6: memref<2x18x18x36xf32, #tpu.memory_space<vmem>>, %arg7: memref<512x128xf32, #tpu.memory_space<vmem>>) attributes {dimension_semantics = [#tpu.dimension_semantics<parallel>], iteration_bounds = array<i64: 1>, scalar_prefetch = 0 : i64, scratch_operands = 2 : i64, tpu.core_type = #tpu.core_type<tc>, window_params = [{transform_indices = @transform_0, window_bounds = array<i64: 2, 16, 16, 4>}, {transform_indices = @transform_1, window_bounds = array<i64: 2, 16, 16, 32>}, {pipeline_mode = #tpu.pipeline_mode<synchronous>, transform_indices = @transform_2, window_bounds = array<i64: 3, 3, 36, 128>}, {pipeline_mode = #tpu.pipeline_mode<synchronous>, transform_indices = @transform_3, window_bounds = array<i64: 1, 128>}, {transform_indices = @transform_4, window_bounds = array<i64: 2, 32, 256>}]} {
    %cst = arith.constant 0.000000e+00 : f32
    %0 = vector.broadcast %cst : f32 to vector<2x18x18x36xf32>
    %c0 = arith.constant 0 : index
    %c0_0 = arith.constant 0 : index
    %c0_1 = arith.constant 0 : index
    %c0_2 = arith.constant 0 : index
    %1 = vector.load %arg6[%c0, %c0_0, %c0_1, %c0_2] : memref<2x18x18x36xf32, #tpu.memory_space<vmem>>, vector<2x18x18x36xf32>
    tpu.vector_store %arg6[%c0, %c0_0, %c0_1, %c0_2], %0 {strides = array<i32>} : memref<2x18x18x36xf32, #tpu.memory_space<vmem>>, vector<2x18x18x36xf32>,
    %c0_3 = arith.constant 0 : index
    %c0_4 = arith.constant 0 : index
    %c0_5 = arith.constant 0 : index
    %c0_6 = arith.constant 0 : index
    %2 = vector.load %arg2[%c0_3, %c0_4, %c0_5, %c0_6] : memref<2x16x16x32xf32, #tpu.memory_space<vmem>>, vector<2x16x16x32xf32>
    %c0_7 = arith.constant 0 : index
    %c1 = arith.constant 1 : index
    %c1_8 = arith.constant 1 : index
    %c0_9 = arith.constant 0 : index
    %3 = vector.load %arg6[%c0_7, %c1, %c1_8, %c0_9] : memref<2x18x18x36xf32, #tpu.memory_space<vmem>>, vector<2x16x16x32xf32>
    tpu.vector_store %arg6[%c0_7, %c1, %c1_8, %c0_9], %2 {strides = array<i32>} : memref<2x18x18x36xf32, #tpu.memory_space<vmem>>, vector<2x16x16x32xf32>,
    %c0_10 = arith.constant 0 : index
    %c0_11 = arith.constant 0 : index
    %c0_12 = arith.constant 0 : index
    %c0_13 = arith.constant 0 : index
    %4 = vector.load %arg1[%c0_10, %c0_11, %c0_12, %c0_13] : memref<2x16x16x4xf32, #tpu.memory_space<vmem>>, vector<2x16x16x4xf32>
    %c0_14 = arith.constant 0 : index
    %c1_15 = arith.constant 1 : index
    %c1_16 = arith.constant 1 : index
    %c32 = arith.constant 32 : index
    %5 = vector.load %arg6[%c0_14, %c1_15, %c1_16, %c32] : memref<2x18x18x36xf32, #tpu.memory_space<vmem>>, vector<2x16x16x4xf32>
    tpu.vector_store %arg6[%c0_14, %c1_15, %c1_16, %c32], %4 {strides = array<i32>} : memref<2x18x18x36xf32, #tpu.memory_space<vmem>>, vector<2x16x16x4xf32>,
    %c0_17 = arith.constant 0 : index
    %c0_18 = arith.constant 0 : index
    %c0_19 = arith.constant 0 : index
    %c0_20 = arith.constant 0 : index
    %6 = vector.load %arg6[%c0_17, %c0_18, %c0_19, %c0_20] : memref<2x18x18x36xf32, #tpu.memory_space<vmem>>, vector<2x18x16x36xf32>
    %7 = vector.extract_strided_slice %6 {offsets = [0, 0, 0, 0], sizes = [2, 16, 16, 36], strides = [1, 1, 1, 1]} : vector<2x18x16x36xf32> to vector<2x16x16x36xf32>
    %8 = vector.shape_cast %7 : vector<2x16x16x36xf32> to vector<512x36xf32>
    %c0_21 = arith.constant 0 : index
    %c0_22 = arith.constant 0 : index
    %c0_23 = arith.constant 0 : index
    %c0_24 = arith.constant 0 : index
    %9 = vector.load %arg3[%c0_21, %c0_22, %c0_23, %c0_24] : memref<3x3x36x128xf32, #tpu.memory_space<vmem>>, vector<1x1x36x128xf32>
    %10 = vector.shape_cast %9 : vector<1x1x36x128xf32> to vector<36x128xf32>
    %cst_25 = arith.constant dense<0.000000e+00> : vector<512x128xf32>
    %11 = tpu.matmul %8, %10, %cst_25 {dimension_numbers = #tpu.dot_dimension_numbers<[1], [0], [0], [1], [0, 0, 1, 1], [], []>} : vector<512x36xf32>, vector<36x128xf32>, vector<512x128xf32> -> vector<512x128xf32>
    %c0_26 = arith.constant 0 : index
    %c0_27 = arith.constant 0 : index
    %12 = vector.load %arg4[%c0_26, %c0_27] : memref<1x128xf32, #tpu.memory_space<vmem>>, vector<1x128xf32>
    %13 = vector.shape_cast %12 : vector<1x128xf32> to vector<1x128xf32>
    %14 = vector.broadcast %13 : vector<1x128xf32> to vector<512x128xf32>
    %15 = arith.addf %11, %14 : vector<512x128xf32>
    %c0_28 = arith.constant 0 : index
    %c0_29 = arith.constant 0 : index
    %16 = vector.load %arg7[%c0_28, %c0_29] : memref<512x128xf32, #tpu.memory_space<vmem>>, vector<512x128xf32>
    tpu.vector_store %arg7[%c0_28, %c0_29], %15 {strides = array<i32>} : memref<512x128xf32, #tpu.memory_space<vmem>>, vector<512x128xf32>,
    %17 = vector.extract_strided_slice %6 {offsets = [0, 1, 0, 0], sizes = [2, 16, 16, 36], strides = [1, 1, 1, 1]} : vector<2x18x16x36xf32> to vector<2x16x16x36xf32>
    %18 = vector.shape_cast %17 : vector<2x16x16x36xf32> to vector<512x36xf32>
    %c1_30 = arith.constant 1 : index
    %c0_31 = arith.constant 0 : index
    %c0_32 = arith.constant 0 : index
    %c0_33 = arith.constant 0 : index
    %19 = vector.load %arg3[%c1_30, %c0_31, %c0_32, %c0_33] : memref<3x3x36x128xf32, #tpu.memory_space<vmem>>, vector<1x1x36x128xf32>
    %20 = vector.shape_cast %19 : vector<1x1x36x128xf32> to vector<36x128xf32>
    %cst_34 = arith.constant dense<0.000000e+00> : vector<512x128xf32>
    %21 = tpu.matmul %18, %20, %cst_34 {dimension_numbers = #tpu.dot_dimension_numbers<[1], [0], [0], [1], [0, 0, 1, 1], [], []>} : vector<512x36xf32>, vector<36x128xf32>, vector<512x128xf32> -> vector<512x128xf32>
    %c0_35 = arith.constant 0 : index
    %c0_36 = arith.constant 0 : index
    %22 = vector.load %arg7[%c0_35, %c0_36] : memref<512x128xf32, #tpu.memory_space<vmem>>, vector<512x128xf32>
    %23 = arith.addf %22, %21 : vector<512x128xf32>
    %c0_37 = arith.constant 0 : index
    %c0_38 = arith.constant 0 : index
    %24 = vector.load %arg7[%c0_37, %c0_38] : memref<512x128xf32, #tpu.memory_space<vmem>>, vector<512x128xf32>
    tpu.vector_store %arg7[%c0_37, %c0_38], %23 {strides = array<i32>} : memref<512x128xf32, #tpu.memory_space<vmem>>, vector<512x128xf32>,
    %25 = vector.extract_strided_slice %6 {offsets = [0, 2, 0, 0], sizes = [2, 16, 16, 36], strides = [1, 1, 1, 1]} : vector<2x18x16x36xf32> to vector<2x16x16x36xf32>
    %26 = vector.shape_cast %25 : vector<2x16x16x36xf32> to vector<512x36xf32>
    %c2 = arith.constant 2 : index
    %c0_39 = arith.constant 0 : index
    %c0_40 = arith.constant 0 : index
    %c0_41 = arith.constant 0 : index
    %27 = vector.load %arg3[%c2, %c0_39, %c0_40, %c0_41] : memref<3x3x36x128xf32, #tpu.memory_space<vmem>>, vector<1x1x36x128xf32>
    %28 = vector.shape_cast %27 : vector<1x1x36x128xf32> to vector<36x128xf32>
    %cst_42 = arith.constant dense<0.000000e+00> : vector<512x128xf32>
    %29 = tpu.matmul %26, %28, %cst_42 {dimension_numbers = #tpu.dot_dimension_numbers<[1], [0], [0], [1], [0, 0, 1, 1], [], []>} : vector<512x36xf32>, vector<36x128xf32>, vector<512x128xf32> -> vector<512x128xf32>
    %c0_43 = arith.constant 0 : index
    %c0_44 = arith.constant 0 : index
    %30 = vector.load %arg7[%c0_43, %c0_44] : memref<512x128xf32, #tpu.memory_space<vmem>>, vector<512x128xf32>
    %31 = arith.addf %30, %29 : vector<512x128xf32>
    %c0_45 = arith.constant 0 : index
    %c0_46 = arith.constant 0 : index
    %32 = vector.load %arg7[%c0_45, %c0_46] : memref<512x128xf32, #tpu.memory_space<vmem>>, vector<512x128xf32>
    tpu.vector_store %arg7[%c0_45, %c0_46], %31 {strides = array<i32>} : memref<512x128xf32, #tpu.memory_space<vmem>>, vector<512x128xf32>,
    %c0_47 = arith.constant 0 : index
    %c0_48 = arith.constant 0 : index
    %c1_49 = arith.constant 1 : index
    %c0_50 = arith.constant 0 : index
    %33 = vector.load %arg6[%c0_47, %c0_48, %c1_49, %c0_50] : memref<2x18x18x36xf32, #tpu.memory_space<vmem>>, vector<2x18x16x36xf32>
    %34 = vector.extract_strided_slice %33 {offsets = [0, 0, 0, 0], sizes = [2, 16, 16, 36], strides = [1, 1, 1, 1]} : vector<2x18x16x36xf32> to vector<2x16x16x36xf32>
    %35 = vector.shape_cast %34 : vector<2x16x16x36xf32> to vector<512x36xf32>
    %c0_51 = arith.constant 0 : index
    %c1_52 = arith.constant 1 : index
    %c0_53 = arith.constant 0 : index
    %c0_54 = arith.constant 0 : index
    %36 = vector.load %arg3[%c0_51, %c1_52, %c0_53, %c0_54] : memref<3x3x36x128xf32, #tpu.memory_space<vmem>>, vector<1x1x36x128xf32>
    %37 = vector.shape_cast %36 : vector<1x1x36x128xf32> to vector<36x128xf32>
    %cst_55 = arith.constant dense<0.000000e+00> : vector<512x128xf32>
    %38 = tpu.matmul %35, %37, %cst_55 {dimension_numbers = #tpu.dot_dimension_numbers<[1], [0], [0], [1], [0, 0, 1, 1], [], []>} : vector<512x36xf32>, vector<36x128xf32>, vector<512x128xf32> -> vector<512x128xf32>
    %c0_56 = arith.constant 0 : index
    %c0_57 = arith.constant 0 : index
    %39 = vector.load %arg7[%c0_56, %c0_57] : memref<512x128xf32, #tpu.memory_space<vmem>>, vector<512x128xf32>
    %40 = arith.addf %39, %38 : vector<512x128xf32>
    %c0_58 = arith.constant 0 : index
    %c0_59 = arith.constant 0 : index
    %41 = vector.load %arg7[%c0_58, %c0_59] : memref<512x128xf32, #tpu.memory_space<vmem>>, vector<512x128xf32>
    tpu.vector_store %arg7[%c0_58, %c0_59], %40 {strides = array<i32>} : memref<512x128xf32, #tpu.memory_space<vmem>>, vector<512x128xf32>,
    %42 = vector.extract_strided_slice %33 {offsets = [0, 1, 0, 0], sizes = [2, 16, 16, 36], strides = [1, 1, 1, 1]} : vector<2x18x16x36xf32> to vector<2x16x16x36xf32>
    %43 = vector.shape_cast %42 : vector<2x16x16x36xf32> to vector<512x36xf32>
    %c1_60 = arith.constant 1 : index
    %c1_61 = arith.constant 1 : index
    %c0_62 = arith.constant 0 : index
    %c0_63 = arith.constant 0 : index
    %44 = vector.load %arg3[%c1_60, %c1_61, %c0_62, %c0_63] : memref<3x3x36x128xf32, #tpu.memory_space<vmem>>, vector<1x1x36x128xf32>
    %45 = vector.shape_cast %44 : vector<1x1x36x128xf32> to vector<36x128xf32>
    %cst_64 = arith.constant dense<0.000000e+00> : vector<512x128xf32>
    %46 = tpu.matmul %43, %45, %cst_64 {dimension_numbers = #tpu.dot_dimension_numbers<[1], [0], [0], [1], [0, 0, 1, 1], [], []>} : vector<512x36xf32>, vector<36x128xf32>, vector<512x128xf32> -> vector<512x128xf32>
    %c0_65 = arith.constant 0 : index
    %c0_66 = arith.constant 0 : index
    %47 = vector.load %arg7[%c0_65, %c0_66] : memref<512x128xf32, #tpu.memory_space<vmem>>, vector<512x128xf32>
    %48 = arith.addf %47, %46 : vector<512x128xf32>
    %c0_67 = arith.constant 0 : index
    %c0_68 = arith.constant 0 : index
    %49 = vector.load %arg7[%c0_67, %c0_68] : memref<512x128xf32, #tpu.memory_space<vmem>>, vector<512x128xf32>
    tpu.vector_store %arg7[%c0_67, %c0_68], %48 {strides = array<i32>} : memref<512x128xf32, #tpu.memory_space<vmem>>, vector<512x128xf32>,
    %50 = vector.extract_strided_slice %33 {offsets = [0, 2, 0, 0], sizes = [2, 16, 16, 36], strides = [1, 1, 1, 1]} : vector<2x18x16x36xf32> to vector<2x16x16x36xf32>
    %51 = vector.shape_cast %50 : vector<2x16x16x36xf32> to vector<512x36xf32>
    %c2_69 = arith.constant 2 : index
    %c1_70 = arith.constant 1 : index
    %c0_71 = arith.constant 0 : index
    %c0_72 = arith.constant 0 : index
    %52 = vector.load %arg3[%c2_69, %c1_70, %c0_71, %c0_72] : memref<3x3x36x128xf32, #tpu.memory_space<vmem>>, vector<1x1x36x128xf32>
    %53 = vector.shape_cast %52 : vector<1x1x36x128xf32> to vector<36x128xf32>
    %cst_73 = arith.constant dense<0.000000e+00> : vector<512x128xf32>
    %54 = tpu.matmul %51, %53, %cst_73 {dimension_numbers = #tpu.dot_dimension_numbers<[1], [0], [0], [1], [0, 0, 1, 1], [], []>} : vector<512x36xf32>, vector<36x128xf32>, vector<512x128xf32> -> vector<512x128xf32>
    %c0_74 = arith.constant 0 : index
    %c0_75 = arith.constant 0 : index
    %55 = vector.load %arg7[%c0_74, %c0_75] : memref<512x128xf32, #tpu.memory_space<vmem>>, vector<512x128xf32>
    %56 = arith.addf %55, %54 : vector<512x128xf32>
    %c0_76 = arith.constant 0 : index
    %c0_77 = arith.constant 0 : index
    %57 = vector.load %arg7[%c0_76, %c0_77] : memref<512x128xf32, #tpu.memory_space<vmem>>, vector<512x128xf32>
    tpu.vector_store %arg7[%c0_76, %c0_77], %56 {strides = array<i32>} : memref<512x128xf32, #tpu.memory_space<vmem>>, vector<512x128xf32>,
    %c0_78 = arith.constant 0 : index
    %c0_79 = arith.constant 0 : index
    %c2_80 = arith.constant 2 : index
    %c0_81 = arith.constant 0 : index
    %58 = vector.load %arg6[%c0_78, %c0_79, %c2_80, %c0_81] : memref<2x18x18x36xf32, #tpu.memory_space<vmem>>, vector<2x18x16x36xf32>
    %59 = vector.extract_strided_slice %58 {offsets = [0, 0, 0, 0], sizes = [2, 16, 16, 36], strides = [1, 1, 1, 1]} : vector<2x18x16x36xf32> to vector<2x16x16x36xf32>
    %60 = vector.shape_cast %59 : vector<2x16x16x36xf32> to vector<512x36xf32>
    %c0_82 = arith.constant 0 : index
    %c2_83 = arith.constant 2 : index
    %c0_84 = arith.constant 0 : index
    %c0_85 = arith.constant 0 : index
    %61 = vector.load %arg3[%c0_82, %c2_83, %c0_84, %c0_85] : memref<3x3x36x128xf32, #tpu.memory_space<vmem>>, vector<1x1x36x128xf32>
    %62 = vector.shape_cast %61 : vector<1x1x36x128xf32> to vector<36x128xf32>
    %cst_86 = arith.constant dense<0.000000e+00> : vector<512x128xf32>
    %63 = tpu.matmul %60, %62, %cst_86 {dimension_numbers = #tpu.dot_dimension_numbers<[1], [0], [0], [1], [0, 0, 1, 1], [], []>} : vector<512x36xf32>, vector<36x128xf32>, vector<512x128xf32> -> vector<512x128xf32>
    %c0_87 = arith.constant 0 : index
    %c0_88 = arith.constant 0 : index
    %64 = vector.load %arg7[%c0_87, %c0_88] : memref<512x128xf32, #tpu.memory_space<vmem>>, vector<512x128xf32>
    %65 = arith.addf %64, %63 : vector<512x128xf32>
    %c0_89 = arith.constant 0 : index
    %c0_90 = arith.constant 0 : index
    %66 = vector.load %arg7[%c0_89, %c0_90] : memref<512x128xf32, #tpu.memory_space<vmem>>, vector<512x128xf32>
    tpu.vector_store %arg7[%c0_89, %c0_90], %65 {strides = array<i32>} : memref<512x128xf32, #tpu.memory_space<vmem>>, vector<512x128xf32>,
    %67 = vector.extract_strided_slice %58 {offsets = [0, 1, 0, 0], sizes = [2, 16, 16, 36], strides = [1, 1, 1, 1]} : vector<2x18x16x36xf32> to vector<2x16x16x36xf32>
    %68 = vector.shape_cast %67 : vector<2x16x16x36xf32> to vector<512x36xf32>
    %c1_91 = arith.constant 1 : index
    %c2_92 = arith.constant 2 : index
    %c0_93 = arith.constant 0 : index
    %c0_94 = arith.constant 0 : index
    %69 = vector.load %arg3[%c1_91, %c2_92, %c0_93, %c0_94] : memref<3x3x36x128xf32, #tpu.memory_space<vmem>>, vector<1x1x36x128xf32>
    %70 = vector.shape_cast %69 : vector<1x1x36x128xf32> to vector<36x128xf32>
    %cst_95 = arith.constant dense<0.000000e+00> : vector<512x128xf32>
    %71 = tpu.matmul %68, %70, %cst_95 {dimension_numbers = #tpu.dot_dimension_numbers<[1], [0], [0], [1], [0, 0, 1, 1], [], []>} : vector<512x36xf32>, vector<36x128xf32>, vector<512x128xf32> -> vector<512x128xf32>
    %c0_96 = arith.constant 0 : index
    %c0_97 = arith.constant 0 : index
    %72 = vector.load %arg7[%c0_96, %c0_97] : memref<512x128xf32, #tpu.memory_space<vmem>>, vector<512x128xf32>
    %73 = arith.addf %72, %71 : vector<512x128xf32>
    %c0_98 = arith.constant 0 : index
    %c0_99 = arith.constant 0 : index
    %74 = vector.load %arg7[%c0_98, %c0_99] : memref<512x128xf32, #tpu.memory_space<vmem>>, vector<512x128xf32>
    tpu.vector_store %arg7[%c0_98, %c0_99], %73 {strides = array<i32>} : memref<512x128xf32, #tpu.memory_space<vmem>>, vector<512x128xf32>,
    %75 = vector.extract_strided_slice %58 {offsets = [0, 2, 0, 0], sizes = [2, 16, 16, 36], strides = [1, 1, 1, 1]} : vector<2x18x16x36xf32> to vector<2x16x16x36xf32>
    %76 = vector.shape_cast %75 : vector<2x16x16x36xf32> to vector<512x36xf32>
    %c2_100 = arith.constant 2 : index
    %c2_101 = arith.constant 2 : index
    %c0_102 = arith.constant 0 : index
    %c0_103 = arith.constant 0 : index
    %77 = vector.load %arg3[%c2_100, %c2_101, %c0_102, %c0_103] : memref<3x3x36x128xf32, #tpu.memory_space<vmem>>, vector<1x1x36x128xf32>
    %78 = vector.shape_cast %77 : vector<1x1x36x128xf32> to vector<36x128xf32>
    %cst_104 = arith.constant dense<0.000000e+00> : vector<512x128xf32>
    %79 = tpu.matmul %76, %78, %cst_104 {dimension_numbers = #tpu.dot_dimension_numbers<[1], [0], [0], [1], [0, 0, 1, 1], [], []>} : vector<512x36xf32>, vector<36x128xf32>, vector<512x128xf32> -> vector<512x128xf32>
    %c0_105 = arith.constant 0 : index
    %c0_106 = arith.constant 0 : index
    %80 = vector.load %arg7[%c0_105, %c0_106] : memref<512x128xf32, #tpu.memory_space<vmem>>, vector<512x128xf32>
    %81 = arith.addf %80, %79 : vector<512x128xf32>
    %c0_107 = arith.constant 0 : index
    %c0_108 = arith.constant 0 : index
    %82 = vector.load %arg7[%c0_107, %c0_108] : memref<512x128xf32, #tpu.memory_space<vmem>>, vector<512x128xf32>
    tpu.vector_store %arg7[%c0_107, %c0_108], %81 {strides = array<i32>} : memref<512x128xf32, #tpu.memory_space<vmem>>, vector<512x128xf32>,
    %c0_109 = arith.constant 0 : index
    %c0_110 = arith.constant 0 : index
    %83 = vector.load %arg7[%c0_109, %c0_110] : memref<512x128xf32, #tpu.memory_space<vmem>>, vector<512x128xf32>
    %84 = tpu.transpose %83, [1, 0] : vector<512x128xf32> -> vector<128x512xf32>
    %85 = vector.extract_strided_slice %84 {offsets = [0, 0], sizes = [32, 512], strides = [1, 1]} : vector<128x512xf32> to vector<32x512xf32>
    %86 = arith.negf %85 : vector<32x512xf32>
    %87 = math.exp %86 : vector<32x512xf32>
    %cst_111 = arith.constant 1.000000e+00 : f32
    %88 = vector.broadcast %cst_111 : f32 to vector<32x512xf32>
    %89 = arith.addf %88, %87 : vector<32x512xf32>
    %90 = arith.divf %88, %89 : vector<32x512xf32>
    %91 = vector.extract_strided_slice %84 {offsets = [32, 0], sizes = [32, 512], strides = [1, 1]} : vector<128x512xf32> to vector<32x512xf32>
    %92 = math.tanh %91 : vector<32x512xf32>
    %93 = vector.extract_strided_slice %84 {offsets = [64, 0], sizes = [32, 512], strides = [1, 1]} : vector<128x512xf32> to vector<32x512xf32>
    %94 = arith.mulf %90, %93 : vector<32x512xf32>
    %cst_112 = arith.constant 1.000000e+00 : f32
    %95 = vector.broadcast %cst_112 : f32 to vector<32x512xf32>
    %96 = arith.subf %95, %90 : vector<32x512xf32>
    %97 = arith.mulf %96, %92 : vector<32x512xf32>
    %98 = arith.addf %94, %97 : vector<32x512xf32>
    %99 = vector.extract_strided_slice %98 {offsets = [0, 0], sizes = [32, 256], strides = [1, 1]} : vector<32x512xf32> to vector<32x256xf32>
    %c0_113 = arith.constant 0 : index
    %c0_114 = arith.constant 0 : index
    %c0_115 = arith.constant 0 : index
    %100 = vector.load %arg5[%c0_113, %c0_114, %c0_115] : memref<2x32x256xf32, #tpu.memory_space<vmem>>, vector<1x32x256xf32>
    %101 = vector.shape_cast %100 : vector<1x32x256xf32> to vector<32x256xf32>
    %102 = vector.shape_cast %99 : vector<32x256xf32> to vector<1x32x256xf32>
    tpu.vector_store %arg5[%c0_113, %c0_114, %c0_115], %102 {strides = array<i32>} : memref<2x32x256xf32, #tpu.memory_space<vmem>>, vector<1x32x256xf32>,
    %103 = vector.extract_strided_slice %98 {offsets = [0, 256], sizes = [32, 256], strides = [1, 1]} : vector<32x512xf32> to vector<32x256xf32>
    %c1_116 = arith.constant 1 : index
    %c0_117 = arith.constant 0 : index
    %c0_118 = arith.constant 0 : index
    %104 = vector.load %arg5[%c1_116, %c0_117, %c0_118] : memref<2x32x256xf32, #tpu.memory_space<vmem>>, vector<1x32x256xf32>
    %105 = vector.shape_cast %104 : vector<1x32x256xf32> to vector<32x256xf32>
    %106 = vector.shape_cast %103 : vector<32x256xf32> to vector<1x32x256xf32>
    tpu.vector_store %arg5[%c1_116, %c0_117, %c0_118], %106 {strides = array<i32>} : memref<2x32x256xf32, #tpu.memory_space<vmem>>, vector<1x32x256xf32>,
    return
  }
  func.func @transform_0(%arg0: i32) -> (i32, i32, i32, i32) {
    %c0_i32 = arith.constant 0 : i32
    %c0_i32_0 = arith.constant 0 : i32
    %c0_i32_1 = arith.constant 0 : i32
    %c0_i32_2 = arith.constant 0 : i32
    return %arg0, %c0_i32, %c0_i32_0, %c0_i32_1 : i32, i32, i32, i32
  }
  func.func @transform_1(%arg0: i32) -> (i32, i32, i32, i32) {
    %c0_i32 = arith.constant 0 : i32
    %c0_i32_0 = arith.constant 0 : i32
    %c0_i32_1 = arith.constant 0 : i32
    %c0_i32_2 = arith.constant 0 : i32
    return %arg0, %c0_i32, %c0_i32_0, %c0_i32_1 : i32, i32, i32, i32
  }
  func.func @transform_2(%arg0: i32) -> (i32, i32, i32, i32) {
    %c0_i32 = arith.constant 0 : i32
    %c0_i32_0 = arith.constant 0 : i32
    %c0_i32_1 = arith.constant 0 : i32
    %c0_i32_2 = arith.constant 0 : i32
    %c0_i32_3 = arith.constant 0 : i32
    return %c0_i32, %c0_i32_0, %c0_i32_1, %c0_i32_2 : i32, i32, i32, i32
  }
  func.func @transform_3(%arg0: i32) -> (i32, i32) {
    %c0_i32 = arith.constant 0 : i32
    %c0_i32_0 = arith.constant 0 : i32
    %c0_i32_1 = arith.constant 0 : i32
    return %c0_i32, %c0_i32_0 : i32, i32
  }
  func.func @transform_4(%arg0: i32) -> (i32, i32, i32) {
    %c0_i32 = arith.constant 0 : i32
    %c0_i32_0 = arith.constant 0 : i32
    %c0_i32_1 = arith.constant 0 : i32
    return %arg0, %c0_i32, %c0_i32_0 : i32, i32, i32
  }
}

</mosaic_0001>

<llo_original>
// kernel: tpu_custom_call.1
$region0: #{tpu_custom_call.1}
  #allocation0 [shape = 'u32[]', space=smem, size = 0x4, offset = 0x4, fixed_abs, tag = 'smem constant byte address 0x4 - core index']
  #allocation1 [shape = 'u32[72,128]{1,0:T(1,128)}', space=vmem, size = 0x9000, scoped, tag = 'internal scratch']
  #allocation2 [shape = 'f32[2,18,18,36]{3,2,1,0:T(8,128)}', space=vmem, size = 0x6c000, scoped, tag = 'scratch operand']
  #allocation3 [shape = 'f32[512,128]{1,0:T(8,128)}', space=vmem, size = 0x40000, scoped, tag = 'scratch operand']
  %s0 = inlined_call_operand.vmem [shape: f32[2,16,16,4], index: 0, kind: input, shape index: {}]
  %s1 = inlined_call_operand.vmem [shape: f32[2,16,16,32], index: 1, kind: input, shape index: {}]
  %s2 = inlined_call_operand.hbm [shape: f32[3,3,36,128], index: 2, kind: input, shape index: {}]
  %s3 = inlined_call_operand.vmem [shape: f32[1,128], index: 3, kind: input, shape index: {}]
  %s4 = inlined_call_operand.hbm [shape: f32[2,32,256], index: 4, kind: output, shape index: {}]
  %s5 = sld [smem:[#allocation0]]
  $region30: #{tpu_custom_call.1} parent=0
    _
  %s7 = ssub.s32 1, %s5
  %s8 = scalar_select 0, %s7, %s5
  $region1: #{tpu_custom_call.1} parent=0
    #allocation4 [shape = 'u8[184320]{0}', space=vmem, size = 0x2d000, scoped, tag = 'input window, operand 2, single buffered']
    #allocation5 [shape = 's32[1]{0}', space=sflag, size = 0x4, scoped, tag = 'scoped memory for tpu_custom_call.1']
    #allocation6 [shape = 's32[1]{0}', space=sflag, size = 0x4, scoped, tag = 'scoped memory for tpu_custom_call.1']
    #allocation7 [shape = 'u8[65536]{0}', space=vmem, size = 0x10000, scoped, tag = 'output window, operand 0, single buffered']
    %9 = vsyncpa [#allocation5], 0
    %10 = vsyncpa [#allocation6], 0
    // Predicated region
    $region2: #{tpu_custom_call.1} parent=1 // pred_check
      _
    $region3: #{tpu_custom_call.1} parent=1 // pred_check_branch
      %12 = sbr.rel (0) target = $region5
    $region4: #{tpu_custom_call.1} parent=1 // pred_region
      _
    $region5: #{tpu_custom_call.1} parent=1 // pred_fallthru
      _
    // Predicated region
    $region6: #{tpu_custom_call.1} parent=1 // pred_check
      _
    $region7: #{tpu_custom_call.1} parent=1 // pred_check_branch
      %14 = sbr.rel (0) target = $region9
    $region8: #{tpu_custom_call.1} parent=1 // pred_region
      _
    $region9: #{tpu_custom_call.1} parent=1 // pred_fallthru
      _
    // Predicated region
    $region10: #{tpu_custom_call.1} parent=1 // pred_check
      _
    $region11: #{tpu_custom_call.1} parent=1 // pred_check_branch
      %16 = sbr.rel (0) target = $region13
    $region12: #{tpu_custom_call.1} parent=1 // pred_region
      %18 = vsyncadd [#allocation5], 0
      %s19 = sshll.u32 %s2, 4
      %s20 = int_to_ptr.hbm [resolvable:$true] %s19
      %s21 = sshll.u32 [#allocation4], 4
      %s22 = int_to_ptr.vmem [resolvable:$true] %s21
      %27 = dma.hbm_to_vmem [thread:$0]  %s20, 5760, %s22, [#allocation5], 128, 128, 8
    $region13: #{tpu_custom_call.1} parent=1 // pred_fallthru
      _
    // Predicated region
    $region14: #{tpu_custom_call.1} parent=1 // pred_check
      _
    $region15: #{tpu_custom_call.1} parent=1 // pred_check_branch
      %29 = sbr.rel (0) target = $region17
    $region16: #{tpu_custom_call.1} parent=1 // pred_region
      _
    $region17: #{tpu_custom_call.1} parent=1 // pred_fallthru
      _
    // Predicated region
    $region18: #{tpu_custom_call.1} parent=1 // pred_check
      _
    $region19: #{tpu_custom_call.1} parent=1 // pred_check_branch
      %31 = sbr.rel (0) target = $region21
    $region20: #{tpu_custom_call.1} parent=1 // pred_region
      %33 = dma.done [#allocation5], 5760
    $region21: #{tpu_custom_call.1} parent=1 // pred_fallthru
      _
    %vm34 = vcmask 293888
    %35 = vst.msk [vmem:[#allocation2] sm:$0xff] %vm34, 0.0
    %36 = vst.msk [vmem:[#allocation2 + $0x8] sm:$0xff] %vm34, 0.0
    %vm37 = vcmask 287744
    %38 = vst.msk [vmem:[#allocation2 + $0x10] sm:$0x3] %vm37, 0.0
    %39 = vst.msk [vmem:[#allocation2 + $0x18] sm:$0xff] %vm34, 0.0
    %40 = vst.msk [vmem:[#allocation2 + $0x20] sm:$0xff] %vm34, 0.0
    %41 = vst.msk [vmem:[#allocation2 + $0x28] sm:$0x3] %vm37, 0.0
    %42 = vst.msk [vmem:[#allocation2 + $0x30] sm:$0xff] %vm34, 0.0
    %43 = vst.msk [vmem:[#allocation2 + $0x38] sm:$0xff] %vm34, 0.0
    %44 = vst.msk [vmem:[#allocation2 + $0x40] sm:$0x3] %vm37, 0.0
    %45 = vst.msk [vmem:[#allocation2 + $0x48] sm:$0xff] %vm34, 0.0
    %46 = vst.msk [vmem:[#allocation2 + $0x50] sm:$0xff] %vm34, 0.0
    %47 = vst.msk [vmem:[#allocation2 + $0x58] sm:$0x3] %vm37, 0.0
    %48 = vst.msk [vmem:[#allocation2 + $0x60] sm:$0xff] %vm34, 0.0
    %49 = vst.msk [vmem:[#allocation2 + $0x68] sm:$0xff] %vm34, 0.0
    %50 = vst.msk [vmem:[#allocation2 + $0x70] sm:$0x3] %vm37, 0.0
    %51 = vst.msk [vmem:[#allocation2 + $0x78] sm:$0xff] %vm34, 0.0
    %52 = vst.msk [vmem:[#allocation2 + $0x80] sm:$0xff] %vm34, 0.0
    %53 = vst.msk [vmem:[#allocation2 + $0x88] sm:$0x3] %vm37, 0.0
    %54 = vst.msk [vmem:[#allocation2 + $0x90] sm:$0xff] %vm34, 0.0
    %55 = vst.msk [vmem:[#allocation2 + $0x98] sm:$0xff] %vm34, 0.0
    %56 = vst.msk [vmem:[#allocation2 + $0xa0] sm:$0x3] %vm37, 0.0
    %57 = vst.msk [vmem:[#allocation2 + $0xa8] sm:$0xff] %vm34, 0.0
    %58 = vst.msk [vmem:[#allocation2 + $0xb0] sm:$0xff] %vm34, 0.0
    %59 = vst.msk [vmem:[#allocation2 + $0xb8] sm:$0x3] %vm37, 0.0
    %60 = vst.msk [vmem:[#allocation2 + $0xc0] sm:$0xff] %vm34, 0.0
    %61 = vst.msk [vmem:[#allocation2 + $0xc8] sm:$0xff] %vm34, 0.0
    %62 = vst.msk [vmem:[#allocation2 + $0xd0] sm:$0x3] %vm37, 0.0
    %63 = vst.msk [vmem:[#allocation2 + $0xd8] sm:$0xff] %vm34, 0.0
    %64 = vst.msk [vmem:[#allocation2 + $0xe0] sm:$0xff] %vm34, 0.0
    %65 = vst.msk [vmem:[#allocation2 + $0xe8] sm:$0x3] %vm37, 0.0
    %66 = vst.msk [vmem:[#allocation2 + $0xf0] sm:$0xff] %vm34, 0.0
    %67 = vst.msk [vmem:[#allocation2 + $0xf8] sm:$0xff] %vm34, 0.0
    %68 = vst.msk [vmem:[#allocation2 + $0x100] sm:$0x3] %vm37, 0.0
    %69 = vst.msk [vmem:[#allocation2 + $0x108] sm:$0xff] %vm34, 0.0
    %70 = vst.msk [vmem:[#allocation2 + $0x110] sm:$0xff] %vm34, 0.0
    %71 = vst.msk [vmem:[#allocation2 + $0x118] sm:$0x3] %vm37, 0.0
    %72 = vst.msk [vmem:[#allocation2 + $0x120] sm:$0xff] %vm34, 0.0
    %73 = vst.msk [vmem:[#allocation2 + $0x128] sm:$0xff] %vm34, 0.0
    %74 = vst.msk [vmem:[#allocation2 + $0x130] sm:$0x3] %vm37, 0.0
    %75 = vst.msk [vmem:[#allocation2 + $0x138] sm:$0xff] %vm34, 0.0
    %76 = vst.msk [vmem:[#allocation2 + $0x140] sm:$0xff] %vm34, 0.0
    %77 = vst.msk [vmem:[#allocation2 + $0x148] sm:$0x3] %vm37, 0.0
    %78 = vst.msk [vmem:[#allocation2 + $0x150] sm:$0xff] %vm34, 0.0
    %79 = vst.msk [vmem:[#allocation2 + $0x158] sm:$0xff] %vm34, 0.0
    %80 = vst.msk [vmem:[#allocation2 + $0x160] sm:$0x3] %vm37, 0.0
    %81 = vst.msk [vmem:[#allocation2 + $0x168] sm:$0xff] %vm34, 0.0
    %82 = vst.msk [vmem:[#allocation2 + $0x170] sm:$0xff] %vm34, 0.0
    %83 = vst.msk [vmem:[#allocation2 + $0x178] sm:$0x3] %vm37, 0.0
    %84 = vst.msk [vmem:[#allocation2 + $0x180] sm:$0xff] %vm34, 0.0
    %85 = vst.msk [vmem:[#allocation2 + $0x188] sm:$0xff] %vm34, 0.0
    %86 = vst.msk [vmem:[#allocation2 + $0x190] sm:$0x3] %vm37, 0.0
    %87 = vst.msk [vmem:[#allocation2 + $0x198] sm:$0xff] %vm34, 0.0
    %88 = vst.msk [vmem:[#allocation2 + $0x1a0] sm:$0xff] %vm34, 0.0
    %89 = vst.msk [vmem:[#allocation2 + $0x1a8] sm:$0x3] %vm37, 0.0
    %90 = vst.msk [vmem:[#allocation2 + $0x1b0] sm:$0xff] %vm34, 0.0
    %91 = vst.msk [vmem:[#allocation2 + $0x1b8] sm:$0xff] %vm34, 0.0
    %92 = vst.msk [vmem:[#allocation2 + $0x1c0] sm:$0x3] %vm37, 0.0
    %93 = vst.msk [vmem:[#allocation2 + $0x1c8] sm:$0xff] %vm34, 0.0
    %94 = vst.msk [vmem:[#allocation2 + $0x1d0] sm:$0xff] %vm34, 0.0
    %95 = vst.msk [vmem:[#allocation2 + $0x1d8] sm:$0x3] %vm37, 0.0
    %96 = vst.msk [vmem:[#allocation2 + $0x1e0] sm:$0xff] %vm34, 0.0
    %97 = vst.msk [vmem:[#allocation2 + $0x1e8] sm:$0xff] %vm34, 0.0
    %98 = vst.msk [vmem:[#allocation2 + $0x1f0] sm:$0x3] %vm37, 0.0
    %99 = vst.msk [vmem:[#allocation2 + $0x1f8] sm:$0xff] %vm34, 0.0
    %100 = vst.msk [vmem:[#allocation2 + $0x200] sm:$0xff] %vm34, 0.0
    %101 = vst.msk [vmem:[#allocation2 + $0x208] sm:$0x3] %vm37, 0.0
    %102 = vst.msk [vmem:[#allocation2 + $0x210] sm:$0xff] %vm34, 0.0
    %103 = vst.msk [vmem:[#allocation2 + $0x218] sm:$0xff] %vm34, 0.0
    %104 = vst.msk [vmem:[#allocation2 + $0x220] sm:$0x3] %vm37, 0.0
    %105 = vst.msk [vmem:[#allocation2 + $0x228] sm:$0xff] %vm34, 0.0
    %106 = vst.msk [vmem:[#allocation2 + $0x230] sm:$0xff] %vm34, 0.0
    %107 = vst.msk [vmem:[#allocation2 + $0x238] sm:$0x3] %vm37, 0.0
    %108 = vst.msk [vmem:[#allocation2 + $0x240] sm:$0xff] %vm34, 0.0
    %109 = vst.msk [vmem:[#allocation2 + $0x248] sm:$0xff] %vm34, 0.0
    %110 = vst.msk [vmem:[#allocation2 + $0x250] sm:$0x3] %vm37, 0.0
    %111 = vst.msk [vmem:[#allocation2 + $0x258] sm:$0xff] %vm34, 0.0
    %112 = vst.msk [vmem:[#allocation2 + $0x260] sm:$0xff] %vm34, 0.0
    %113 = vst.msk [vmem:[#allocation2 + $0x268] sm:$0x3] %vm37, 0.0
    %114 = vst.msk [vmem:[#allocation2 + $0x270] sm:$0xff] %vm34, 0.0
    %115 = vst.msk [vmem:[#allocation2 + $0x278] sm:$0xff] %vm34, 0.0
    %116 = vst.msk [vmem:[#allocation2 + $0x280] sm:$0x3] %vm37, 0.0
    %117 = vst.msk [vmem:[#allocation2 + $0x288] sm:$0xff] %vm34, 0.0
    %118 = vst.msk [vmem:[#allocation2 + $0x290] sm:$0xff] %vm34, 0.0
    %119 = vst.msk [vmem:[#allocation2 + $0x298] sm:$0x3] %vm37, 0.0
    %120 = vst.msk [vmem:[#allocation2 + $0x2a0] sm:$0xff] %vm34, 0.0
    %121 = vst.msk [vmem:[#allocation2 + $0x2a8] sm:$0xff] %vm34, 0.0
    %122 = vst.msk [vmem:[#allocation2 + $0x2b0] sm:$0x3] %vm37, 0.0
    %123 = vst.msk [vmem:[#allocation2 + $0x2b8] sm:$0xff] %vm34, 0.0
    %124 = vst.msk [vmem:[#allocation2 + $0x2c0] sm:$0xff] %vm34, 0.0
    %125 = vst.msk [vmem:[#allocation2 + $0x2c8] sm:$0x3] %vm37, 0.0
    %126 = vst.msk [vmem:[#allocation2 + $0x2d0] sm:$0xff] %vm34, 0.0
    %127 = vst.msk [vmem:[#allocation2 + $0x2d8] sm:$0xff] %vm34, 0.0
    %128 = vst.msk [vmem:[#allocation2 + $0x2e0] sm:$0x3] %vm37, 0.0
    %129 = vst.msk [vmem:[#allocation2 + $0x2e8] sm:$0xff] %vm34, 0.0
    %130 = vst.msk [vmem:[#allocation2 + $0x2f0] sm:$0xff] %vm34, 0.0
    %131 = vst.msk [vmem:[#allocation2 + $0x2f8] sm:$0x3] %vm37, 0.0
    %132 = vst.msk [vmem:[#allocation2 + $0x300] sm:$0xff] %vm34, 0.0
    %133 = vst.msk [vmem:[#allocation2 + $0x308] sm:$0xff] %vm34, 0.0
    %134 = vst.msk [vmem:[#allocation2 + $0x310] sm:$0x3] %vm37, 0.0
    %135 = vst.msk [vmem:[#allocation2 + $0x318] sm:$0xff] %vm34, 0.0
    %136 = vst.msk [vmem:[#allocation2 + $0x320] sm:$0xff] %vm34, 0.0
    %137 = vst.msk [vmem:[#allocation2 + $0x328] sm:$0x3] %vm37, 0.0
    %138 = vst.msk [vmem:[#allocation2 + $0x330] sm:$0xff] %vm34, 0.0
    %139 = vst.msk [vmem:[#allocation2 + $0x338] sm:$0xff] %vm34, 0.0
    %140 = vst.msk [vmem:[#allocation2 + $0x340] sm:$0x3] %vm37, 0.0
    %141 = vst.msk [vmem:[#allocation2 + $0x348] sm:$0xff] %vm34, 0.0
    %142 = vst.msk [vmem:[#allocation2 + $0x350] sm:$0xff] %vm34, 0.0
    %143 = vst.msk [vmem:[#allocation2 + $0x358] sm:$0x3] %vm37, 0.0
    %v144 = vld [vmem:[%s1] sm:$0xff]
    %v145 = vld [vmem:[%s1 + $0x8] sm:$0xff]
    %v146 = vld [vmem:[%s1 + $0x10] sm:$0xff]
    %v147 = vld [vmem:[%s1 + $0x18] sm:$0xff]
    %v148 = vld [vmem:[%s1 + $0x20] sm:$0xff]
    %v149 = vld [vmem:[%s1 + $0x28] sm:$0xff]
    %v150 = vld [vmem:[%s1 + $0x30] sm:$0xff]
    %v151 = vld [vmem:[%s1 + $0x38] sm:$0xff]
    %v152 = vld [vmem:[%s1 + $0x40] sm:$0xff]
    %v153 = vld [vmem:[%s1 + $0x48] sm:$0xff]
    %v154 = vld [vmem:[%s1 + $0x50] sm:$0xff]
    %v155 = vld [vmem:[%s1 + $0x58] sm:$0xff]
    %v156 = vld [vmem:[%s1 + $0x60] sm:$0xff]
    %v157 = vld [vmem:[%s1 + $0x68] sm:$0xff]
    %v158 = vld [vmem:[%s1 + $0x70] sm:$0xff]
    %v159 = vld [vmem:[%s1 + $0x78] sm:$0xff]
    %v160 = vld [vmem:[%s1 + $0x80] sm:$0xff]
    %v161 = vld [vmem:[%s1 + $0x88] sm:$0xff]
    %v162 = vld [vmem:[%s1 + $0x90] sm:$0xff]
    %v163 = vld [vmem:[%s1 + $0x98] sm:$0xff]
    %v164 = vld [vmem:[%s1 + $0xa0] sm:$0xff]
    %v165 = vld [vmem:[%s1 + $0xa8] sm:$0xff]
    %v166 = vld [vmem:[%s1 + $0xb0] sm:$0xff]
    %v167 = vld [vmem:[%s1 + $0xb8] sm:$0xff]
    %v168 = vld [vmem:[%s1 + $0xc0] sm:$0xff]
    %v169 = vld [vmem:[%s1 + $0xc8] sm:$0xff]
    %v170 = vld [vmem:[%s1 + $0xd0] sm:$0xff]
    %v171 = vld [vmem:[%s1 + $0xd8] sm:$0xff]
    %v172 = vld [vmem:[%s1 + $0xe0] sm:$0xff]
    %v173 = vld [vmem:[%s1 + $0xe8] sm:$0xff]
    %v174 = vld [vmem:[%s1 + $0xf0] sm:$0xff]
    %v175 = vld [vmem:[%s1 + $0xf8] sm:$0xff]
    %v176 = vld [vmem:[%s1 + $0x100] sm:$0xff]
    %v177 = vld [vmem:[%s1 + $0x108] sm:$0xff]
    %v178 = vld [vmem:[%s1 + $0x110] sm:$0xff]
    %v179 = vld [vmem:[%s1 + $0x118] sm:$0xff]
    %v180 = vld [vmem:[%s1 + $0x120] sm:$0xff]
    %v181 = vld [vmem:[%s1 + $0x128] sm:$0xff]
    %v182 = vld [vmem:[%s1 + $0x130] sm:$0xff]
    %v183 = vld [vmem:[%s1 + $0x138] sm:$0xff]
    %v184 = vld [vmem:[%s1 + $0x140] sm:$0xff]
    %v185 = vld [vmem:[%s1 + $0x148] sm:$0xff]
    %v186 = vld [vmem:[%s1 + $0x150] sm:$0xff]
    %v187 = vld [vmem:[%s1 + $0x158] sm:$0xff]
    %v188 = vld [vmem:[%s1 + $0x160] sm:$0xff]
    %v189 = vld [vmem:[%s1 + $0x168] sm:$0xff]
    %v190 = vld [vmem:[%s1 + $0x170] sm:$0xff]
    %v191 = vld [vmem:[%s1 + $0x178] sm:$0xff]
    %v192 = vld [vmem:[%s1 + $0x180] sm:$0xff]
    %v193 = vld [vmem:[%s1 + $0x188] sm:$0xff]
    %v194 = vld [vmem:[%s1 + $0x190] sm:$0xff]
    %v195 = vld [vmem:[%s1 + $0x198] sm:$0xff]
    %v196 = vld [vmem:[%s1 + $0x1a0] sm:$0xff]
    %v197 = vld [vmem:[%s1 + $0x1a8] sm:$0xff]
    %v198 = vld [vmem:[%s1 + $0x1b0] sm:$0xff]
    %v199 = vld [vmem:[%s1 + $0x1b8] sm:$0xff]
    %v200 = vld [vmem:[%s1 + $0x1c0] sm:$0xff]
    %v201 = vld [vmem:[%s1 + $0x1c8] sm:$0xff]
    %v202 = vld [vmem:[%s1 + $0x1d0] sm:$0xff]
    %v203 = vld [vmem:[%s1 + $0x1d8] sm:$0xff]
    %v204 = vld [vmem:[%s1 + $0x1e0] sm:$0xff]
    %v205 = vld [vmem:[%s1 + $0x1e8] sm:$0xff]
    %v206 = vld [vmem:[%s1 + $0x1f0] sm:$0xff]
    %v207 = vld [vmem:[%s1 + $0x1f8] sm:$0xff]
    %s208 = scalar_lea.vmem [#allocation2], 24
    %vm209 = vcmask 261120
    %210 = vst.msk [vmem:[%s208 + $0x1] sm:$0xff] %vm209, %v144
    %211 = vst.msk [vmem:[%s208 + $0x9] sm:$0xff] %vm209, %v145
    %212 = vst.msk [vmem:[%s208 + $0x19] sm:$0xff] %vm209, %v146
    %213 = vst.msk [vmem:[%s208 + $0x21] sm:$0xff] %vm209, %v147
    %214 = vst.msk [vmem:[%s208 + $0x31] sm:$0xff] %vm209, %v148
    %215 = vst.msk [vmem:[%s208 + $0x39] sm:$0xff] %vm209, %v149
    %216 = vst.msk [vmem:[%s208 + $0x49] sm:$0xff] %vm209, %v150
    %217 = vst.msk [vmem:[%s208 + $0x51] sm:$0xff] %vm209, %v151
    %218 = vst.msk [vmem:[%s208 + $0x61] sm:$0xff] %vm209, %v152
    %219 = vst.msk [vmem:[%s208 + $0x69] sm:$0xff] %vm209, %v153
    %220 = vst.msk [vmem:[%s208 + $0x79] sm:$0xff] %vm209, %v154
    %221 = vst.msk [vmem:[%s208 + $0x81] sm:$0xff] %vm209, %v155
    %222 = vst.msk [vmem:[%s208 + $0x91] sm:$0xff] %vm209, %v156
    %223 = vst.msk [vmem:[%s208 + $0x99] sm:$0xff] %vm209, %v157
    %224 = vst.msk [vmem:[%s208 + $0xa9] sm:$0xff] %vm209, %v158
    %225 = vst.msk [vmem:[%s208 + $0xb1] sm:$0xff] %vm209, %v159
    %226 = vst.msk [vmem:[%s208 + $0xc1] sm:$0xff] %vm209, %v160
    %227 = vst.msk [vmem:[%s208 + $0xc9] sm:$0xff] %vm209, %v161
    %228 = vst.msk [vmem:[%s208 + $0xd9] sm:$0xff] %vm209, %v162
    %229 = vst.msk [vmem:[%s208 + $0xe1] sm:$0xff] %vm209, %v163
    %230 = vst.msk [vmem:[%s208 + $0xf1] sm:$0xff] %vm209, %v164
    %231 = vst.msk [vmem:[%s208 + $0xf9] sm:$0xff] %vm209, %v165
    %232 = vst.msk [vmem:[%s208 + $0x109] sm:$0xff] %vm209, %v166
    %233 = vst.msk [vmem:[%s208 + $0x111] sm:$0xff] %vm209, %v167
    %234 = vst.msk [vmem:[%s208 + $0x121] sm:$0xff] %vm209, %v168
    %235 = vst.msk [vmem:[%s208 + $0x129] sm:$0xff] %vm209, %v169
    %236 = vst.msk [vmem:[%s208 + $0x139] sm:$0xff] %vm209, %v170
    %237 = vst.msk [vmem:[%s208 + $0x141] sm:$0xff] %vm209, %v171
    %238 = vst.msk [vmem:[%s208 + $0x151] sm:$0xff] %vm209, %v172
    %239 = vst.msk [vmem:[%s208 + $0x159] sm:$0xff] %vm209, %v173
    %240 = vst.msk [vmem:[%s208 + $0x169] sm:$0xff] %vm209, %v174
    %241 = vst.msk [vmem:[%s208 + $0x171] sm:$0xff] %vm209, %v175
    %242 = vst.msk [vmem:[%s208 + $0x1b1] sm:$0xff] %vm209, %v176
    %243 = vst.msk [vmem:[%s208 + $0x1b9] sm:$0xff] %vm209, %v177
    %244 = vst.msk [vmem:[%s208 + $0x1c9] sm:$0xff] %vm209, %v178
    %245 = vst.msk [vmem:[%s208 + $0x1d1] sm:$0xff] %vm209, %v179
    %246 = vst.msk [vmem:[%s208 + $0x1e1] sm:$0xff] %vm209, %v180
    %247 = vst.msk [vmem:[%s208 + $0x1e9] sm:$0xff] %vm209, %v181
    %248 = vst.msk [vmem:[%s208 + $0x1f9] sm:$0xff] %vm209, %v182
    %249 = vst.msk [vmem:[%s208 + $0x201] sm:$0xff] %vm209, %v183
    %250 = vst.msk [vmem:[%s208 + $0x211] sm:$0xff] %vm209, %v184
    %251 = vst.msk [vmem:[%s208 + $0x219] sm:$0xff] %vm209, %v185
    %252 = vst.msk [vmem:[%s208 + $0x229] sm:$0xff] %vm209, %v186
    %253 = vst.msk [vmem:[%s208 + $0x231] sm:$0xff] %vm209, %v187
    %254 = vst.msk [vmem:[%s208 + $0x241] sm:$0xff] %vm209, %v188
    %255 = vst.msk [vmem:[%s208 + $0x249] sm:$0xff] %vm209, %v189
    %256 = vst.msk [vmem:[%s208 + $0x259] sm:$0xff] %vm209, %v190
    %257 = vst.msk [vmem:[%s208 + $0x261] sm:$0xff] %vm209, %v191
    %258 = vst.msk [vmem:[%s208 + $0x271] sm:$0xff] %vm209, %v192
    %259 = vst.msk [vmem:[%s208 + $0x279] sm:$0xff] %vm209, %v193
    %260 = vst.msk [vmem:[%s208 + $0x289] sm:$0xff] %vm209, %v194
    %261 = vst.msk [vmem:[%s208 + $0x291] sm:$0xff] %vm209, %v195
    %262 = vst.msk [vmem:[%s208 + $0x2a1] sm:$0xff] %vm209, %v196
    %263 = vst.msk [vmem:[%s208 + $0x2a9] sm:$0xff] %vm209, %v197
    %264 = vst.msk [vmem:[%s208 + $0x2b9] sm:$0xff] %vm209, %v198
    %265 = vst.msk [vmem:[%s208 + $0x2c1] sm:$0xff] %vm209, %v199
    %266 = vst.msk [vmem:[%s208 + $0x2d1] sm:$0xff] %vm209, %v200
    %267 = vst.msk [vmem:[%s208 + $0x2d9] sm:$0xff] %vm209, %v201
    %268 = vst.msk [vmem:[%s208 + $0x2e9] sm:$0xff] %vm209, %v202
    %269 = vst.msk [vmem:[%s208 + $0x2f1] sm:$0xff] %vm209, %v203
    %270 = vst.msk [vmem:[%s208 + $0x301] sm:$0xff] %vm209, %v204
    %271 = vst.msk [vmem:[%s208 + $0x309] sm:$0xff] %vm209, %v205
    %272 = vst.msk [vmem:[%s208 + $0x319] sm:$0xff] %vm209, %v206
    %273 = vst.msk [vmem:[%s208 + $0x321] sm:$0xff] %vm209, %v207
    %v274 = vld [vmem:[%s0] sm:$0xff]
    %v275 = vld [vmem:[%s0 + $0x8] sm:$0xff]
    %v276 = vld [vmem:[%s0 + $0x10] sm:$0xff]
    %v277 = vld [vmem:[%s0 + $0x18] sm:$0xff]
    %v278 = vld [vmem:[%s0 + $0x20] sm:$0xff]
    %v279 = vld [vmem:[%s0 + $0x28] sm:$0xff]
    %v280 = vld [vmem:[%s0 + $0x30] sm:$0xff]
    %v281 = vld [vmem:[%s0 + $0x38] sm:$0xff]
    %v282 = vld [vmem:[%s0 + $0x40] sm:$0xff]
    %v283 = vld [vmem:[%s0 + $0x48] sm:$0xff]
    %v284 = vld [vmem:[%s0 + $0x50] sm:$0xff]
    %v285 = vld [vmem:[%s0 + $0x58] sm:$0xff]
    %v286 = vld [vmem:[%s0 + $0x60] sm:$0xff]
    %v287 = vld [vmem:[%s0 + $0x68] sm:$0xff]
    %v288 = vld [vmem:[%s0 + $0x70] sm:$0xff]
    %v289 = vld [vmem:[%s0 + $0x78] sm:$0xff]
    %v290 = vld [vmem:[%s0 + $0x80] sm:$0xff]
    %v291 = vld [vmem:[%s0 + $0x88] sm:$0xff]
    %v292 = vld [vmem:[%s0 + $0x90] sm:$0xff]
    %v293 = vld [vmem:[%s0 + $0x98] sm:$0xff]
    %v294 = vld [vmem:[%s0 + $0xa0] sm:$0xff]
    %v295 = vld [vmem:[%s0 + $0xa8] sm:$0xff]
    %v296 = vld [vmem:[%s0 + $0xb0] sm:$0xff]
    %v297 = vld [vmem:[%s0 + $0xb8] sm:$0xff]
    %v298 = vld [vmem:[%s0 + $0xc0] sm:$0xff]
    %v299 = vld [vmem:[%s0 + $0xc8] sm:$0xff]
    %v300 = vld [vmem:[%s0 + $0xd0] sm:$0xff]
    %v301 = vld [vmem:[%s0 + $0xd8] sm:$0xff]
    %v302 = vld [vmem:[%s0 + $0xe0] sm:$0xff]
    %v303 = vld [vmem:[%s0 + $0xe8] sm:$0xff]
    %v304 = vld [vmem:[%s0 + $0xf0] sm:$0xff]
    %v305 = vld [vmem:[%s0 + $0xf8] sm:$0xff]
    %v306 = vld [vmem:[%s0 + $0x100] sm:$0xff]
    %v307 = vld [vmem:[%s0 + $0x108] sm:$0xff]
    %v308 = vld [vmem:[%s0 + $0x110] sm:$0xff]
    %v309 = vld [vmem:[%s0 + $0x118] sm:$0xff]
    %v310 = vld [vmem:[%s0 + $0x120] sm:$0xff]
    %v311 = vld [vmem:[%s0 + $0x128] sm:$0xff]
    %v312 = vld [vmem:[%s0 + $0x130] sm:$0xff]
    %v313 = vld [vmem:[%s0 + $0x138] sm:$0xff]
    %v314 = vld [vmem:[%s0 + $0x140] sm:$0xff]
    %v315 = vld [vmem:[%s0 + $0x148] sm:$0xff]
    %v316 = vld [vmem:[%s0 + $0x150] sm:$0xff]
    %v317 = vld [vmem:[%s0 + $0x158] sm:$0xff]
    %v318 = vld [vmem:[%s0 + $0x160] sm:$0xff]
    %v319 = vld [vmem:[%s0 + $0x168] sm:$0xff]
    %v320 = vld [vmem:[%s0 + $0x170] sm:$0xff]
    %v321 = vld [vmem:[%s0 + $0x178] sm:$0xff]
    %v322 = vld [vmem:[%s0 + $0x180] sm:$0xff]
    %v323 = vld [vmem:[%s0 + $0x188] sm:$0xff]
    %v324 = vld [vmem:[%s0 + $0x190] sm:$0xff]
    %v325 = vld [vmem:[%s0 + $0x198] sm:$0xff]
    %v326 = vld [vmem:[%s0 + $0x1a0] sm:$0xff]
    %v327 = vld [vmem:[%s0 + $0x1a8] sm:$0xff]
    %v328 = vld [vmem:[%s0 + $0x1b0] sm:$0xff]
    %v329 = vld [vmem:[%s0 + $0x1b8] sm:$0xff]
    %v330 = vld [vmem:[%s0 + $0x1c0] sm:$0xff]
    %v331 = vld [vmem:[%s0 + $0x1c8] sm:$0xff]
    %v332 = vld [vmem:[%s0 + $0x1d0] sm:$0xff]
    %v333 = vld [vmem:[%s0 + $0x1d8] sm:$0xff]
    %v334 = vld [vmem:[%s0 + $0x1e0] sm:$0xff]
    %v335 = vld [vmem:[%s0 + $0x1e8] sm:$0xff]
    %v336 = vld [vmem:[%s0 + $0x1f0] sm:$0xff]
    %v337 = vld [vmem:[%s0 + $0x1f8] sm:$0xff]
    %402 = vrot.lane.b32.xlu0 %v274, 32
    %v403 = vpop.permute.xlu0 %402
    %404 = vrot.lane.b32.xlu0 %v275, 32
    %v405 = vpop.permute.xlu0 %404
    %406 = vrot.lane.b32.xlu0 %v276, 32
    %v407 = vpop.permute.xlu0 %406
    %408 = vrot.lane.b32.xlu0 %v277, 32
    %v409 = vpop.permute.xlu0 %408
    %410 = vrot.lane.b32.xlu0 %v278, 32
    %v411 = vpop.permute.xlu0 %410
    %412 = vrot.lane.b32.xlu0 %v279, 32
    %v413 = vpop.permute.xlu0 %412
    %414 = vrot.lane.b32.xlu0 %v280, 32
    %v415 = vpop.permute.xlu0 %414
    %416 = vrot.lane.b32.xlu0 %v281, 32
    %v417 = vpop.permute.xlu0 %416
    %418 = vrot.lane.b32.xlu0 %v282, 32
    %v419 = vpop.permute.xlu0 %418
    %420 = vrot.lane.b32.xlu0 %v283, 32
    %v421 = vpop.permute.xlu0 %420
    %422 = vrot.lane.b32.xlu0 %v284, 32
    %v423 = vpop.permute.xlu0 %422
    %424 = vrot.lane.b32.xlu0 %v285, 32
    %v425 = vpop.permute.xlu0 %424
    %426 = vrot.lane.b32.xlu0 %v286, 32
    %v427 = vpop.permute.xlu0 %426
    %428 = vrot.lane.b32.xlu0 %v287, 32
    %v429 = vpop.permute.xlu0 %428
    %430 = vrot.lane.b32.xlu0 %v288, 32
    %v431 = vpop.permute.xlu0 %430
    %432 = vrot.lane.b32.xlu0 %v289, 32
    %v433 = vpop.permute.xlu0 %432
    %434 = vrot.lane.b32.xlu0 %v290, 32
    %v435 = vpop.permute.xlu0 %434
    %436 = vrot.lane.b32.xlu0 %v291, 32
    %v437 = vpop.permute.xlu0 %436
    %438 = vrot.lane.b32.xlu0 %v292, 32
    %v439 = vpop.permute.xlu0 %438
    %440 = vrot.lane.b32.xlu0 %v293, 32
    %v441 = vpop.permute.xlu0 %440
    %442 = vrot.lane.b32.xlu0 %v294, 32
    %v443 = vpop.permute.xlu0 %442
    %444 = vrot.lane.b32.xlu0 %v295, 32
    %v445 = vpop.permute.xlu0 %444
    %446 = vrot.lane.b32.xlu0 %v296, 32
    %v447 = vpop.permute.xlu0 %446
    %448 = vrot.lane.b32.xlu0 %v297, 32
    %v449 = vpop.permute.xlu0 %448
    %450 = vrot.lane.b32.xlu0 %v298, 32
    %v451 = vpop.permute.xlu0 %450
    %452 = vrot.lane.b32.xlu0 %v299, 32
    %v453 = vpop.permute.xlu0 %452
    %454 = vrot.lane.b32.xlu0 %v300, 32
    %v455 = vpop.permute.xlu0 %454
    %456 = vrot.lane.b32.xlu0 %v301, 32
    %v457 = vpop.permute.xlu0 %456
    %458 = vrot.lane.b32.xlu0 %v302, 32
    %v459 = vpop.permute.xlu0 %458
    %460 = vrot.lane.b32.xlu0 %v303, 32
    %v461 = vpop.permute.xlu0 %460
    %462 = vrot.lane.b32.xlu0 %v304, 32
    %v463 = vpop.permute.xlu0 %462
    %464 = vrot.lane.b32.xlu0 %v305, 32
    %v465 = vpop.permute.xlu0 %464
    %466 = vrot.lane.b32.xlu0 %v306, 32
    %v467 = vpop.permute.xlu0 %466
    %468 = vrot.lane.b32.xlu0 %v307, 32
    %v469 = vpop.permute.xlu0 %468
    %470 = vrot.lane.b32.xlu0 %v308, 32
    %v471 = vpop.permute.xlu0 %470
    %472 = vrot.lane.b32.xlu0 %v309, 32
    %v473 = vpop.permute.xlu0 %472
    %474 = vrot.lane.b32.xlu0 %v310, 32
    %v475 = vpop.permute.xlu0 %474
    %476 = vrot.lane.b32.xlu0 %v311, 32
    %v477 = vpop.permute.xlu0 %476
    %478 = vrot.lane.b32.xlu0 %v312, 32
    %v479 = vpop.permute.xlu0 %478
    %480 = vrot.lane.b32.xlu0 %v313, 32
    %v481 = vpop.permute.xlu0 %480
    %482 = vrot.lane.b32.xlu0 %v314, 32
    %v483 = vpop.permute.xlu0 %482
    %484 = vrot.lane.b32.xlu0 %v315, 32
    %v485 = vpop.permute.xlu0 %484
    %486 = vrot.lane.b32.xlu0 %v316, 32
    %v487 = vpop.permute.xlu0 %486
    %488 = vrot.lane.b32.xlu0 %v317, 32
    %v489 = vpop.permute.xlu0 %488
    %490 = vrot.lane.b32.xlu0 %v318, 32
    %v491 = vpop.permute.xlu0 %490
    %492 = vrot.lane.b32.xlu0 %v319, 32
    %v493 = vpop.permute.xlu0 %492
    %494 = vrot.lane.b32.xlu0 %v320, 32
    %v495 = vpop.permute.xlu0 %494
    %496 = vrot.lane.b32.xlu0 %v321, 32
    %v497 = vpop.permute.xlu0 %496
    %498 = vrot.lane.b32.xlu0 %v322, 32
    %v499 = vpop.permute.xlu0 %498
    %500 = vrot.lane.b32.xlu0 %v323, 32
    %v501 = vpop.permute.xlu0 %500
    %502 = vrot.lane.b32.xlu0 %v324, 32
    %v503 = vpop.permute.xlu0 %502
    %504 = vrot.lane.b32.xlu0 %v325, 32
    %v505 = vpop.permute.xlu0 %504
    %506 = vrot.lane.b32.xlu0 %v326, 32
    %v507 = vpop.permute.xlu0 %506
    %508 = vrot.lane.b32.xlu0 %v327, 32
    %v509 = vpop.permute.xlu0 %508
    %510 = vrot.lane.b32.xlu0 %v328, 32
    %v511 = vpop.permute.xlu0 %510
    %512 = vrot.lane.b32.xlu0 %v329, 32
    %v513 = vpop.permute.xlu0 %512
    %514 = vrot.lane.b32.xlu0 %v330, 32
    %v515 = vpop.permute.xlu0 %514
    %516 = vrot.lane.b32.xlu0 %v331, 32
    %v517 = vpop.permute.xlu0 %516
    %518 = vrot.lane.b32.xlu0 %v332, 32
    %v519 = vpop.permute.xlu0 %518
    %520 = vrot.lane.b32.xlu0 %v333, 32
    %v521 = vpop.permute.xlu0 %520
    %522 = vrot.lane.b32.xlu0 %v334, 32
    %v523 = vpop.permute.xlu0 %522
    %524 = vrot.lane.b32.xlu0 %v335, 32
    %v525 = vpop.permute.xlu0 %524
    %526 = vrot.lane.b32.xlu0 %v336, 32
    %v527 = vpop.permute.xlu0 %526
    %528 = vrot.lane.b32.xlu0 %v337, 32
    %v529 = vpop.permute.xlu0 %528
    %vm594 = vcmask 294144
    %595 = vst.msk [vmem:[%s208 + $0x1] sm:$0xff] %vm594, %v403
    %596 = vst.msk [vmem:[%s208 + $0x9] sm:$0xff] %vm594, %v405
    %597 = vst.msk [vmem:[%s208 + $0x19] sm:$0xff] %vm594, %v407
    %598 = vst.msk [vmem:[%s208 + $0x21] sm:$0xff] %vm594, %v409
    %599 = vst.msk [vmem:[%s208 + $0x31] sm:$0xff] %vm594, %v411
    %600 = vst.msk [vmem:[%s208 + $0x39] sm:$0xff] %vm594, %v413
    %601 = vst.msk [vmem:[%s208 + $0x49] sm:$0xff] %vm594, %v415
    %602 = vst.msk [vmem:[%s208 + $0x51] sm:$0xff] %vm594, %v417
    %603 = vst.msk [vmem:[%s208 + $0x61] sm:$0xff] %vm594, %v419
    %604 = vst.msk [vmem:[%s208 + $0x69] sm:$0xff] %vm594, %v421
    %605 = vst.msk [vmem:[%s208 + $0x79] sm:$0xff] %vm594, %v423
    %606 = vst.msk [vmem:[%s208 + $0x81] sm:$0xff] %vm594, %v425
    %607 = vst.msk [vmem:[%s208 + $0x91] sm:$0xff] %vm594, %v427
    %608 = vst.msk [vmem:[%s208 + $0x99] sm:$0xff] %vm594, %v429
    %609 = vst.msk [vmem:[%s208 + $0xa9] sm:$0xff] %vm594, %v431
    %610 = vst.msk [vmem:[%s208 + $0xb1] sm:$0xff] %vm594, %v433
    %611 = vst.msk [vmem:[%s208 + $0xc1] sm:$0xff] %vm594, %v435
    %612 = vst.msk [vmem:[%s208 + $0xc9] sm:$0xff] %vm594, %v437
    %613 = vst.msk [vmem:[%s208 + $0xd9] sm:$0xff] %vm594, %v439
    %614 = vst.msk [vmem:[%s208 + $0xe1] sm:$0xff] %vm594, %v441
    %615 = vst.msk [vmem:[%s208 + $0xf1] sm:$0xff] %vm594, %v443
    %616 = vst.msk [vmem:[%s208 + $0xf9] sm:$0xff] %vm594, %v445
    %617 = vst.msk [vmem:[%s208 + $0x109] sm:$0xff] %vm594, %v447
    %618 = vst.msk [vmem:[%s208 + $0x111] sm:$0xff] %vm594, %v449
    %619 = vst.msk [vmem:[%s208 + $0x121] sm:$0xff] %vm594, %v451
    %620 = vst.msk [vmem:[%s208 + $0x129] sm:$0xff] %vm594, %v453
    %621 = vst.msk [vmem:[%s208 + $0x139] sm:$0xff] %vm594, %v455
    %622 = vst.msk [vmem:[%s208 + $0x141] sm:$0xff] %vm594, %v457
    %623 = vst.msk [vmem:[%s208 + $0x151] sm:$0xff] %vm594, %v459
    %624 = vst.msk [vmem:[%s208 + $0x159] sm:$0xff] %vm594, %v461
    %625 = vst.msk [vmem:[%s208 + $0x169] sm:$0xff] %vm594, %v463
    %626 = vst.msk [vmem:[%s208 + $0x171] sm:$0xff] %vm594, %v465
    %627 = vst.msk [vmem:[%s208 + $0x1b1] sm:$0xff] %vm594, %v467
    %628 = vst.msk [vmem:[%s208 + $0x1b9] sm:$0xff] %vm594, %v469
    %629 = vst.msk [vmem:[%s208 + $0x1c9] sm:$0xff] %vm594, %v471
    %630 = vst.msk [vmem:[%s208 + $0x1d1] sm:$0xff] %vm594, %v473
    %631 = vst.msk [vmem:[%s208 + $0x1e1] sm:$0xff] %vm594, %v475
    %632 = vst.msk [vmem:[%s208 + $0x1e9] sm:$0xff] %vm594, %v477
    %633 = vst.msk [vmem:[%s208 + $0x1f9] sm:$0xff] %vm594, %v479
    %634 = vst.msk [vmem:[%s208 + $0x201] sm:$0xff] %vm594, %v481
    %635 = vst.msk [vmem:[%s208 + $0x211] sm:$0xff] %vm594, %v483
    %636 = vst.msk [vmem:[%s208 + $0x219] sm:$0xff] %vm594, %v485
    %637 = vst.msk [vmem:[%s208 + $0x229] sm:$0xff] %vm594, %v487
    %638 = vst.msk [vmem:[%s208 + $0x231] sm:$0xff] %vm594, %v489
    %639 = vst.msk [vmem:[%s208 + $0x241] sm:$0xff] %vm594, %v491
    %640 = vst.msk [vmem:[%s208 + $0x249] sm:$0xff] %vm594, %v493
    %641 = vst.msk [vmem:[%s208 + $0x259] sm:$0xff] %vm594, %v495
    %642 = vst.msk [vmem:[%s208 + $0x261] sm:$0xff] %vm594, %v497
    %643 = vst.msk [vmem:[%s208 + $0x271] sm:$0xff] %vm594, %v499
    %644 = vst.msk [vmem:[%s208 + $0x279] sm:$0xff] %vm594, %v501
    %645 = vst.msk [vmem:[%s208 + $0x289] sm:$0xff] %vm594, %v503
    %646 = vst.msk [vmem:[%s208 + $0x291] sm:$0xff] %vm594, %v505
    %647 = vst.msk [vmem:[%s208 + $0x2a1] sm:$0xff] %vm594, %v507
    %648 = vst.msk [vmem:[%s208 + $0x2a9] sm:$0xff] %vm594, %v509
    %649 = vst.msk [vmem:[%s208 + $0x2b9] sm:$0xff] %vm594, %v511
    %650 = vst.msk [vmem:[%s208 + $0x2c1] sm:$0xff] %vm594, %v513
    %651 = vst.msk [vmem:[%s208 + $0x2d1] sm:$0xff] %vm594, %v515
    %652 = vst.msk [vmem:[%s208 + $0x2d9] sm:$0xff] %vm594, %v517
    %653 = vst.msk [vmem:[%s208 + $0x2e9] sm:$0xff] %vm594, %v519
    %654 = vst.msk [vmem:[%s208 + $0x2f1] sm:$0xff] %vm594, %v521
    %655 = vst.msk [vmem:[%s208 + $0x301] sm:$0xff] %vm594, %v523
    %656 = vst.msk [vmem:[%s208 + $0x309] sm:$0xff] %vm594, %v525
    %657 = vst.msk [vmem:[%s208 + $0x319] sm:$0xff] %vm594, %v527
    %658 = vst.msk [vmem:[%s208 + $0x321] sm:$0xff] %vm594, %v529
    %v659 = vld [vmem:[#allocation2] sm:$0xff]
    %v660 = vld [vmem:[#allocation2 + $0x8] sm:$0xff]
    %v661 = vld [vmem:[#allocation2 + $0x18] sm:$0xff]
    %v662 = vld [vmem:[#allocation2 + $0x20] sm:$0xff]
    %v663 = vld [vmem:[#allocation2 + $0x30] sm:$0xff]
    %v664 = vld [vmem:[#allocation2 + $0x38] sm:$0xff]
    %v665 = vld [vmem:[#allocation2 + $0x48] sm:$0xff]
    %v666 = vld [vmem:[#allocation2 + $0x50] sm:$0xff]
    %v667 = vld [vmem:[#allocation2 + $0x60] sm:$0xff]
    %v668 = vld [vmem:[#allocation2 + $0x68] sm:$0xff]
    %v669 = vld [vmem:[#allocation2 + $0x78] sm:$0xff]
    %v670 = vld [vmem:[#allocation2 + $0x80] sm:$0xff]
    %v671 = vld [vmem:[#allocation2 + $0x90] sm:$0xff]
    %v672 = vld [vmem:[#allocation2 + $0x98] sm:$0xff]
    %v673 = vld [vmem:[#allocation2 + $0xa8] sm:$0xff]
    %v674 = vld [vmem:[#allocation2 + $0xb0] sm:$0xff]
    %v675 = vld [vmem:[#allocation2 + $0xc0] sm:$0xff]
    %v676 = vld [vmem:[#allocation2 + $0xc8] sm:$0xff]
    %v677 = vld [vmem:[#allocation2 + $0xd8] sm:$0xff]
    %v678 = vld [vmem:[#allocation2 + $0xe0] sm:$0xff]
    %v679 = vld [vmem:[#allocation2 + $0xf0] sm:$0xff]
    %v680 = vld [vmem:[#allocation2 + $0xf8] sm:$0xff]
    %v681 = vld [vmem:[#allocation2 + $0x108] sm:$0xff]
    %v682 = vld [vmem:[#allocation2 + $0x110] sm:$0xff]
    %v683 = vld [vmem:[#allocation2 + $0x120] sm:$0xff]
    %v684 = vld [vmem:[#allocation2 + $0x128] sm:$0xff]
    %v685 = vld [vmem:[#allocation2 + $0x138] sm:$0xff]
    %v686 = vld [vmem:[#allocation2 + $0x140] sm:$0xff]
    %v687 = vld [vmem:[#allocation2 + $0x150] sm:$0xff]
    %v688 = vld [vmem:[#allocation2 + $0x158] sm:$0xff]
    %v689 = vld [vmem:[#allocation2 + $0x168] sm:$0xff]
    %v690 = vld [vmem:[#allocation2 + $0x170] sm:$0xff]
    %v691 = vld [vmem:[#allocation2 + $0x180] sm:$0xff]
    %v692 = vld [vmem:[#allocation2 + $0x188] sm:$0xff]
    %v693 = vld [vmem:[#allocation2 + $0x198] sm:$0xff]
    %v694 = vld [vmem:[#allocation2 + $0x1a0] sm:$0xff]
    %v695 = vld [vmem:[#allocation2 + $0x1b0] sm:$0xff]
    %v696 = vld [vmem:[#allocation2 + $0x1b8] sm:$0xff]
    %v697 = vld [vmem:[#allocation2 + $0x1c8] sm:$0xff]
    %v698 = vld [vmem:[#allocation2 + $0x1d0] sm:$0xff]
    %v699 = vld [vmem:[#allocation2 + $0x1e0] sm:$0xff]
    %v700 = vld [vmem:[#allocation2 + $0x1e8] sm:$0xff]
    %v701 = vld [vmem:[#allocation2 + $0x1f8] sm:$0xff]
    %v702 = vld [vmem:[#allocation2 + $0x200] sm:$0xff]
    %v703 = vld [vmem:[#allocation2 + $0x210] sm:$0xff]
    %v704 = vld [vmem:[#allocation2 + $0x218] sm:$0xff]
    %v705 = vld [vmem:[#allocation2 + $0x228] sm:$0xff]
    %v706 = vld [vmem:[#allocation2 + $0x230] sm:$0xff]
    %v707 = vld [vmem:[#allocation2 + $0x240] sm:$0xff]
    %v708 = vld [vmem:[#allocation2 + $0x248] sm:$0xff]
    %v709 = vld [vmem:[#allocation2 + $0x258] sm:$0xff]
    %v710 = vld [vmem:[#allocation2 + $0x260] sm:$0xff]
    %v711 = vld [vmem:[#allocation2 + $0x270] sm:$0xff]
    %v712 = vld [vmem:[#allocation2 + $0x278] sm:$0xff]
    %v713 = vld [vmem:[#allocation2 + $0x288] sm:$0xff]
    %v714 = vld [vmem:[#allocation2 + $0x290] sm:$0xff]
    %v715 = vld [vmem:[#allocation2 + $0x2a0] sm:$0xff]
    %v716 = vld [vmem:[#allocation2 + $0x2a8] sm:$0xff]
    %v717 = vld [vmem:[#allocation2 + $0x2b8] sm:$0xff]
    %v718 = vld [vmem:[#allocation2 + $0x2c0] sm:$0xff]
    %v719 = vld [vmem:[#allocation2 + $0x2d0] sm:$0xff]
    %v720 = vld [vmem:[#allocation2 + $0x2d8] sm:$0xff]
    %v721 = vld [vmem:[#allocation2 + $0x2e8] sm:$0xff]
    %v722 = vld [vmem:[#allocation2 + $0x2f0] sm:$0xff]
    %v723 = vld [vmem:[#allocation2 + $0x300] sm:$0xff]
    %v724 = vld [vmem:[#allocation2 + $0x308] sm:$0xff]
    %v725 = vld [vmem:[#allocation2 + $0x318] sm:$0xff]
    %v726 = vld [vmem:[#allocation2 + $0x320] sm:$0xff]
    %v727 = vld [vmem:[#allocation2 + $0x330] sm:$0xff]
    %v728 = vld [vmem:[#allocation2 + $0x338] sm:$0xff]
    %v729 = vld [vmem:[#allocation2 + $0x348] sm:$0xff]
    %v730 = vld [vmem:[#allocation2 + $0x350] sm:$0xff]
    %v731 = vld [vmem:[#allocation4] sm:$0xff]
    %v732 = vld [vmem:[#allocation4 + $0x8] sm:$0xff]
    %v733 = vld [vmem:[#allocation4 + $0x10] sm:$0xff]
    %v734 = vld [vmem:[#allocation4 + $0x18] sm:$0xff]
    %v735 = vld [vmem:[#allocation4 + $0x20] sm:$0xf]
    %v736 = vld [vmem:[%s3] sm:$0x1]
    %v738 = vperm.slane %v736, 0
    %v741 = vsel %vm34, %v659, 0
    %v744 = vsel %vm34, %v660, 0
    %v747 = vsel %vm34, %v661, 0
    %v750 = vsel %vm34, %v662, 0
    %v753 = vsel %vm34, %v663, 0
    %v756 = vsel %vm34, %v664, 0
    %v759 = vsel %vm34, %v665, 0
    %v762 = vsel %vm34, %v666, 0
    %v765 = vsel %vm34, %v667, 0
    %v768 = vsel %vm34, %v668, 0
    %v771 = vsel %vm34, %v669, 0
    %v774 = vsel %vm34, %v670, 0
    %v777 = vsel %vm34, %v671, 0
    %v780 = vsel %vm34, %v672, 0
    %v783 = vsel %vm34, %v673, 0
    %v786 = vsel %vm34, %v674, 0
    %v789 = vsel %vm34, %v675, 0
    %v792 = vsel %vm34, %v676, 0
    %v795 = vsel %vm34, %v677, 0
    %v798 = vsel %vm34, %v678, 0
    %v801 = vsel %vm34, %v679, 0
    %v804 = vsel %vm34, %v680, 0
    %v807 = vsel %vm34, %v681, 0
    %v810 = vsel %vm34, %v682, 0
    %v813 = vsel %vm34, %v683, 0
    %v816 = vsel %vm34, %v684, 0
    %v819 = vsel %vm34, %v685, 0
    %v822 = vsel %vm34, %v686, 0
    %v825 = vsel %vm34, %v687, 0
    %v828 = vsel %vm34, %v688, 0
    %v831 = vsel %vm34, %v689, 0
    %v834 = vsel %vm34, %v690, 0
    %v837 = vsel %vm34, %v695, 0
    %v840 = vsel %vm34, %v696, 0
    %v843 = vsel %vm34, %v697, 0
    %v846 = vsel %vm34, %v698, 0
    %v849 = vsel %vm34, %v699, 0
    %v852 = vsel %vm34, %v700, 0
    %v855 = vsel %vm34, %v701, 0
    %v858 = vsel %vm34, %v702, 0
    %v861 = vsel %vm34, %v703, 0
    %v864 = vsel %vm34, %v704, 0
    %v867 = vsel %vm34, %v705, 0
    %v870 = vsel %vm34, %v706, 0
    %v873 = vsel %vm34, %v707, 0
    %v876 = vsel %vm34, %v708, 0
    %v879 = vsel %vm34, %v709, 0
    %v882 = vsel %vm34, %v710, 0
    %v885 = vsel %vm34, %v711, 0
    %v888 = vsel %vm34, %v712, 0
    %v891 = vsel %vm34, %v713, 0
    %v894 = vsel %vm34, %v714, 0
    %v897 = vsel %vm34, %v715, 0
    %v900 = vsel %vm34, %v716, 0
    %v903 = vsel %vm34, %v717, 0
    %v906 = vsel %vm34, %v718, 0
    %v909 = vsel %vm34, %v719, 0
    %v912 = vsel %vm34, %v720, 0
    %v915 = vsel %vm34, %v721, 0
    %v918 = vsel %vm34, %v722, 0
    %v921 = vsel %vm34, %v723, 0
    %v924 = vsel %vm34, %v724, 0
    %v927 = vsel %vm34, %v725, 0
    %v930 = vsel %vm34, %v726, 0
    %vm932 = vcmask 1043456
    %v934 = vsel %vm932, %v735, 0
    %936 = vmatpush.msra.mxu0 0.0
    %937 = vmatpush.msra.mxu0 0.0
    %938 = vmatpush.msra.mxu0 0.0
    %939 = vmatpush.msra.mxu0 0.0
    %940 = vmatpush.msra.mxu0 0.0
    %941 = vmatpush.msra.mxu0 0.0
    %942 = vmatpush.msra.mxu0 0.0
    %943 = vmatpush.msra.mxu0 0.0
    %944 = vmatpush.msra.mxu0 0.0
    %945 = vmatpush.msra.mxu0 0.0
    %946 = vmatpush.msra.mxu0 0.0
    %947 = vmatpush.msra.mxu0 %v934
    %948 = vmatpush.msra.mxu0 %v734
    %949 = vmatpush.msra.mxu0 %v733
    %950 = vmatpush.msra.mxu0 %v732
    %951 = vmatpush.msra.mxu0 %v731
    %952 = vmatmul.f32.gmra.mxu0 %v741
    %v953 = vpop.f32.mrf.mxu0
    %v954 = vadd.f32 %v738, %v953
    %955 = vmatmul.f32.gmra.mxu0 %v744
    %v956 = vpop.f32.mrf.mxu0
    %v957 = vadd.f32 %v738, %v956
    %958 = vmatmul.f32.gmra.mxu0 %v747
    %v959 = vpop.f32.mrf.mxu0
    %v960 = vadd.f32 %v738, %v959
    %961 = vmatmul.f32.gmra.mxu0 %v750
    %v962 = vpop.f32.mrf.mxu0
    %v963 = vadd.f32 %v738, %v962
    %964 = vmatmul.f32.gmra.mxu0 %v753
    %v965 = vpop.f32.mrf.mxu0
    %v966 = vadd.f32 %v738, %v965
    %967 = vmatmul.f32.gmra.mxu0 %v756
    %v968 = vpop.f32.mrf.mxu0
    %v969 = vadd.f32 %v738, %v968
    %970 = vmatmul.f32.gmra.mxu0 %v759
    %v971 = vpop.f32.mrf.mxu0
    %v972 = vadd.f32 %v738, %v971
    %973 = vmatmul.f32.gmra.mxu0 %v762
    %v974 = vpop.f32.mrf.mxu0
    %v975 = vadd.f32 %v738, %v974
    %976 = vmatmul.f32.gmra.mxu0 %v765
    %v977 = vpop.f32.mrf.mxu0
    %v978 = vadd.f32 %v738, %v977
    %979 = vmatmul.f32.gmra.mxu0 %v768
    %v980 = vpop.f32.mrf.mxu0
    %v981 = vadd.f32 %v738, %v980
    %982 = vmatmul.f32.gmra.mxu0 %v771
    %v983 = vpop.f32.mrf.mxu0
    %v984 = vadd.f32 %v738, %v983
    %985 = vmatmul.f32.gmra.mxu0 %v774
    %v986 = vpop.f32.mrf.mxu0
    %v987 = vadd.f32 %v738, %v986
    %988 = vmatmul.f32.gmra.mxu0 %v777
    %v989 = vpop.f32.mrf.mxu0
    %v990 = vadd.f32 %v738, %v989
    %991 = vmatmul.f32.gmra.mxu0 %v780
    %v992 = vpop.f32.mrf.mxu0
    %v993 = vadd.f32 %v738, %v992
    %994 = vmatmul.f32.gmra.mxu0 %v783
    %v995 = vpop.f32.mrf.mxu0
    %v996 = vadd.f32 %v738, %v995
    %997 = vmatmul.f32.gmra.mxu0 %v786
    %v998 = vpop.f32.mrf.mxu0
    %v999 = vadd.f32 %v738, %v998
    %1000 = vmatmul.f32.gmra.mxu0 %v789
    %v1001 = vpop.f32.mrf.mxu0
    %v1002 = vadd.f32 %v738, %v1001
    %1003 = vmatmul.f32.gmra.mxu0 %v792
    %v1004 = vpop.f32.mrf.mxu0
    %v1005 = vadd.f32 %v738, %v1004
    %1006 = vmatmul.f32.gmra.mxu0 %v795
    %v1007 = vpop.f32.mrf.mxu0
    %v1008 = vadd.f32 %v738, %v1007
    %1009 = vmatmul.f32.gmra.mxu0 %v798
    %v1010 = vpop.f32.mrf.mxu0
    %v1011 = vadd.f32 %v738, %v1010
    %1012 = vmatmul.f32.gmra.mxu0 %v801
    %v1013 = vpop.f32.mrf.mxu0
    %v1014 = vadd.f32 %v738, %v1013
    %1015 = vmatmul.f32.gmra.mxu0 %v804
    %v1016 = vpop.f32.mrf.mxu0
    %v1017 = vadd.f32 %v738, %v1016
    %1018 = vmatmul.f32.gmra.mxu0 %v807
    %v1019 = vpop.f32.mrf.mxu0
    %v1020 = vadd.f32 %v738, %v1019
    %1021 = vmatmul.f32.gmra.mxu0 %v810
    %v1022 = vpop.f32.mrf.mxu0
    %v1023 = vadd.f32 %v738, %v1022
    %1024 = vmatmul.f32.gmra.mxu0 %v813
    %v1025 = vpop.f32.mrf.mxu0
    %v1026 = vadd.f32 %v738, %v1025
    %1027 = vmatmul.f32.gmra.mxu0 %v816
    %v1028 = vpop.f32.mrf.mxu0
    %v1029 = vadd.f32 %v738, %v1028
    %1030 = vmatmul.f32.gmra.mxu0 %v819
    %v1031 = vpop.f32.mrf.mxu0
    %v1032 = vadd.f32 %v738, %v1031
    %1033 = vmatmul.f32.gmra.mxu0 %v822
    %v1034 = vpop.f32.mrf.mxu0
    %v1035 = vadd.f32 %v738, %v1034
    %1036 = vmatmul.f32.gmra.mxu0 %v825
    %v1037 = vpop.f32.mrf.mxu0
    %v1038 = vadd.f32 %v738, %v1037
    %1039 = vmatmul.f32.gmra.mxu0 %v828
    %v1040 = vpop.f32.mrf.mxu0
    %v1041 = vadd.f32 %v738, %v1040
    %1042 = vmatmul.f32.gmra.mxu0 %v831
    %v1043 = vpop.f32.mrf.mxu0
    %v1044 = vadd.f32 %v738, %v1043
    %1045 = vmatmul.f32.gmra.mxu0 %v834
    %v1046 = vpop.f32.mrf.mxu0
    %v1047 = vadd.f32 %v738, %v1046
    %1048 = vmatmul.f32.gmra.mxu0 %v837
    %v1049 = vpop.f32.mrf.mxu0
    %v1050 = vadd.f32 %v738, %v1049
    %1051 = vmatmul.f32.gmra.mxu0 %v840
    %v1052 = vpop.f32.mrf.mxu0
    %v1053 = vadd.f32 %v738, %v1052
    %1054 = vmatmul.f32.gmra.mxu0 %v843
    %v1055 = vpop.f32.mrf.mxu0
    %v1056 = vadd.f32 %v738, %v1055
    %1057 = vmatmul.f32.gmra.mxu0 %v846
    %v1058 = vpop.f32.mrf.mxu0
    %v1059 = vadd.f32 %v738, %v1058
    %1060 = vmatmul.f32.gmra.mxu0 %v849
    %v1061 = vpop.f32.mrf.mxu0
    %v1062 = vadd.f32 %v738, %v1061
    %1063 = vmatmul.f32.gmra.mxu0 %v852
    %v1064 = vpop.f32.mrf.mxu0
    %v1065 = vadd.f32 %v738, %v1064
    %1066 = vmatmul.f32.gmra.mxu0 %v855
    %v1067 = vpop.f32.mrf.mxu0
    %v1068 = vadd.f32 %v738, %v1067
    %1069 = vmatmul.f32.gmra.mxu0 %v858
    %v1070 = vpop.f32.mrf.mxu0
    %v1071 = vadd.f32 %v738, %v1070
    %1072 = vmatmul.f32.gmra.mxu0 %v861
    %v1073 = vpop.f32.mrf.mxu0
    %v1074 = vadd.f32 %v738, %v1073
    %1075 = vmatmul.f32.gmra.mxu0 %v864
    %v1076 = vpop.f32.mrf.mxu0
    %v1077 = vadd.f32 %v738, %v1076
    %1078 = vmatmul.f32.gmra.mxu0 %v867
    %v1079 = vpop.f32.mrf.mxu0
    %v1080 = vadd.f32 %v738, %v1079
    %1081 = vmatmul.f32.gmra.mxu0 %v870
    %v1082 = vpop.f32.mrf.mxu0
    %v1083 = vadd.f32 %v738, %v1082
    %1084 = vmatmul.f32.gmra.mxu0 %v873
    %v1085 = vpop.f32.mrf.mxu0
    %v1086 = vadd.f32 %v738, %v1085
    %1087 = vmatmul.f32.gmra.mxu0 %v876
    %v1088 = vpop.f32.mrf.mxu0
    %v1089 = vadd.f32 %v738, %v1088
    %1090 = vmatmul.f32.gmra.mxu0 %v879
    %v1091 = vpop.f32.mrf.mxu0
    %v1092 = vadd.f32 %v738, %v1091
    %1093 = vmatmul.f32.gmra.mxu0 %v882
    %v1094 = vpop.f32.mrf.mxu0
    %v1095 = vadd.f32 %v738, %v1094
    %1096 = vmatmul.f32.gmra.mxu0 %v885
    %v1097 = vpop.f32.mrf.mxu0
    %v1098 = vadd.f32 %v738, %v1097
    %1099 = vmatmul.f32.gmra.mxu0 %v888
    %v1100 = vpop.f32.mrf.mxu0
    %v1101 = vadd.f32 %v738, %v1100
    %1102 = vmatmul.f32.gmra.mxu0 %v891
    %v1103 = vpop.f32.mrf.mxu0
    %v1104 = vadd.f32 %v738, %v1103
    %1105 = vmatmul.f32.gmra.mxu0 %v894
    %v1106 = vpop.f32.mrf.mxu0
    %v1107 = vadd.f32 %v738, %v1106
    %1108 = vmatmul.f32.gmra.mxu0 %v897
    %v1109 = vpop.f32.mrf.mxu0
    %v1110 = vadd.f32 %v738, %v1109
    %1111 = vmatmul.f32.gmra.mxu0 %v900
    %v1112 = vpop.f32.mrf.mxu0
    %v1113 = vadd.f32 %v738, %v1112
    %1114 = vmatmul.f32.gmra.mxu0 %v903
    %v1115 = vpop.f32.mrf.mxu0
    %v1116 = vadd.f32 %v738, %v1115
    %1117 = vmatmul.f32.gmra.mxu0 %v906
    %v1118 = vpop.f32.mrf.mxu0
    %v1119 = vadd.f32 %v738, %v1118
    %1120 = vmatmul.f32.gmra.mxu0 %v909
    %v1121 = vpop.f32.mrf.mxu0
    %v1122 = vadd.f32 %v738, %v1121
    %1123 = vmatmul.f32.gmra.mxu0 %v912
    %v1124 = vpop.f32.mrf.mxu0
    %v1125 = vadd.f32 %v738, %v1124
    %1126 = vmatmul.f32.gmra.mxu0 %v915
    %v1127 = vpop.f32.mrf.mxu0
    %v1128 = vadd.f32 %v738, %v1127
    %1129 = vmatmul.f32.gmra.mxu0 %v918
    %v1130 = vpop.f32.mrf.mxu0
    %v1131 = vadd.f32 %v738, %v1130
    %1132 = vmatmul.f32.gmra.mxu0 %v921
    %v1133 = vpop.f32.mrf.mxu0
    %v1134 = vadd.f32 %v738, %v1133
    %1135 = vmatmul.f32.gmra.mxu0 %v924
    %v1136 = vpop.f32.mrf.mxu0
    %v1137 = vadd.f32 %v738, %v1136
    %1138 = vmatmul.f32.gmra.mxu0 %v927
    %v1139 = vpop.f32.mrf.mxu0
    %v1140 = vadd.f32 %v738, %v1139
    %1141 = vmatmul.f32.gmra.mxu0 %v930
    %v1142 = vpop.f32.mrf.mxu0
    %v1143 = vadd.f32 %v738, %v1142
    %1144 = vdwg.mxu0
    %1145 = vst [vmem:[#allocation3] sm:$0xff] %v954
    %1146 = vst [vmem:[#allocation3 + $0x8] sm:$0xff] %v957
    %1147 = vst [vmem:[#allocation3 + $0x10] sm:$0xff] %v960
    %1148 = vst [vmem:[#allocation3 + $0x18] sm:$0xff] %v963
    %1149 = vst [vmem:[#allocation3 + $0x20] sm:$0xff] %v966
    %1150 = vst [vmem:[#allocation3 + $0x28] sm:$0xff] %v969
    %1151 = vst [vmem:[#allocation3 + $0x30] sm:$0xff] %v972
    %1152 = vst [vmem:[#allocation3 + $0x38] sm:$0xff] %v975
    %1153 = vst [vmem:[#allocation3 + $0x40] sm:$0xff] %v978
    %1154 = vst [vmem:[#allocation3 + $0x48] sm:$0xff] %v981
    %1155 = vst [vmem:[#allocation3 + $0x50] sm:$0xff] %v984
    %1156 = vst [vmem:[#allocation3 + $0x58] sm:$0xff] %v987
    %1157 = vst [vmem:[#allocation3 + $0x60] sm:$0xff] %v990
    %1158 = vst [vmem:[#allocation3 + $0x68] sm:$0xff] %v993
    %1159 = vst [vmem:[#allocation3 + $0x70] sm:$0xff] %v996
    %1160 = vst [vmem:[#allocation3 + $0x78] sm:$0xff] %v999
    %1161 = vst [vmem:[#allocation3 + $0x80] sm:$0xff] %v1002
    %1162 = vst [vmem:[#allocation3 + $0x88] sm:$0xff] %v1005
    %1163 = vst [vmem:[#allocation3 + $0x90] sm:$0xff] %v1008
    %1164 = vst [vmem:[#allocation3 + $0x98] sm:$0xff] %v1011
    %1165 = vst [vmem:[#allocation3 + $0xa0] sm:$0xff] %v1014
    %1166 = vst [vmem:[#allocation3 + $0xa8] sm:$0xff] %v1017
    %1167 = vst [vmem:[#allocation3 + $0xb0] sm:$0xff] %v1020
    %1168 = vst [vmem:[#allocation3 + $0xb8] sm:$0xff] %v1023
    %1169 = vst [vmem:[#allocation3 + $0xc0] sm:$0xff] %v1026
    %1170 = vst [vmem:[#allocation3 + $0xc8] sm:$0xff] %v1029
    %1171 = vst [vmem:[#allocation3 + $0xd0] sm:$0xff] %v1032
    %1172 = vst [vmem:[#allocation3 + $0xd8] sm:$0xff] %v1035
    %1173 = vst [vmem:[#allocation3 + $0xe0] sm:$0xff] %v1038
    %1174 = vst [vmem:[#allocation3 + $0xe8] sm:$0xff] %v1041
    %1175 = vst [vmem:[#allocation3 + $0xf0] sm:$0xff] %v1044
    %1176 = vst [vmem:[#allocation3 + $0xf8] sm:$0xff] %v1047
    %1177 = vst [vmem:[#allocation3 + $0x100] sm:$0xff] %v1050
    %1178 = vst [vmem:[#allocation3 + $0x108] sm:$0xff] %v1053
    %1179 = vst [vmem:[#allocation3 + $0x110] sm:$0xff] %v1056
    %1180 = vst [vmem:[#allocation3 + $0x118] sm:$0xff] %v1059
    %1181 = vst [vmem:[#allocation3 + $0x120] sm:$0xff] %v1062
    %1182 = vst [vmem:[#allocation3 + $0x128] sm:$0xff] %v1065
    %1183 = vst [vmem:[#allocation3 + $0x130] sm:$0xff] %v1068
    %1184 = vst [vmem:[#allocation3 + $0x138] sm:$0xff] %v1071
    %1185 = vst [vmem:[#allocation3 + $0x140] sm:$0xff] %v1074
    %1186 = vst [vmem:[#allocation3 + $0x148] sm:$0xff] %v1077
    %1187 = vst [vmem:[#allocation3 + $0x150] sm:$0xff] %v1080
    %1188 = vst [vmem:[#allocation3 + $0x158] sm:$0xff] %v1083
    %1189 = vst [vmem:[#allocation3 + $0x160] sm:$0xff] %v1086
    %1190 = vst [vmem:[#allocation3 + $0x168] sm:$0xff] %v1089
    %1191 = vst [vmem:[#allocation3 + $0x170] sm:$0xff] %v1092
    %1192 = vst [vmem:[#allocation3 + $0x178] sm:$0xff] %v1095
    %1193 = vst [vmem:[#allocation3 + $0x180] sm:$0xff] %v1098
    %1194 = vst [vmem:[#allocation3 + $0x188] sm:$0xff] %v1101
    %1195 = vst [vmem:[#allocation3 + $0x190] sm:$0xff] %v1104
    %1196 = vst [vmem:[#allocation3 + $0x198] sm:$0xff] %v1107
    %1197 = vst [vmem:[#allocation3 + $0x1a0] sm:$0xff] %v1110
    %1198 = vst [vmem:[#allocation3 + $0x1a8] sm:$0xff] %v1113
    %1199 = vst [vmem:[#allocation3 + $0x1b0] sm:$0xff] %v1116
    %1200 = vst [vmem:[#allocation3 + $0x1b8] sm:$0xff] %v1119
    %1201 = vst [vmem:[#allocation3 + $0x1c0] sm:$0xff] %v1122
    %1202 = vst [vmem:[#allocation3 + $0x1c8] sm:$0xff] %v1125
    %1203 = vst [vmem:[#allocation3 + $0x1d0] sm:$0xff] %v1128
    %1204 = vst [vmem:[#allocation3 + $0x1d8] sm:$0xff] %v1131
    %1205 = vst [vmem:[#allocation3 + $0x1e0] sm:$0xff] %v1134
    %1206 = vst [vmem:[#allocation3 + $0x1e8] sm:$0xff] %v1137
    %1207 = vst [vmem:[#allocation3 + $0x1f0] sm:$0xff] %v1140
    %1208 = vst [vmem:[#allocation3 + $0x1f8] sm:$0xff] %v1143
    %s1209 = scalar_lea.vmem [#allocation4], 120
    %v1210 = vld [vmem:[%s1209] sm:$0xff]
    %v1211 = vld [vmem:[%s1209 + $0x8] sm:$0xff]
    %v1212 = vld [vmem:[%s1209 + $0x10] sm:$0xff]
    %v1213 = vld [vmem:[%s1209 + $0x18] sm:$0xff]
    %v1214 = vld [vmem:[%s1209 + $0x20] sm:$0xf]
    %v1216 = vsel %vm34, %v691, 0
    %v1219 = vsel %vm34, %v692, 0
    %v1222 = vsel %vm34, %v727, 0
    %v1225 = vsel %vm34, %v728, 0
    %v1228 = vsel %vm932, %v1214, 0
    %1230 = vmatpush.msra.mxu0 0.0
    %1231 = vmatpush.msra.mxu0 0.0
    %1232 = vmatpush.msra.mxu0 0.0
    %1233 = vmatpush.msra.mxu0 0.0
    %1234 = vmatpush.msra.mxu0 0.0
    %1235 = vmatpush.msra.mxu0 0.0
    %1236 = vmatpush.msra.mxu0 0.0
    %1237 = vmatpush.msra.mxu0 0.0
    %1238 = vmatpush.msra.mxu0 0.0
    %1239 = vmatpush.msra.mxu0 0.0
    %1240 = vmatpush.msra.mxu0 0.0
    %1241 = vmatpush.msra.mxu0 %v1228
    %1242 = vmatpush.msra.mxu0 %v1213
    %1243 = vmatpush.msra.mxu0 %v1212
    %1244 = vmatpush.msra.mxu0 %v1211
    %1245 = vmatpush.msra.mxu0 %v1210
    %1246 = vmatmul.f32.gmra.mxu0 %v747
    %v1247 = vpop.f32.mrf.mxu0
    %v1248 = vadd.f32 0.0, %v1247
    %1249 = vmatmul.f32.gmra.mxu0 %v750
    %v1250 = vpop.f32.mrf.mxu0
    %v1251 = vadd.f32 0.0, %v1250
    %1252 = vmatmul.f32.gmra.mxu0 %v753
    %v1253 = vpop.f32.mrf.mxu0
    %v1254 = vadd.f32 0.0, %v1253
    %1255 = vmatmul.f32.gmra.mxu0 %v756
    %v1256 = vpop.f32.mrf.mxu0
    %v1257 = vadd.f32 0.0, %v1256
    %1258 = vmatmul.f32.gmra.mxu0 %v759
    %v1259 = vpop.f32.mrf.mxu0
    %v1260 = vadd.f32 0.0, %v1259
    %1261 = vmatmul.f32.gmra.mxu0 %v762
    %v1262 = vpop.f32.mrf.mxu0
    %v1263 = vadd.f32 0.0, %v1262
    %1264 = vmatmul.f32.gmra.mxu0 %v765
    %v1265 = vpop.f32.mrf.mxu0
    %v1266 = vadd.f32 0.0, %v1265
    %1267 = vmatmul.f32.gmra.mxu0 %v768
    %v1268 = vpop.f32.mrf.mxu0
    %v1269 = vadd.f32 0.0, %v1268
    %1270 = vmatmul.f32.gmra.mxu0 %v771
    %v1271 = vpop.f32.mrf.mxu0
    %v1272 = vadd.f32 0.0, %v1271
    %1273 = vmatmul.f32.gmra.mxu0 %v774
    %v1274 = vpop.f32.mrf.mxu0
    %v1275 = vadd.f32 0.0, %v1274
    %1276 = vmatmul.f32.gmra.mxu0 %v777
    %v1277 = vpop.f32.mrf.mxu0
    %v1278 = vadd.f32 0.0, %v1277
    %1279 = vmatmul.f32.gmra.mxu0 %v780
    %v1280 = vpop.f32.mrf.mxu0
    %v1281 = vadd.f32 0.0, %v1280
    %1282 = vmatmul.f32.gmra.mxu0 %v783
    %v1283 = vpop.f32.mrf.mxu0
    %v1284 = vadd.f32 0.0, %v1283
    %1285 = vmatmul.f32.gmra.mxu0 %v786
    %v1286 = vpop.f32.mrf.mxu0
    %v1287 = vadd.f32 0.0, %v1286
    %1288 = vmatmul.f32.gmra.mxu0 %v789
    %v1289 = vpop.f32.mrf.mxu0
    %v1290 = vadd.f32 0.0, %v1289
    %1291 = vmatmul.f32.gmra.mxu0 %v792
    %v1292 = vpop.f32.mrf.mxu0
    %v1293 = vadd.f32 0.0, %v1292
    %1294 = vmatmul.f32.gmra.mxu0 %v795
    %v1295 = vpop.f32.mrf.mxu0
    %v1296 = vadd.f32 0.0, %v1295
    %1297 = vmatmul.f32.gmra.mxu0 %v798
    %v1298 = vpop.f32.mrf.mxu0
    %v1299 = vadd.f32 0.0, %v1298
    %1300 = vmatmul.f32.gmra.mxu0 %v801
    %v1301 = vpop.f32.mrf.mxu0
    %v1302 = vadd.f32 0.0, %v1301
    %1303 = vmatmul.f32.gmra.mxu0 %v804
    %v1304 = vpop.f32.mrf.mxu0
    %v1305 = vadd.f32 0.0, %v1304
    %1306 = vmatmul.f32.gmra.mxu0 %v807
    %v1307 = vpop.f32.mrf.mxu0
    %v1308 = vadd.f32 0.0, %v1307
    %1309 = vmatmul.f32.gmra.mxu0 %v810
    %v1310 = vpop.f32.mrf.mxu0
    %v1311 = vadd.f32 0.0, %v1310
    %1312 = vmatmul.f32.gmra.mxu0 %v813
    %v1313 = vpop.f32.mrf.mxu0
    %v1314 = vadd.f32 0.0, %v1313
    %1315 = vmatmul.f32.gmra.mxu0 %v816
    %v1316 = vpop.f32.mrf.mxu0
    %v1317 = vadd.f32 0.0, %v1316
    %1318 = vmatmul.f32.gmra.mxu0 %v819
    %v1319 = vpop.f32.mrf.mxu0
    %v1320 = vadd.f32 0.0, %v1319
    %1321 = vmatmul.f32.gmra.mxu0 %v822
    %v1322 = vpop.f32.mrf.mxu0
    %v1323 = vadd.f32 0.0, %v1322
    %1324 = vmatmul.f32.gmra.mxu0 %v825
    %v1325 = vpop.f32.mrf.mxu0
    %v1326 = vadd.f32 0.0, %v1325
    %1327 = vmatmul.f32.gmra.mxu0 %v828
    %v1328 = vpop.f32.mrf.mxu0
    %v1329 = vadd.f32 0.0, %v1328
    %1330 = vmatmul.f32.gmra.mxu0 %v831
    %v1331 = vpop.f32.mrf.mxu0
    %v1332 = vadd.f32 0.0, %v1331
    %1333 = vmatmul.f32.gmra.mxu0 %v834
    %v1334 = vpop.f32.mrf.mxu0
    %v1335 = vadd.f32 0.0, %v1334
    %1336 = vmatmul.f32.gmra.mxu0 %v1216
    %v1337 = vpop.f32.mrf.mxu0
    %v1338 = vadd.f32 0.0, %v1337
    %1339 = vmatmul.f32.gmra.mxu0 %v1219
    %v1340 = vpop.f32.mrf.mxu0
    %v1341 = vadd.f32 0.0, %v1340
    %1342 = vmatmul.f32.gmra.mxu0 %v843
    %v1343 = vpop.f32.mrf.mxu0
    %v1344 = vadd.f32 0.0, %v1343
    %1345 = vmatmul.f32.gmra.mxu0 %v846
    %v1346 = vpop.f32.mrf.mxu0
    %v1347 = vadd.f32 0.0, %v1346
    %1348 = vmatmul.f32.gmra.mxu0 %v849
    %v1349 = vpop.f32.mrf.mxu0
    %v1350 = vadd.f32 0.0, %v1349
    %1351 = vmatmul.f32.gmra.mxu0 %v852
    %v1352 = vpop.f32.mrf.mxu0
    %v1353 = vadd.f32 0.0, %v1352
    %1354 = vmatmul.f32.gmra.mxu0 %v855
    %v1355 = vpop.f32.mrf.mxu0
    %v1356 = vadd.f32 0.0, %v1355
    %1357 = vmatmul.f32.gmra.mxu0 %v858
    %v1358 = vpop.f32.mrf.mxu0
    %v1359 = vadd.f32 0.0, %v1358
    %1360 = vmatmul.f32.gmra.mxu0 %v861
    %v1361 = vpop.f32.mrf.mxu0
    %v1362 = vadd.f32 0.0, %v1361
    %1363 = vmatmul.f32.gmra.mxu0 %v864
    %v1364 = vpop.f32.mrf.mxu0
    %v1365 = vadd.f32 0.0, %v1364
    %1366 = vmatmul.f32.gmra.mxu0 %v867
    %v1367 = vpop.f32.mrf.mxu0
    %v1368 = vadd.f32 0.0, %v1367
    %1369 = vmatmul.f32.gmra.mxu0 %v870
    %v1370 = vpop.f32.mrf.mxu0
    %v1371 = vadd.f32 0.0, %v1370
    %1372 = vmatmul.f32.gmra.mxu0 %v873
    %v1373 = vpop.f32.mrf.mxu0
    %v1374 = vadd.f32 0.0, %v1373
    %1375 = vmatmul.f32.gmra.mxu0 %v876
    %v1376 = vpop.f32.mrf.mxu0
    %v1377 = vadd.f32 0.0, %v1376
    %1378 = vmatmul.f32.gmra.mxu0 %v879
    %v1379 = vpop.f32.mrf.mxu0
    %v1380 = vadd.f32 0.0, %v1379
    %1381 = vmatmul.f32.gmra.mxu0 %v882
    %v1382 = vpop.f32.mrf.mxu0
    %v1383 = vadd.f32 0.0, %v1382
    %1384 = vmatmul.f32.gmra.mxu0 %v885
    %v1385 = vpop.f32.mrf.mxu0
    %v1386 = vadd.f32 0.0, %v1385
    %1387 = vmatmul.f32.gmra.mxu0 %v888
    %v1388 = vpop.f32.mrf.mxu0
    %v1389 = vadd.f32 0.0, %v1388
    %1390 = vmatmul.f32.gmra.mxu0 %v891
    %v1391 = vpop.f32.mrf.mxu0
    %v1392 = vadd.f32 0.0, %v1391
    %1393 = vmatmul.f32.gmra.mxu0 %v894
    %v1394 = vpop.f32.mrf.mxu0
    %v1395 = vadd.f32 0.0, %v1394
    %1396 = vmatmul.f32.gmra.mxu0 %v897
    %v1397 = vpop.f32.mrf.mxu0
    %v1398 = vadd.f32 0.0, %v1397
    %1399 = vmatmul.f32.gmra.mxu0 %v900
    %v1400 = vpop.f32.mrf.mxu0
    %v1401 = vadd.f32 0.0, %v1400
    %1402 = vmatmul.f32.gmra.mxu0 %v903
    %v1403 = vpop.f32.mrf.mxu0
    %v1404 = vadd.f32 0.0, %v1403
    %1405 = vmatmul.f32.gmra.mxu0 %v906
    %v1406 = vpop.f32.mrf.mxu0
    %v1407 = vadd.f32 0.0, %v1406
    %1408 = vmatmul.f32.gmra.mxu0 %v909
    %v1409 = vpop.f32.mrf.mxu0
    %v1410 = vadd.f32 0.0, %v1409
    %1411 = vmatmul.f32.gmra.mxu0 %v912
    %v1412 = vpop.f32.mrf.mxu0
    %v1413 = vadd.f32 0.0, %v1412
    %1414 = vmatmul.f32.gmra.mxu0 %v915
    %v1415 = vpop.f32.mrf.mxu0
    %v1416 = vadd.f32 0.0, %v1415
    %1417 = vmatmul.f32.gmra.mxu0 %v918
    %v1418 = vpop.f32.mrf.mxu0
    %v1419 = vadd.f32 0.0, %v1418
    %1420 = vmatmul.f32.gmra.mxu0 %v921
    %v1421 = vpop.f32.mrf.mxu0
    %v1422 = vadd.f32 0.0, %v1421
    %1423 = vmatmul.f32.gmra.mxu0 %v924
    %v1424 = vpop.f32.mrf.mxu0
    %v1425 = vadd.f32 0.0, %v1424
    %1426 = vmatmul.f32.gmra.mxu0 %v927
    %v1427 = vpop.f32.mrf.mxu0
    %v1428 = vadd.f32 0.0, %v1427
    %1429 = vmatmul.f32.gmra.mxu0 %v930
    %v1430 = vpop.f32.mrf.mxu0
    %v1431 = vadd.f32 0.0, %v1430
    %1432 = vmatmul.f32.gmra.mxu0 %v1222
    %v1433 = vpop.f32.mrf.mxu0
    %v1434 = vadd.f32 0.0, %v1433
    %1435 = vmatmul.f32.gmra.mxu0 %v1225
    %v1436 = vpop.f32.mrf.mxu0
    %v1437 = vadd.f32 0.0, %v1436
    %1438 = vdwg.mxu0
    %v1439 = vld [vmem:[#allocation3] sm:$0xff]
    %v1440 = vld [vmem:[#allocation3 + $0x8] sm:$0xff]
    %v1441 = vld [vmem:[#allocation3 + $0x10] sm:$0xff]
    %v1442 = vld [vmem:[#allocation3 + $0x18] sm:$0xff]
    %v1443 = vld [vmem:[#allocation3 + $0x20] sm:$0xff]
    %v1444 = vld [vmem:[#allocation3 + $0x28] sm:$0xff]
    %v1445 = vld [vmem:[#allocation3 + $0x30] sm:$0xff]
    %v1446 = vld [vmem:[#allocation3 + $0x38] sm:$0xff]
    %v1447 = vld [vmem:[#allocation3 + $0x40] sm:$0xff]
    %v1448 = vld [vmem:[#allocation3 + $0x48] sm:$0xff]
    %v1449 = vld [vmem:[#allocation3 + $0x50] sm:$0xff]
    %v1450 = vld [vmem:[#allocation3 + $0x58] sm:$0xff]
    %v1451 = vld [vmem:[#allocation3 + $0x60] sm:$0xff]
    %v1452 = vld [vmem:[#allocation3 + $0x68] sm:$0xff]
    %v1453 = vld [vmem:[#allocation3 + $0x70] sm:$0xff]
    %v1454 = vld [vmem:[#allocation3 + $0x78] sm:$0xff]
    %v1455 = vld [vmem:[#allocation3 + $0x80] sm:$0xff]
    %v1456 = vld [vmem:[#allocation3 + $0x88] sm:$0xff]
    %v1457 = vld [vmem:[#allocation3 + $0x90] sm:$0xff]
    %v1458 = vld [vmem:[#allocation3 + $0x98] sm:$0xff]
    %v1459 = vld [vmem:[#allocation3 + $0xa0] sm:$0xff]
    %v1460 = vld [vmem:[#allocation3 + $0xa8] sm:$0xff]
    %v1461 = vld [vmem:[#allocation3 + $0xb0] sm:$0xff]
    %v1462 = vld [vmem:[#allocation3 + $0xb8] sm:$0xff]
    %v1463 = vld [vmem:[#allocation3 + $0xc0] sm:$0xff]
    %v1464 = vld [vmem:[#allocation3 + $0xc8] sm:$0xff]
    %v1465 = vld [vmem:[#allocation3 + $0xd0] sm:$0xff]
    %v1466 = vld [vmem:[#allocation3 + $0xd8] sm:$0xff]
    %v1467 = vld [vmem:[#allocation3 + $0xe0] sm:$0xff]
    %v1468 = vld [vmem:[#allocation3 + $0xe8] sm:$0xff]
    %v1469 = vld [vmem:[#allocation3 + $0xf0] sm:$0xff]
    %v1470 = vld [vmem:[#allocation3 + $0xf8] sm:$0xff]
    %v1471 = vld [vmem:[#allocation3 + $0x100] sm:$0xff]
    %v1472 = vld [vmem:[#allocation3 + $0x108] sm:$0xff]
    %v1473 = vld [vmem:[#allocation3 + $0x110] sm:$0xff]
    %v1474 = vld [vmem:[#allocation3 + $0x118] sm:$0xff]
    %v1475 = vld [vmem:[#allocation3 + $0x120] sm:$0xff]
    %v1476 = vld [vmem:[#allocation3 + $0x128] sm:$0xff]
    %v1477 = vld [vmem:[#allocation3 + $0x130] sm:$0xff]
    %v1478 = vld [vmem:[#allocation3 + $0x138] sm:$0xff]
    %v1479 = vld [vmem:[#allocation3 + $0x140] sm:$0xff]
    %v1480 = vld [vmem:[#allocation3 + $0x148] sm:$0xff]
    %v1481 = vld [vmem:[#allocation3 + $0x150] sm:$0xff]
    %v1482 = vld [vmem:[#allocation3 + $0x158] sm:$0xff]
    %v1483 = vld [vmem:[#allocation3 + $0x160] sm:$0xff]
    %v1484 = vld [vmem:[#allocation3 + $0x168] sm:$0xff]
    %v1485 = vld [vmem:[#allocation3 + $0x170] sm:$0xff]
    %v1486 = vld [vmem:[#allocation3 + $0x178] sm:$0xff]
    %v1487 = vld [vmem:[#allocation3 + $0x180] sm:$0xff]
    %v1488 = vld [vmem:[#allocation3 + $0x188] sm:$0xff]
    %v1489 = vld [vmem:[#allocation3 + $0x190] sm:$0xff]
    %v1490 = vld [vmem:[#allocation3 + $0x198] sm:$0xff]
    %v1491 = vld [vmem:[#allocation3 + $0x1a0] sm:$0xff]
    %v1492 = vld [vmem:[#allocation3 + $0x1a8] sm:$0xff]
    %v1493 = vld [vmem:[#allocation3 + $0x1b0] sm:$0xff]
    %v1494 = vld [vmem:[#allocation3 + $0x1b8] sm:$0xff]
    %v1495 = vld [vmem:[#allocation3 + $0x1c0] sm:$0xff]
    %v1496 = vld [vmem:[#allocation3 + $0x1c8] sm:$0xff]
    %v1497 = vld [vmem:[#allocation3 + $0x1d0] sm:$0xff]
    %v1498 = vld [vmem:[#allocation3 + $0x1d8] sm:$0xff]
    %v1499 = vld [vmem:[#allocation3 + $0x1e0] sm:$0xff]
    %v1500 = vld [vmem:[#allocation3 + $0x1e8] sm:$0xff]
    %v1501 = vld [vmem:[#allocation3 + $0x1f0] sm:$0xff]
    %v1502 = vld [vmem:[#allocation3 + $0x1f8] sm:$0xff]
    %v1503 = vadd.f32 %v1439, %v1248
    %v1504 = vadd.f32 %v1440, %v1251
    %v1505 = vadd.f32 %v1441, %v1254
    %v1506 = vadd.f32 %v1442, %v1257
    %v1507 = vadd.f32 %v1443, %v1260
    %v1508 = vadd.f32 %v1444, %v1263
    %v1509 = vadd.f32 %v1445, %v1266
    %v1510 = vadd.f32 %v1446, %v1269
    %v1511 = vadd.f32 %v1447, %v1272
    %v1512 = vadd.f32 %v1448, %v1275
    %v1513 = vadd.f32 %v1449, %v1278
    %v1514 = vadd.f32 %v1450, %v1281
    %v1515 = vadd.f32 %v1451, %v1284
    %v1516 = vadd.f32 %v1452, %v1287
    %v1517 = vadd.f32 %v1453, %v1290
    %v1518 = vadd.f32 %v1454, %v1293
    %v1519 = vadd.f32 %v1455, %v1296
    %v1520 = vadd.f32 %v1456, %v1299
    %v1521 = vadd.f32 %v1457, %v1302
    %v1522 = vadd.f32 %v1458, %v1305
    %v1523 = vadd.f32 %v1459, %v1308
    %v1524 = vadd.f32 %v1460, %v1311
    %v1525 = vadd.f32 %v1461, %v1314
    %v1526 = vadd.f32 %v1462, %v1317
    %v1527 = vadd.f32 %v1463, %v1320
    %v1528 = vadd.f32 %v1464, %v1323
    %v1529 = vadd.f32 %v1465, %v1326
    %v1530 = vadd.f32 %v1466, %v1329
    %v1531 = vadd.f32 %v1467, %v1332
    %v1532 = vadd.f32 %v1468, %v1335
    %v1533 = vadd.f32 %v1469, %v1338
    %v1534 = vadd.f32 %v1470, %v1341
    %v1535 = vadd.f32 %v1471, %v1344
    %v1536 = vadd.f32 %v1472, %v1347
    %v1537 = vadd.f32 %v1473, %v1350
    %v1538 = vadd.f32 %v1474, %v1353
    %v1539 = vadd.f32 %v1475, %v1356
    %v1540 = vadd.f32 %v1476, %v1359
    %v1541 = vadd.f32 %v1477, %v1362
    %v1542 = vadd.f32 %v1478, %v1365
    %v1543 = vadd.f32 %v1479, %v1368
    %v1544 = vadd.f32 %v1480, %v1371
    %v1545 = vadd.f32 %v1481, %v1374
    %v1546 = vadd.f32 %v1482, %v1377
    %v1547 = vadd.f32 %v1483, %v1380
    %v1548 = vadd.f32 %v1484, %v1383
    %v1549 = vadd.f32 %v1485, %v1386
    %v1550 = vadd.f32 %v1486, %v1389
    %v1551 = vadd.f32 %v1487, %v1392
    %v1552 = vadd.f32 %v1488, %v1395
    %v1553 = vadd.f32 %v1489, %v1398
    %v1554 = vadd.f32 %v1490, %v1401
    %v1555 = vadd.f32 %v1491, %v1404
    %v1556 = vadd.f32 %v1492, %v1407
    %v1557 = vadd.f32 %v1493, %v1410
    %v1558 = vadd.f32 %v1494, %v1413
    %v1559 = vadd.f32 %v1495, %v1416
    %v1560 = vadd.f32 %v1496, %v1419
    %v1561 = vadd.f32 %v1497, %v1422
    %v1562 = vadd.f32 %v1498, %v1425
    %v1563 = vadd.f32 %v1499, %v1428
    %v1564 = vadd.f32 %v1500, %v1431
    %v1565 = vadd.f32 %v1501, %v1434
    %v1566 = vadd.f32 %v1502, %v1437
    %1567 = vst [vmem:[#allocation3] sm:$0xff] %v1503
    %1568 = vst [vmem:[#allocation3 + $0x8] sm:$0xff] %v1504
    %1569 = vst [vmem:[#allocation3 + $0x10] sm:$0xff] %v1505
    %1570 = vst [vmem:[#allocation3 + $0x18] sm:$0xff] %v1506
    %1571 = vst [vmem:[#allocation3 + $0x20] sm:$0xff] %v1507
    %1572 = vst [vmem:[#allocation3 + $0x28] sm:$0xff] %v1508
    %1573 = vst [vmem:[#allocation3 + $0x30] sm:$0xff] %v1509
    %1574 = vst [vmem:[#allocation3 + $0x38] sm:$0xff] %v1510
    %1575 = vst [vmem:[#allocation3 + $0x40] sm:$0xff] %v1511
    %1576 = vst [vmem:[#allocation3 + $0x48] sm:$0xff] %v1512
    %1577 = vst [vmem:[#allocation3 + $0x50] sm:$0xff] %v1513
    %1578 = vst [vmem:[#allocation3 + $0x58] sm:$0xff] %v1514
    %1579 = vst [vmem:[#allocation3 + $0x60] sm:$0xff] %v1515
    %1580 = vst [vmem:[#allocation3 + $0x68] sm:$0xff] %v1516
    %1581 = vst [vmem:[#allocation3 + $0x70] sm:$0xff] %v1517
    %1582 = vst [vmem:[#allocation3 + $0x78] sm:$0xff] %v1518
    %1583 = vst [vmem:[#allocation3 + $0x80] sm:$0xff] %v1519
    %1584 = vst [vmem:[#allocation3 + $0x88] sm:$0xff] %v1520
    %1585 = vst [vmem:[#allocation3 + $0x90] sm:$0xff] %v1521
    %1586 = vst [vmem:[#allocation3 + $0x98] sm:$0xff] %v1522
    %1587 = vst [vmem:[#allocation3 + $0xa0] sm:$0xff] %v1523
    %1588 = vst [vmem:[#allocation3 + $0xa8] sm:$0xff] %v1524
    %1589 = vst [vmem:[#allocation3 + $0xb0] sm:$0xff] %v1525
    %1590 = vst [vmem:[#allocation3 + $0xb8] sm:$0xff] %v1526
    %1591 = vst [vmem:[#allocation3 + $0xc0] sm:$0xff] %v1527
    %1592 = vst [vmem:[#allocation3 + $0xc8] sm:$0xff] %v1528
    %1593 = vst [vmem:[#allocation3 + $0xd0] sm:$0xff] %v1529
    %1594 = vst [vmem:[#allocation3 + $0xd8] sm:$0xff] %v1530
    %1595 = vst [vmem:[#allocation3 + $0xe0] sm:$0xff] %v1531
    %1596 = vst [vmem:[#allocation3 + $0xe8] sm:$0xff] %v1532
    %1597 = vst [vmem:[#allocation3 + $0xf0] sm:$0xff] %v1533
    %1598 = vst [vmem:[#allocation3 + $0xf8] sm:$0xff] %v1534
    %1599 = vst [vmem:[#allocation3 + $0x100] sm:$0xff] %v1535
    %1600 = vst [vmem:[#allocation3 + $0x108] sm:$0xff] %v1536
    %1601 = vst [vmem:[#allocation3 + $0x110] sm:$0xff] %v1537
    %1602 = vst [vmem:[#allocation3 + $0x118] sm:$0xff] %v1538
    %1603 = vst [vmem:[#allocation3 + $0x120] sm:$0xff] %v1539
    %1604 = vst [vmem:[#allocation3 + $0x128] sm:$0xff] %v1540
    %1605 = vst [vmem:[#allocation3 + $0x130] sm:$0xff] %v1541
    %1606 = vst [vmem:[#allocation3 + $0x138] sm:$0xff] %v1542
    %1607 = vst [vmem:[#allocation3 + $0x140] sm:$0xff] %v1543
    %1608 = vst [vmem:[#allocation3 + $0x148] sm:$0xff] %v1544
    %1609 = vst [vmem:[#allocation3 + $0x150] sm:$0xff] %v1545
    %1610 = vst [vmem:[#allocation3 + $0x158] sm:$0xff] %v1546
    %1611 = vst [vmem:[#allocation3 + $0x160] sm:$0xff] %v1547
    %1612 = vst [vmem:[#allocation3 + $0x168] sm:$0xff] %v1548
    %1613 = vst [vmem:[#allocation3 + $0x170] sm:$0xff] %v1549
    %1614 = vst [vmem:[#allocation3 + $0x178] sm:$0xff] %v1550
    %1615 = vst [vmem:[#allocation3 + $0x180] sm:$0xff] %v1551
    %1616 = vst [vmem:[#allocation3 + $0x188] sm:$0xff] %v1552
    %1617 = vst [vmem:[#allocation3 + $0x190] sm:$0xff] %v1553
    %1618 = vst [vmem:[#allocation3 + $0x198] sm:$0xff] %v1554
    %1619 = vst [vmem:[#allocation3 + $0x1a0] sm:$0xff] %v1555
    %1620 = vst [vmem:[#allocation3 + $0x1a8] sm:$0xff] %v1556
    %1621 = vst [vmem:[#allocation3 + $0x1b0] sm:$0xff] %v1557
    %1622 = vst [vmem:[#allocation3 + $0x1b8] sm:$0xff] %v1558
    %1623 = vst [vmem:[#allocation3 + $0x1c0] sm:$0xff] %v1559
    %1624 = vst [vmem:[#allocation3 + $0x1c8] sm:$0xff] %v1560
    %1625 = vst [vmem:[#allocation3 + $0x1d0] sm:$0xff] %v1561
    %1626 = vst [vmem:[#allocation3 + $0x1d8] sm:$0xff] %v1562
    %1627 = vst [vmem:[#allocation3 + $0x1e0] sm:$0xff] %v1563
    %1628 = vst [vmem:[#allocation3 + $0x1e8] sm:$0xff] %v1564
    %1629 = vst [vmem:[#allocation3 + $0x1f0] sm:$0xff] %v1565
    %1630 = vst [vmem:[#allocation3 + $0x1f8] sm:$0xff] %v1566
    %s1631 = scalar_lea.vmem [#allocation4], 240
    %v1632 = vld [vmem:[%s1631] sm:$0xff]
    %v1633 = vld [vmem:[%s1631 + $0x8] sm:$0xff]
    %v1634 = vld [vmem:[%s1631 + $0x10] sm:$0xff]
    %v1635 = vld [vmem:[%s1631 + $0x18] sm:$0xff]
    %v1636 = vld [vmem:[%s1631 + $0x20] sm:$0xf]
    %v1638 = vsel %vm34, %v693, 0
    %v1641 = vsel %vm34, %v694, 0
    %v1644 = vsel %vm34, %v729, 0
    %v1647 = vsel %vm34, %v730, 0
    %v1650 = vsel %vm932, %v1636, 0
    %1652 = vmatpush.msra.mxu0 0.0
    %1653 = vmatpush.msra.mxu0 0.0
    %1654 = vmatpush.msra.mxu0 0.0
    %1655 = vmatpush.msra.mxu0 0.0
    %1656 = vmatpush.msra.mxu0 0.0
    %1657 = vmatpush.msra.mxu0 0.0
    %1658 = vmatpush.msra.mxu0 0.0
    %1659 = vmatpush.msra.mxu0 0.0
    %1660 = vmatpush.msra.mxu0 0.0
    %1661 = vmatpush.msra.mxu0 0.0
    %1662 = vmatpush.msra.mxu0 0.0
    %1663 = vmatpush.msra.mxu0 %v1650
    %1664 = vmatpush.msra.mxu0 %v1635
    %1665 = vmatpush.msra.mxu0 %v1634
    %1666 = vmatpush.msra.mxu0 %v1633
    %1667 = vmatpush.msra.mxu0 %v1632
    %1668 = vmatmul.f32.gmra.mxu0 %v753
    %v1669 = vpop.f32.mrf.mxu0
    %v1670 = vadd.f32 0.0, %v1669
    %1671 = vmatmul.f32.gmra.mxu0 %v756
    %v1672 = vpop.f32.mrf.mxu0
    %v1673 = vadd.f32 0.0, %v1672
    %1674 = vmatmul.f32.gmra.mxu0 %v759
    %v1675 = vpop.f32.mrf.mxu0
    %v1676 = vadd.f32 0.0, %v1675
    %1677 = vmatmul.f32.gmra.mxu0 %v762
    %v1678 = vpop.f32.mrf.mxu0
    %v1679 = vadd.f32 0.0, %v1678
    %1680 = vmatmul.f32.gmra.mxu0 %v765
    %v1681 = vpop.f32.mrf.mxu0
    %v1682 = vadd.f32 0.0, %v1681
    %1683 = vmatmul.f32.gmra.mxu0 %v768
    %v1684 = vpop.f32.mrf.mxu0
    %v1685 = vadd.f32 0.0, %v1684
    %1686 = vmatmul.f32.gmra.mxu0 %v771
    %v1687 = vpop.f32.mrf.mxu0
    %v1688 = vadd.f32 0.0, %v1687
    %1689 = vmatmul.f32.gmra.mxu0 %v774
    %v1690 = vpop.f32.mrf.mxu0
    %v1691 = vadd.f32 0.0, %v1690
    %1692 = vmatmul.f32.gmra.mxu0 %v777
    %v1693 = vpop.f32.mrf.mxu0
    %v1694 = vadd.f32 0.0, %v1693
    %1695 = vmatmul.f32.gmra.mxu0 %v780
    %v1696 = vpop.f32.mrf.mxu0
    %v1697 = vadd.f32 0.0, %v1696
    %1698 = vmatmul.f32.gmra.mxu0 %v783
    %v1699 = vpop.f32.mrf.mxu0
    %v1700 = vadd.f32 0.0, %v1699
    %1701 = vmatmul.f32.gmra.mxu0 %v786
    %v1702 = vpop.f32.mrf.mxu0
    %v1703 = vadd.f32 0.0, %v1702
    %1704 = vmatmul.f32.gmra.mxu0 %v789
    %v1705 = vpop.f32.mrf.mxu0
    %v1706 = vadd.f32 0.0, %v1705
    %1707 = vmatmul.f32.gmra.mxu0 %v792
    %v1708 = vpop.f32.mrf.mxu0
    %v1709 = vadd.f32 0.0, %v1708
    %1710 = vmatmul.f32.gmra.mxu0 %v795
    %v1711 = vpop.f32.mrf.mxu0
    %v1712 = vadd.f32 0.0, %v1711
    %1713 = vmatmul.f32.gmra.mxu0 %v798
    %v1714 = vpop.f32.mrf.mxu0
    %v1715 = vadd.f32 0.0, %v1714
    %1716 = vmatmul.f32.gmra.mxu0 %v801
    %v1717 = vpop.f32.mrf.mxu0
    %v1718 = vadd.f32 0.0, %v1717
    %1719 = vmatmul.f32.gmra.mxu0 %v804
    %v1720 = vpop.f32.mrf.mxu0
    %v1721 = vadd.f32 0.0, %v1720
    %1722 = vmatmul.f32.gmra.mxu0 %v807
    %v1723 = vpop.f32.mrf.mxu0
    %v1724 = vadd.f32 0.0, %v1723
    %1725 = vmatmul.f32.gmra.mxu0 %v810
    %v1726 = vpop.f32.mrf.mxu0
    %v1727 = vadd.f32 0.0, %v1726
    %1728 = vmatmul.f32.gmra.mxu0 %v813
    %v1729 = vpop.f32.mrf.mxu0
    %v1730 = vadd.f32 0.0, %v1729
    %1731 = vmatmul.f32.gmra.mxu0 %v816
    %v1732 = vpop.f32.mrf.mxu0
    %v1733 = vadd.f32 0.0, %v1732
    %1734 = vmatmul.f32.gmra.mxu0 %v819
    %v1735 = vpop.f32.mrf.mxu0
    %v1736 = vadd.f32 0.0, %v1735
    %1737 = vmatmul.f32.gmra.mxu0 %v822
    %v1738 = vpop.f32.mrf.mxu0
    %v1739 = vadd.f32 0.0, %v1738
    %1740 = vmatmul.f32.gmra.mxu0 %v825
    %v1741 = vpop.f32.mrf.mxu0
    %v1742 = vadd.f32 0.0, %v1741
    %1743 = vmatmul.f32.gmra.mxu0 %v828
    %v1744 = vpop.f32.mrf.mxu0
    %v1745 = vadd.f32 0.0, %v1744
    %1746 = vmatmul.f32.gmra.mxu0 %v831
    %v1747 = vpop.f32.mrf.mxu0
    %v1748 = vadd.f32 0.0, %v1747
    %1749 = vmatmul.f32.gmra.mxu0 %v834
    %v1750 = vpop.f32.mrf.mxu0
    %v1751 = vadd.f32 0.0, %v1750
    %1752 = vmatmul.f32.gmra.mxu0 %v1216
    %v1753 = vpop.f32.mrf.mxu0
    %v1754 = vadd.f32 0.0, %v1753
    %1755 = vmatmul.f32.gmra.mxu0 %v1219
    %v1756 = vpop.f32.mrf.mxu0
    %v1757 = vadd.f32 0.0, %v1756
    %1758 = vmatmul.f32.gmra.mxu0 %v1638
    %v1759 = vpop.f32.mrf.mxu0
    %v1760 = vadd.f32 0.0, %v1759
    %1761 = vmatmul.f32.gmra.mxu0 %v1641
    %v1762 = vpop.f32.mrf.mxu0
    %v1763 = vadd.f32 0.0, %v1762
    %1764 = vmatmul.f32.gmra.mxu0 %v849
    %v1765 = vpop.f32.mrf.mxu0
    %v1766 = vadd.f32 0.0, %v1765
    %1767 = vmatmul.f32.gmra.mxu0 %v852
    %v1768 = vpop.f32.mrf.mxu0
    %v1769 = vadd.f32 0.0, %v1768
    %1770 = vmatmul.f32.gmra.mxu0 %v855
    %v1771 = vpop.f32.mrf.mxu0
    %v1772 = vadd.f32 0.0, %v1771
    %1773 = vmatmul.f32.gmra.mxu0 %v858
    %v1774 = vpop.f32.mrf.mxu0
    %v1775 = vadd.f32 0.0, %v1774
    %1776 = vmatmul.f32.gmra.mxu0 %v861
    %v1777 = vpop.f32.mrf.mxu0
    %v1778 = vadd.f32 0.0, %v1777
    %1779 = vmatmul.f32.gmra.mxu0 %v864
    %v1780 = vpop.f32.mrf.mxu0
    %v1781 = vadd.f32 0.0, %v1780
    %1782 = vmatmul.f32.gmra.mxu0 %v867
    %v1783 = vpop.f32.mrf.mxu0
    %v1784 = vadd.f32 0.0, %v1783
    %1785 = vmatmul.f32.gmra.mxu0 %v870
    %v1786 = vpop.f32.mrf.mxu0
    %v1787 = vadd.f32 0.0, %v1786
    %1788 = vmatmul.f32.gmra.mxu0 %v873
    %v1789 = vpop.f32.mrf.mxu0
    %v1790 = vadd.f32 0.0, %v1789
    %1791 = vmatmul.f32.gmra.mxu0 %v876
    %v1792 = vpop.f32.mrf.mxu0
    %v1793 = vadd.f32 0.0, %v1792
    %1794 = vmatmul.f32.gmra.mxu0 %v879
    %v1795 = vpop.f32.mrf.mxu0
    %v1796 = vadd.f32 0.0, %v1795
    %1797 = vmatmul.f32.gmra.mxu0 %v882
    %v1798 = vpop.f32.mrf.mxu0
    %v1799 = vadd.f32 0.0, %v1798
    %1800 = vmatmul.f32.gmra.mxu0 %v885
    %v1801 = vpop.f32.mrf.mxu0
    %v1802 = vadd.f32 0.0, %v1801
    %1803 = vmatmul.f32.gmra.mxu0 %v888
    %v1804 = vpop.f32.mrf.mxu0
    %v1805 = vadd.f32 0.0, %v1804
    %1806 = vmatmul.f32.gmra.mxu0 %v891
    %v1807 = vpop.f32.mrf.mxu0
    %v1808 = vadd.f32 0.0, %v1807
    %1809 = vmatmul.f32.gmra.mxu0 %v894
    %v1810 = vpop.f32.mrf.mxu0
    %v1811 = vadd.f32 0.0, %v1810
    %1812 = vmatmul.f32.gmra.mxu0 %v897
    %v1813 = vpop.f32.mrf.mxu0
    %v1814 = vadd.f32 0.0, %v1813
    %1815 = vmatmul.f32.gmra.mxu0 %v900
    %v1816 = vpop.f32.mrf.mxu0
    %v1817 = vadd.f32 0.0, %v1816
    %1818 = vmatmul.f32.gmra.mxu0 %v903
    %v1819 = vpop.f32.mrf.mxu0
    %v1820 = vadd.f32 0.0, %v1819
    %1821 = vmatmul.f32.gmra.mxu0 %v906
    %v1822 = vpop.f32.mrf.mxu0
    %v1823 = vadd.f32 0.0, %v1822
    %1824 = vmatmul.f32.gmra.mxu0 %v909
    %v1825 = vpop.f32.mrf.mxu0
    %v1826 = vadd.f32 0.0, %v1825
    %1827 = vmatmul.f32.gmra.mxu0 %v912
    %v1828 = vpop.f32.mrf.mxu0
    %v1829 = vadd.f32 0.0, %v1828
    %1830 = vmatmul.f32.gmra.mxu0 %v915
    %v1831 = vpop.f32.mrf.mxu0
    %v1832 = vadd.f32 0.0, %v1831
    %1833 = vmatmul.f32.gmra.mxu0 %v918
    %v1834 = vpop.f32.mrf.mxu0
    %v1835 = vadd.f32 0.0, %v1834
    %1836 = vmatmul.f32.gmra.mxu0 %v921
    %v1837 = vpop.f32.mrf.mxu0
    %v1838 = vadd.f32 0.0, %v1837
    %1839 = vmatmul.f32.gmra.mxu0 %v924
    %v1840 = vpop.f32.mrf.mxu0
    %v1841 = vadd.f32 0.0, %v1840
    %1842 = vmatmul.f32.gmra.mxu0 %v927
    %v1843 = vpop.f32.mrf.mxu0
    %v1844 = vadd.f32 0.0, %v1843
    %1845 = vmatmul.f32.gmra.mxu0 %v930
    %v1846 = vpop.f32.mrf.mxu0
    %v1847 = vadd.f32 0.0, %v1846
    %1848 = vmatmul.f32.gmra.mxu0 %v1222
    %v1849 = vpop.f32.mrf.mxu0
    %v1850 = vadd.f32 0.0, %v1849
    %1851 = vmatmul.f32.gmra.mxu0 %v1225
    %v1852 = vpop.f32.mrf.mxu0
    %v1853 = vadd.f32 0.0, %v1852
    %1854 = vmatmul.f32.gmra.mxu0 %v1644
    %v1855 = vpop.f32.mrf.mxu0
    %v1856 = vadd.f32 0.0, %v1855
    %1857 = vmatmul.f32.gmra.mxu0 %v1647
    %v1858 = vpop.f32.mrf.mxu0
    %v1859 = vadd.f32 0.0, %v1858
    %1860 = vdwg.mxu0
    %v1861 = vld [vmem:[#allocation3] sm:$0xff]
    %v1862 = vld [vmem:[#allocation3 + $0x8] sm:$0xff]
    %v1863 = vld [vmem:[#allocation3 + $0x10] sm:$0xff]
    %v1864 = vld [vmem:[#allocation3 + $0x18] sm:$0xff]
    %v1865 = vld [vmem:[#allocation3 + $0x20] sm:$0xff]
    %v1866 = vld [vmem:[#allocation3 + $0x28] sm:$0xff]
    %v1867 = vld [vmem:[#allocation3 + $0x30] sm:$0xff]
    %v1868 = vld [vmem:[#allocation3 + $0x38] sm:$0xff]
    %v1869 = vld [vmem:[#allocation3 + $0x40] sm:$0xff]
    %v1870 = vld [vmem:[#allocation3 + $0x48] sm:$0xff]
    %v1871 = vld [vmem:[#allocation3 + $0x50] sm:$0xff]
    %v1872 = vld [vmem:[#allocation3 + $0x58] sm:$0xff]
    %v1873 = vld [vmem:[#allocation3 + $0x60] sm:$0xff]
    %v1874 = vld [vmem:[#allocation3 + $0x68] sm:$0xff]
    %v1875 = vld [vmem:[#allocation3 + $0x70] sm:$0xff]
    %v1876 = vld [vmem:[#allocation3 + $0x78] sm:$0xff]
    %v1877 = vld [vmem:[#allocation3 + $0x80] sm:$0xff]
    %v1878 = vld [vmem:[#allocation3 + $0x88] sm:$0xff]
    %v1879 = vld [vmem:[#allocation3 + $0x90] sm:$0xff]
    %v1880 = vld [vmem:[#allocation3 + $0x98] sm:$0xff]
    %v1881 = vld [vmem:[#allocation3 + $0xa0] sm:$0xff]
    %v1882 = vld [vmem:[#allocation3 + $0xa8] sm:$0xff]
    %v1883 = vld [vmem:[#allocation3 + $0xb0] sm:$0xff]
    %v1884 = vld [vmem:[#allocation3 + $0xb8] sm:$0xff]
    %v1885 = vld [vmem:[#allocation3 + $0xc0] sm:$0xff]
    %v1886 = vld [vmem:[#allocation3 + $0xc8] sm:$0xff]
    %v1887 = vld [vmem:[#allocation3 + $0xd0] sm:$0xff]
    %v1888 = vld [vmem:[#allocation3 + $0xd8] sm:$0xff]
    %v1889 = vld [vmem:[#allocation3 + $0xe0] sm:$0xff]
    %v1890 = vld [vmem:[#allocation3 + $0xe8] sm:$0xff]
    %v1891 = vld [vmem:[#allocation3 + $0xf0] sm:$0xff]
    %v1892 = vld [vmem:[#allocation3 + $0xf8] sm:$0xff]
    %v1893 = vld [vmem:[#allocation3 + $0x100] sm:$0xff]
    %v1894 = vld [vmem:[#allocation3 + $0x108] sm:$0xff]
    %v1895 = vld [vmem:[#allocation3 + $0x110] sm:$0xff]
    %v1896 = vld [vmem:[#allocation3 + $0x118] sm:$0xff]
    %v1897 = vld [vmem:[#allocation3 + $0x120] sm:$0xff]
    %v1898 = vld [vmem:[#allocation3 + $0x128] sm:$0xff]
    %v1899 = vld [vmem:[#allocation3 + $0x130] sm:$0xff]
    %v1900 = vld [vmem:[#allocation3 + $0x138] sm:$0xff]
    %v1901 = vld [vmem:[#allocation3 + $0x140] sm:$0xff]
    %v1902 = vld [vmem:[#allocation3 + $0x148] sm:$0xff]
    %v1903 = vld [vmem:[#allocation3 + $0x150] sm:$0xff]
    %v1904 = vld [vmem:[#allocation3 + $0x158] sm:$0xff]
    %v1905 = vld [vmem:[#allocation3 + $0x160] sm:$0xff]
    %v1906 = vld [vmem:[#allocation3 + $0x168] sm:$0xff]
    %v1907 = vld [vmem:[#allocation3 + $0x170] sm:$0xff]
    %v1908 = vld [vmem:[#allocation3 + $0x178] sm:$0xff]
    %v1909 = vld [vmem:[#allocation3 + $0x180] sm:$0xff]
    %v1910 = vld [vmem:[#allocation3 + $0x188] sm:$0xff]
    %v1911 = vld [vmem:[#allocation3 + $0x190] sm:$0xff]
    %v1912 = vld [vmem:[#allocation3 + $0x198] sm:$0xff]
    %v1913 = vld [vmem:[#allocation3 + $0x1a0] sm:$0xff]
    %v1914 = vld [vmem:[#allocation3 + $0x1a8] sm:$0xff]
    %v1915 = vld [vmem:[#allocation3 + $0x1b0] sm:$0xff]
    %v1916 = vld [vmem:[#allocation3 + $0x1b8] sm:$0xff]
    %v1917 = vld [vmem:[#allocation3 + $0x1c0] sm:$0xff]
    %v1918 = vld [vmem:[#allocation3 + $0x1c8] sm:$0xff]
    %v1919 = vld [vmem:[#allocation3 + $0x1d0] sm:$0xff]
    %v1920 = vld [vmem:[#allocation3 + $0x1d8] sm:$0xff]
    %v1921 = vld [vmem:[#allocation3 + $0x1e0] sm:$0xff]
    %v1922 = vld [vmem:[#allocation3 + $0x1e8] sm:$0xff]
    %v1923 = vld [vmem:[#allocation3 + $0x1f0] sm:$0xff]
    %v1924 = vld [vmem:[#allocation3 + $0x1f8] sm:$0xff]
    %v1925 = vadd.f32 %v1861, %v1670
    %v1926 = vadd.f32 %v1862, %v1673
    %v1927 = vadd.f32 %v1863, %v1676
    %v1928 = vadd.f32 %v1864, %v1679
    %v1929 = vadd.f32 %v1865, %v1682
    %v1930 = vadd.f32 %v1866, %v1685
    %v1931 = vadd.f32 %v1867, %v1688
    %v1932 = vadd.f32 %v1868, %v1691
    %v1933 = vadd.f32 %v1869, %v1694
    %v1934 = vadd.f32 %v1870, %v1697
    %v1935 = vadd.f32 %v1871, %v1700
    %v1936 = vadd.f32 %v1872, %v1703
    %v1937 = vadd.f32 %v1873, %v1706
    %v1938 = vadd.f32 %v1874, %v1709
    %v1939 = vadd.f32 %v1875, %v1712
    %v1940 = vadd.f32 %v1876, %v1715
    %v1941 = vadd.f32 %v1877, %v1718
    %v1942 = vadd.f32 %v1878, %v1721
    %v1943 = vadd.f32 %v1879, %v1724
    %v1944 = vadd.f32 %v1880, %v1727
    %v1945 = vadd.f32 %v1881, %v1730
    %v1946 = vadd.f32 %v1882, %v1733
    %v1947 = vadd.f32 %v1883, %v1736
    %v1948 = vadd.f32 %v1884, %v1739
    %v1949 = vadd.f32 %v1885, %v1742
    %v1950 = vadd.f32 %v1886, %v1745
    %v1951 = vadd.f32 %v1887, %v1748
    %v1952 = vadd.f32 %v1888, %v1751
    %v1953 = vadd.f32 %v1889, %v1754
    %v1954 = vadd.f32 %v1890, %v1757
    %v1955 = vadd.f32 %v1891, %v1760
    %v1956 = vadd.f32 %v1892, %v1763
    %v1957 = vadd.f32 %v1893, %v1766
    %v1958 = vadd.f32 %v1894, %v1769
    %v1959 = vadd.f32 %v1895, %v1772
    %v1960 = vadd.f32 %v1896, %v1775
    %v1961 = vadd.f32 %v1897, %v1778
    %v1962 = vadd.f32 %v1898, %v1781
    %v1963 = vadd.f32 %v1899, %v1784
    %v1964 = vadd.f32 %v1900, %v1787
    %v1965 = vadd.f32 %v1901, %v1790
    %v1966 = vadd.f32 %v1902, %v1793
    %v1967 = vadd.f32 %v1903, %v1796
    %v1968 = vadd.f32 %v1904, %v1799
    %v1969 = vadd.f32 %v1905, %v1802
    %v1970 = vadd.f32 %v1906, %v1805
    %v1971 = vadd.f32 %v1907, %v1808
    %v1972 = vadd.f32 %v1908, %v1811
    %v1973 = vadd.f32 %v1909, %v1814
    %v1974 = vadd.f32 %v1910, %v1817
    %v1975 = vadd.f32 %v1911, %v1820
    %v1976 = vadd.f32 %v1912, %v1823
    %v1977 = vadd.f32 %v1913, %v1826
    %v1978 = vadd.f32 %v1914, %v1829
    %v1979 = vadd.f32 %v1915, %v1832
    %v1980 = vadd.f32 %v1916, %v1835
    %v1981 = vadd.f32 %v1917, %v1838
    %v1982 = vadd.f32 %v1918, %v1841
    %v1983 = vadd.f32 %v1919, %v1844
    %v1984 = vadd.f32 %v1920, %v1847
    %v1985 = vadd.f32 %v1921, %v1850
    %v1986 = vadd.f32 %v1922, %v1853
    %v1987 = vadd.f32 %v1923, %v1856
    %v1988 = vadd.f32 %v1924, %v1859
    %1989 = vst [vmem:[#allocation3] sm:$0xff] %v1925
    %1990 = vst [vmem:[#allocation3 + $0x8] sm:$0xff] %v1926
    %1991 = vst [vmem:[#allocation3 + $0x10] sm:$0xff] %v1927
    %1992 = vst [vmem:[#allocation3 + $0x18] sm:$0xff] %v1928
    %1993 = vst [vmem:[#allocation3 + $0x20] sm:$0xff] %v1929
    %1994 = vst [vmem:[#allocation3 + $0x28] sm:$0xff] %v1930
    %1995 = vst [vmem:[#allocation3 + $0x30] sm:$0xff] %v1931
    %1996 = vst [vmem:[#allocation3 + $0x38] sm:$0xff] %v1932
    %1997 = vst [vmem:[#allocation3 + $0x40] sm:$0xff] %v1933
    %1998 = vst [vmem:[#allocation3 + $0x48] sm:$0xff] %v1934
    %1999 = vst [vmem:[#allocation3 + $0x50] sm:$0xff] %v1935
    %2000 = vst [vmem:[#allocation3 + $0x58] sm:$0xff] %v1936
    %2001 = vst [vmem:[#allocation3 + $0x60] sm:$0xff] %v1937
    %2002 = vst [vmem:[#allocation3 + $0x68] sm:$0xff] %v1938
    %2003 = vst [vmem:[#allocation3 + $0x70] sm:$0xff] %v1939
    %2004 = vst [vmem:[#allocation3 + $0x78] sm:$0xff] %v1940
    %2005 = vst [vmem:[#allocation3 + $0x80] sm:$0xff] %v1941
    %2006 = vst [vmem:[#allocation3 + $0x88] sm:$0xff] %v1942
    %2007 = vst [vmem:[#allocation3 + $0x90] sm:$0xff] %v1943
    %2008 = vst [vmem:[#allocation3 + $0x98] sm:$0xff] %v1944
    %2009 = vst [vmem:[#allocation3 + $0xa0] sm:$0xff] %v1945
    %2010 = vst [vmem:[#allocation3 + $0xa8] sm:$0xff] %v1946
    %2011 = vst [vmem:[#allocation3 + $0xb0] sm:$0xff] %v1947
    %2012 = vst [vmem:[#allocation3 + $0xb8] sm:$0xff] %v1948
    %2013 = vst [vmem:[#allocation3 + $0xc0] sm:$0xff] %v1949
    %2014 = vst [vmem:[#allocation3 + $0xc8] sm:$0xff] %v1950
    %2015 = vst [vmem:[#allocation3 + $0xd0] sm:$0xff] %v1951
    %2016 = vst [vmem:[#allocation3 + $0xd8] sm:$0xff] %v1952
    %2017 = vst [vmem:[#allocation3 + $0xe0] sm:$0xff] %v1953
    %2018 = vst [vmem:[#allocation3 + $0xe8] sm:$0xff] %v1954
    %2019 = vst [vmem:[#allocation3 + $0xf0] sm:$0xff] %v1955
    %2020 = vst [vmem:[#allocation3 + $0xf8] sm:$0xff] %v1956
    %2021 = vst [vmem:[#allocation3 + $0x100] sm:$0xff] %v1957
    %2022 = vst [vmem:[#allocation3 + $0x108] sm:$0xff] %v1958
    %2023 = vst [vmem:[#allocation3 + $0x110] sm:$0xff] %v1959
    %2024 = vst [vmem:[#allocation3 + $0x118] sm:$0xff] %v1960
    %2025 = vst [vmem:[#allocation3 + $0x120] sm:$0xff] %v1961
    %2026 = vst [vmem:[#allocation3 + $0x128] sm:$0xff] %v1962
    %2027 = vst [vmem:[#allocation3 + $0x130] sm:$0xff] %v1963
    %2028 = vst [vmem:[#allocation3 + $0x138] sm:$0xff] %v1964
    %2029 = vst [vmem:[#allocation3 + $0x140] sm:$0xff] %v1965
    %2030 = vst [vmem:[#allocation3 + $0x148] sm:$0xff] %v1966
    %2031 = vst [vmem:[#allocation3 + $0x150] sm:$0xff] %v1967
    %2032 = vst [vmem:[#allocation3 + $0x158] sm:$0xff] %v1968
    %2033 = vst [vmem:[#allocation3 + $0x160] sm:$0xff] %v1969
    %2034 = vst [vmem:[#allocation3 + $0x168] sm:$0xff] %v1970
    %2035 = vst [vmem:[#allocation3 + $0x170] sm:$0xff] %v1971
    %2036 = vst [vmem:[#allocation3 + $0x178] sm:$0xff] %v1972
    %2037 = vst [vmem:[#allocation3 + $0x180] sm:$0xff] %v1973
    %2038 = vst [vmem:[#allocation3 + $0x188] sm:$0xff] %v1974
    %2039 = vst [vmem:[#allocation3 + $0x190] sm:$0xff] %v1975
    %2040 = vst [vmem:[#allocation3 + $0x198] sm:$0xff] %v1976
    %2041 = vst [vmem:[#allocation3 + $0x1a0] sm:$0xff] %v1977
    %2042 = vst [vmem:[#allocation3 + $0x1a8] sm:$0xff] %v1978
    %2043 = vst [vmem:[#allocation3 + $0x1b0] sm:$0xff] %v1979
    %2044 = vst [vmem:[#allocation3 + $0x1b8] sm:$0xff] %v1980
    %2045 = vst [vmem:[#allocation3 + $0x1c0] sm:$0xff] %v1981
    %2046 = vst [vmem:[#allocation3 + $0x1c8] sm:$0xff] %v1982
    %2047 = vst [vmem:[#allocation3 + $0x1d0] sm:$0xff] %v1983
    %2048 = vst [vmem:[#allocation3 + $0x1d8] sm:$0xff] %v1984
    %2049 = vst [vmem:[#allocation3 + $0x1e0] sm:$0xff] %v1985
    %2050 = vst [vmem:[#allocation3 + $0x1e8] sm:$0xff] %v1986
    %2051 = vst [vmem:[#allocation3 + $0x1f0] sm:$0xff] %v1987
    %2052 = vst [vmem:[#allocation3 + $0x1f8] sm:$0xff] %v1988
    %v2053 = vld [vmem:[#allocation2 + $0x1] sm:$0xff]
    %v2054 = vld [vmem:[#allocation2 + $0x9] sm:$0xff]
    %v2055 = vld [vmem:[#allocation2 + $0x19] sm:$0xff]
    %v2056 = vld [vmem:[#allocation2 + $0x21] sm:$0xff]
    %v2057 = vld [vmem:[#allocation2 + $0x31] sm:$0xff]
    %v2058 = vld [vmem:[#allocation2 + $0x39] sm:$0xff]
    %v2059 = vld [vmem:[#allocation2 + $0x49] sm:$0xff]
    %v2060 = vld [vmem:[#allocation2 + $0x51] sm:$0xff]
    %v2061 = vld [vmem:[#allocation2 + $0x61] sm:$0xff]
    %v2062 = vld [vmem:[#allocation2 + $0x69] sm:$0xff]
    %v2063 = vld [vmem:[#allocation2 + $0x79] sm:$0xff]
    %v2064 = vld [vmem:[#allocation2 + $0x81] sm:$0xff]
    %v2065 = vld [vmem:[#allocation2 + $0x91] sm:$0xff]
    %v2066 = vld [vmem:[#allocation2 + $0x99] sm:$0xff]
    %v2067 = vld [vmem:[#allocation2 + $0xa9] sm:$0xff]
    %v2068 = vld [vmem:[#allocation2 + $0xb1] sm:$0xff]
    %v2069 = vld [vmem:[#allocation2 + $0xc1] sm:$0xff]
    %v2070 = vld [vmem:[#allocation2 + $0xc9] sm:$0xff]
    %v2071 = vld [vmem:[#allocation2 + $0xd9] sm:$0xff]
    %v2072 = vld [vmem:[#allocation2 + $0xe1] sm:$0xff]
    %v2073 = vld [vmem:[#allocation2 + $0xf1] sm:$0xff]
    %v2074 = vld [vmem:[#allocation2 + $0xf9] sm:$0xff]
    %v2075 = vld [vmem:[#allocation2 + $0x109] sm:$0xff]
    %v2076 = vld [vmem:[#allocation2 + $0x111] sm:$0xff]
    %v2077 = vld [vmem:[#allocation2 + $0x121] sm:$0xff]
    %v2078 = vld [vmem:[#allocation2 + $0x129] sm:$0xff]
    %v2079 = vld [vmem:[#allocation2 + $0x139] sm:$0xff]
    %v2080 = vld [vmem:[#allocation2 + $0x141] sm:$0xff]
    %v2081 = vld [vmem:[#allocation2 + $0x151] sm:$0xff]
    %v2082 = vld [vmem:[#allocation2 + $0x159] sm:$0xff]
    %v2083 = vld [vmem:[#allocation2 + $0x169] sm:$0xff]
    %v2084 = vld [vmem:[#allocation2 + $0x171] sm:$0xff]
    %v2085 = vld [vmem:[#allocation2 + $0x181] sm:$0xff]
    %v2086 = vld [vmem:[#allocation2 + $0x189] sm:$0xff]
    %v2087 = vld [vmem:[#allocation2 + $0x199] sm:$0xff]
    %v2088 = vld [vmem:[#allocation2 + $0x1a1] sm:$0xff]
    %v2089 = vld [vmem:[#allocation2 + $0x1b1] sm:$0xff]
    %v2090 = vld [vmem:[#allocation2 + $0x1b9] sm:$0xff]
    %v2091 = vld [vmem:[#allocation2 + $0x1c9] sm:$0xff]
    %v2092 = vld [vmem:[#allocation2 + $0x1d1] sm:$0xff]
    %v2093 = vld [vmem:[#allocation2 + $0x1e1] sm:$0xff]
    %v2094 = vld [vmem:[#allocation2 + $0x1e9] sm:$0xff]
    %v2095 = vld [vmem:[#allocation2 + $0x1f9] sm:$0xff]
    %v2096 = vld [vmem:[#allocation2 + $0x201] sm:$0xff]
    %v2097 = vld [vmem:[#allocation2 + $0x211] sm:$0xff]
    %v2098 = vld [vmem:[#allocation2 + $0x219] sm:$0xff]
    %v2099 = vld [vmem:[#allocation2 + $0x229] sm:$0xff]
    %v2100 = vld [vmem:[#allocation2 + $0x231] sm:$0xff]
    %v2101 = vld [vmem:[#allocation2 + $0x241] sm:$0xff]
    %v2102 = vld [vmem:[#allocation2 + $0x249] sm:$0xff]
    %v2103 = vld [vmem:[#allocation2 + $0x259] sm:$0xff]
    %v2104 = vld [vmem:[#allocation2 + $0x261] sm:$0xff]
    %v2105 = vld [vmem:[#allocation2 + $0x271] sm:$0xff]
    %v2106 = vld [vmem:[#allocation2 + $0x279] sm:$0xff]
    %v2107 = vld [vmem:[#allocation2 + $0x289] sm:$0xff]
    %v2108 = vld [vmem:[#allocation2 + $0x291] sm:$0xff]
    %v2109 = vld [vmem:[#allocation2 + $0x2a1] sm:$0xff]
    %v2110 = vld [vmem:[#allocation2 + $0x2a9] sm:$0xff]
    %v2111 = vld [vmem:[#allocation2 + $0x2b9] sm:$0xff]
    %v2112 = vld [vmem:[#allocation2 + $0x2c1] sm:$0xff]
    %v2113 = vld [vmem:[#allocation2 + $0x2d1] sm:$0xff]
    %v2114 = vld [vmem:[#allocation2 + $0x2d9] sm:$0xff]
    %v2115 = vld [vmem:[#allocation2 + $0x2e9] sm:$0xff]
    %v2116 = vld [vmem:[#allocation2 + $0x2f1] sm:$0xff]
    %v2117 = vld [vmem:[#allocation2 + $0x301] sm:$0xff]
    %v2118 = vld [vmem:[#allocation2 + $0x309] sm:$0xff]
    %v2119 = vld [vmem:[#allocation2 + $0x319] sm:$0xff]
    %v2120 = vld [vmem:[#allocation2 + $0x321] sm:$0xff]
    %v2121 = vld [vmem:[#allocation2 + $0x331] sm:$0xff]
    %v2122 = vld [vmem:[#allocation2 + $0x339] sm:$0xff]
    %v2123 = vld [vmem:[#allocation2 + $0x349] sm:$0xff]
    %v2124 = vld [vmem:[#allocation2 + $0x351] sm:$0xff]
    %s2125 = scalar_lea.vmem [#allocation4], 40
    %v2126 = vld [vmem:[%s2125] sm:$0xff]
    %v2127 = vld [vmem:[%s2125 + $0x8] sm:$0xff]
    %v2128 = vld [vmem:[%s2125 + $0x10] sm:$0xff]
    %v2129 = vld [vmem:[%s2125 + $0x18] sm:$0xff]
    %v2130 = vld [vmem:[%s2125 + $0x20] sm:$0xf]
    %v2132 = vsel %vm34, %v2053, 0
    %v2135 = vsel %vm34, %v2054, 0
    %v2138 = vsel %vm34, %v2055, 0
    %v2141 = vsel %vm34, %v2056, 0
    %v2144 = vsel %vm34, %v2057, 0
    %v2147 = vsel %vm34, %v2058, 0
    %v2150 = vsel %vm34, %v2059, 0
    %v2153 = vsel %vm34, %v2060, 0
    %v2156 = vsel %vm34, %v2061, 0
    %v2159 = vsel %vm34, %v2062, 0
    %v2162 = vsel %vm34, %v2063, 0
    %v2165 = vsel %vm34, %v2064, 0
    %v2168 = vsel %vm34, %v2065, 0
    %v2171 = vsel %vm34, %v2066, 0
    %v2174 = vsel %vm34, %v2067, 0
    %v2177 = vsel %vm34, %v2068, 0
    %v2180 = vsel %vm34, %v2069, 0
    %v2183 = vsel %vm34, %v2070, 0
    %v2186 = vsel %vm34, %v2071, 0
    %v2189 = vsel %vm34, %v2072, 0
    %v2192 = vsel %vm34, %v2073, 0
    %v2195 = vsel %vm34, %v2074, 0
    %v2198 = vsel %vm34, %v2075, 0
    %v2201 = vsel %vm34, %v2076, 0
    %v2204 = vsel %vm34, %v2077, 0
    %v2207 = vsel %vm34, %v2078, 0
    %v2210 = vsel %vm34, %v2079, 0
    %v2213 = vsel %vm34, %v2080, 0
    %v2216 = vsel %vm34, %v2081, 0
    %v2219 = vsel %vm34, %v2082, 0
    %v2222 = vsel %vm34, %v2083, 0
    %v2225 = vsel %vm34, %v2084, 0
    %v2228 = vsel %vm34, %v2089, 0
    %v2231 = vsel %vm34, %v2090, 0
    %v2234 = vsel %vm34, %v2091, 0
    %v2237 = vsel %vm34, %v2092, 0
    %v2240 = vsel %vm34, %v2093, 0
    %v2243 = vsel %vm34, %v2094, 0
    %v2246 = vsel %vm34, %v2095, 0
    %v2249 = vsel %vm34, %v2096, 0
    %v2252 = vsel %vm34, %v2097, 0
    %v2255 = vsel %vm34, %v2098, 0
    %v2258 = vsel %vm34, %v2099, 0
    %v2261 = vsel %vm34, %v2100, 0
    %v2264 = vsel %vm34, %v2101, 0
    %v2267 = vsel %vm34, %v2102, 0
    %v2270 = vsel %vm34, %v2103, 0
    %v2273 = vsel %vm34, %v2104, 0
    %v2276 = vsel %vm34, %v2105, 0
    %v2279 = vsel %vm34, %v2106, 0
    %v2282 = vsel %vm34, %v2107, 0
    %v2285 = vsel %vm34, %v2108, 0
    %v2288 = vsel %vm34, %v2109, 0
    %v2291 = vsel %vm34, %v2110, 0
    %v2294 = vsel %vm34, %v2111, 0
    %v2297 = vsel %vm34, %v2112, 0
    %v2300 = vsel %vm34, %v2113, 0
    %v2303 = vsel %vm34, %v2114, 0
    %v2306 = vsel %vm34, %v2115, 0
    %v2309 = vsel %vm34, %v2116, 0
    %v2312 = vsel %vm34, %v2117, 0
    %v2315 = vsel %vm34, %v2118, 0
    %v2318 = vsel %vm34, %v2119, 0
    %v2321 = vsel %vm34, %v2120, 0
    %v2324 = vsel %vm932, %v2130, 0
    %2326 = vmatpush.msra.mxu0 0.0
    %2327 = vmatpush.msra.mxu0 0.0
    %2328 = vmatpush.msra.mxu0 0.0
    %2329 = vmatpush.msra.mxu0 0.0
    %2330 = vmatpush.msra.mxu0 0.0
    %2331 = vmatpush.msra.mxu0 0.0
    %2332 = vmatpush.msra.mxu0 0.0
    %2333 = vmatpush.msra.mxu0 0.0
    %2334 = vmatpush.msra.mxu0 0.0
    %2335 = vmatpush.msra.mxu0 0.0
    %2336 = vmatpush.msra.mxu0 0.0
    %2337 = vmatpush.msra.mxu0 %v2324
    %2338 = vmatpush.msra.mxu0 %v2129
    %2339 = vmatpush.msra.mxu0 %v2128
    %2340 = vmatpush.msra.mxu0 %v2127
    %2341 = vmatpush.msra.mxu0 %v2126
    %2342 = vmatmul.f32.gmra.mxu0 %v2132
    %v2343 = vpop.f32.mrf.mxu0
    %v2344 = vadd.f32 0.0, %v2343
    %2345 = vmatmul.f32.gmra.mxu0 %v2135
    %v2346 = vpop.f32.mrf.mxu0
    %v2347 = vadd.f32 0.0, %v2346
    %2348 = vmatmul.f32.gmra.mxu0 %v2138
    %v2349 = vpop.f32.mrf.mxu0
    %v2350 = vadd.f32 0.0, %v2349
    %2351 = vmatmul.f32.gmra.mxu0 %v2141
    %v2352 = vpop.f32.mrf.mxu0
    %v2353 = vadd.f32 0.0, %v2352
    %2354 = vmatmul.f32.gmra.mxu0 %v2144
    %v2355 = vpop.f32.mrf.mxu0
    %v2356 = vadd.f32 0.0, %v2355
    %2357 = vmatmul.f32.gmra.mxu0 %v2147
    %v2358 = vpop.f32.mrf.mxu0
    %v2359 = vadd.f32 0.0, %v2358
    %2360 = vmatmul.f32.gmra.mxu0 %v2150
    %v2361 = vpop.f32.mrf.mxu0
    %v2362 = vadd.f32 0.0, %v2361
    %2363 = vmatmul.f32.gmra.mxu0 %v2153
    %v2364 = vpop.f32.mrf.mxu0
    %v2365 = vadd.f32 0.0, %v2364
    %2366 = vmatmul.f32.gmra.mxu0 %v2156
    %v2367 = vpop.f32.mrf.mxu0
    %v2368 = vadd.f32 0.0, %v2367
    %2369 = vmatmul.f32.gmra.mxu0 %v2159
    %v2370 = vpop.f32.mrf.mxu0
    %v2371 = vadd.f32 0.0, %v2370
    %2372 = vmatmul.f32.gmra.mxu0 %v2162
    %v2373 = vpop.f32.mrf.mxu0
    %v2374 = vadd.f32 0.0, %v2373
    %2375 = vmatmul.f32.gmra.mxu0 %v2165
    %v2376 = vpop.f32.mrf.mxu0
    %v2377 = vadd.f32 0.0, %v2376
    %2378 = vmatmul.f32.gmra.mxu0 %v2168
    %v2379 = vpop.f32.mrf.mxu0
    %v2380 = vadd.f32 0.0, %v2379
    %2381 = vmatmul.f32.gmra.mxu0 %v2171
    %v2382 = vpop.f32.mrf.mxu0
    %v2383 = vadd.f32 0.0, %v2382
    %2384 = vmatmul.f32.gmra.mxu0 %v2174
    %v2385 = vpop.f32.mrf.mxu0
    %v2386 = vadd.f32 0.0, %v2385
    %2387 = vmatmul.f32.gmra.mxu0 %v2177
    %v2388 = vpop.f32.mrf.mxu0
    %v2389 = vadd.f32 0.0, %v2388
    %2390 = vmatmul.f32.gmra.mxu0 %v2180
    %v2391 = vpop.f32.mrf.mxu0
    %v2392 = vadd.f32 0.0, %v2391
    %2393 = vmatmul.f32.gmra.mxu0 %v2183
    %v2394 = vpop.f32.mrf.mxu0
    %v2395 = vadd.f32 0.0, %v2394
    %2396 = vmatmul.f32.gmra.mxu0 %v2186
    %v2397 = vpop.f32.mrf.mxu0
    %v2398 = vadd.f32 0.0, %v2397
    %2399 = vmatmul.f32.gmra.mxu0 %v2189
    %v2400 = vpop.f32.mrf.mxu0
    %v2401 = vadd.f32 0.0, %v2400
    %2402 = vmatmul.f32.gmra.mxu0 %v2192
    %v2403 = vpop.f32.mrf.mxu0
    %v2404 = vadd.f32 0.0, %v2403
    %2405 = vmatmul.f32.gmra.mxu0 %v2195
    %v2406 = vpop.f32.mrf.mxu0
    %v2407 = vadd.f32 0.0, %v2406
    %2408 = vmatmul.f32.gmra.mxu0 %v2198
    %v2409 = vpop.f32.mrf.mxu0
    %v2410 = vadd.f32 0.0, %v2409
    %2411 = vmatmul.f32.gmra.mxu0 %v2201
    %v2412 = vpop.f32.mrf.mxu0
    %v2413 = vadd.f32 0.0, %v2412
    %2414 = vmatmul.f32.gmra.mxu0 %v2204
    %v2415 = vpop.f32.mrf.mxu0
    %v2416 = vadd.f32 0.0, %v2415
    %2417 = vmatmul.f32.gmra.mxu0 %v2207
    %v2418 = vpop.f32.mrf.mxu0
    %v2419 = vadd.f32 0.0, %v2418
    %2420 = vmatmul.f32.gmra.mxu0 %v2210
    %v2421 = vpop.f32.mrf.mxu0
    %v2422 = vadd.f32 0.0, %v2421
    %2423 = vmatmul.f32.gmra.mxu0 %v2213
    %v2424 = vpop.f32.mrf.mxu0
    %v2425 = vadd.f32 0.0, %v2424
    %2426 = vmatmul.f32.gmra.mxu0 %v2216
    %v2427 = vpop.f32.mrf.mxu0
    %v2428 = vadd.f32 0.0, %v2427
    %2429 = vmatmul.f32.gmra.mxu0 %v2219
    %v2430 = vpop.f32.mrf.mxu0
    %v2431 = vadd.f32 0.0, %v2430
    %2432 = vmatmul.f32.gmra.mxu0 %v2222
    %v2433 = vpop.f32.mrf.mxu0
    %v2434 = vadd.f32 0.0, %v2433
    %2435 = vmatmul.f32.gmra.mxu0 %v2225
    %v2436 = vpop.f32.mrf.mxu0
    %v2437 = vadd.f32 0.0, %v2436
    %2438 = vmatmul.f32.gmra.mxu0 %v2228
    %v2439 = vpop.f32.mrf.mxu0
    %v2440 = vadd.f32 0.0, %v2439
    %2441 = vmatmul.f32.gmra.mxu0 %v2231
    %v2442 = vpop.f32.mrf.mxu0
    %v2443 = vadd.f32 0.0, %v2442
    %2444 = vmatmul.f32.gmra.mxu0 %v2234
    %v2445 = vpop.f32.mrf.mxu0
    %v2446 = vadd.f32 0.0, %v2445
    %2447 = vmatmul.f32.gmra.mxu0 %v2237
    %v2448 = vpop.f32.mrf.mxu0
    %v2449 = vadd.f32 0.0, %v2448
    %2450 = vmatmul.f32.gmra.mxu0 %v2240
    %v2451 = vpop.f32.mrf.mxu0
    %v2452 = vadd.f32 0.0, %v2451
    %2453 = vmatmul.f32.gmra.mxu0 %v2243
    %v2454 = vpop.f32.mrf.mxu0
    %v2455 = vadd.f32 0.0, %v2454
    %2456 = vmatmul.f32.gmra.mxu0 %v2246
    %v2457 = vpop.f32.mrf.mxu0
    %v2458 = vadd.f32 0.0, %v2457
    %2459 = vmatmul.f32.gmra.mxu0 %v2249
    %v2460 = vpop.f32.mrf.mxu0
    %v2461 = vadd.f32 0.0, %v2460
    %2462 = vmatmul.f32.gmra.mxu0 %v2252
    %v2463 = vpop.f32.mrf.mxu0
    %v2464 = vadd.f32 0.0, %v2463
    %2465 = vmatmul.f32.gmra.mxu0 %v2255
    %v2466 = vpop.f32.mrf.mxu0
    %v2467 = vadd.f32 0.0, %v2466
    %2468 = vmatmul.f32.gmra.mxu0 %v2258
    %v2469 = vpop.f32.mrf.mxu0
    %v2470 = vadd.f32 0.0, %v2469
    %2471 = vmatmul.f32.gmra.mxu0 %v2261
    %v2472 = vpop.f32.mrf.mxu0
    %v2473 = vadd.f32 0.0, %v2472
    %2474 = vmatmul.f32.gmra.mxu0 %v2264
    %v2475 = vpop.f32.mrf.mxu0
    %v2476 = vadd.f32 0.0, %v2475
    %2477 = vmatmul.f32.gmra.mxu0 %v2267
    %v2478 = vpop.f32.mrf.mxu0
    %v2479 = vadd.f32 0.0, %v2478
    %2480 = vmatmul.f32.gmra.mxu0 %v2270
    %v2481 = vpop.f32.mrf.mxu0
    %v2482 = vadd.f32 0.0, %v2481
    %2483 = vmatmul.f32.gmra.mxu0 %v2273
    %v2484 = vpop.f32.mrf.mxu0
    %v2485 = vadd.f32 0.0, %v2484
    %2486 = vmatmul.f32.gmra.mxu0 %v2276
    %v2487 = vpop.f32.mrf.mxu0
    %v2488 = vadd.f32 0.0, %v2487
    %2489 = vmatmul.f32.gmra.mxu0 %v2279
    %v2490 = vpop.f32.mrf.mxu0
    %v2491 = vadd.f32 0.0, %v2490
    %2492 = vmatmul.f32.gmra.mxu0 %v2282
    %v2493 = vpop.f32.mrf.mxu0
    %v2494 = vadd.f32 0.0, %v2493
    %2495 = vmatmul.f32.gmra.mxu0 %v2285
    %v2496 = vpop.f32.mrf.mxu0
    %v2497 = vadd.f32 0.0, %v2496
    %2498 = vmatmul.f32.gmra.mxu0 %v2288
    %v2499 = vpop.f32.mrf.mxu0
    %v2500 = vadd.f32 0.0, %v2499
    %2501 = vmatmul.f32.gmra.mxu0 %v2291
    %v2502 = vpop.f32.mrf.mxu0
    %v2503 = vadd.f32 0.0, %v2502
    %2504 = vmatmul.f32.gmra.mxu0 %v2294
    %v2505 = vpop.f32.mrf.mxu0
    %v2506 = vadd.f32 0.0, %v2505
    %2507 = vmatmul.f32.gmra.mxu0 %v2297
    %v2508 = vpop.f32.mrf.mxu0
    %v2509 = vadd.f32 0.0, %v2508
    %2510 = vmatmul.f32.gmra.mxu0 %v2300
    %v2511 = vpop.f32.mrf.mxu0
    %v2512 = vadd.f32 0.0, %v2511
    %2513 = vmatmul.f32.gmra.mxu0 %v2303
    %v2514 = vpop.f32.mrf.mxu0
    %v2515 = vadd.f32 0.0, %v2514
    %2516 = vmatmul.f32.gmra.mxu0 %v2306
    %v2517 = vpop.f32.mrf.mxu0
    %v2518 = vadd.f32 0.0, %v2517
    %2519 = vmatmul.f32.gmra.mxu0 %v2309
    %v2520 = vpop.f32.mrf.mxu0
    %v2521 = vadd.f32 0.0, %v2520
    %2522 = vmatmul.f32.gmra.mxu0 %v2312
    %v2523 = vpop.f32.mrf.mxu0
    %v2524 = vadd.f32 0.0, %v2523
    %2525 = vmatmul.f32.gmra.mxu0 %v2315
    %v2526 = vpop.f32.mrf.mxu0
    %v2527 = vadd.f32 0.0, %v2526
    %2528 = vmatmul.f32.gmra.mxu0 %v2318
    %v2529 = vpop.f32.mrf.mxu0
    %v2530 = vadd.f32 0.0, %v2529
    %2531 = vmatmul.f32.gmra.mxu0 %v2321
    %v2532 = vpop.f32.mrf.mxu0
    %v2533 = vadd.f32 0.0, %v2532
    %2534 = vdwg.mxu0
    %v2535 = vld [vmem:[#allocation3] sm:$0xff]
    %v2536 = vld [vmem:[#allocation3 + $0x8] sm:$0xff]
    %v2537 = vld [vmem:[#allocation3 + $0x10] sm:$0xff]
    %v2538 = vld [vmem:[#allocation3 + $0x18] sm:$0xff]
    %v2539 = vld [vmem:[#allocation3 + $0x20] sm:$0xff]
    %v2540 = vld [vmem:[#allocation3 + $0x28] sm:$0xff]
    %v2541 = vld [vmem:[#allocation3 + $0x30] sm:$0xff]
    %v2542 = vld [vmem:[#allocation3 + $0x38] sm:$0xff]
    %v2543 = vld [vmem:[#allocation3 + $0x40] sm:$0xff]
    %v2544 = vld [vmem:[#allocation3 + $0x48] sm:$0xff]
    %v2545 = vld [vmem:[#allocation3 + $0x50] sm:$0xff]
    %v2546 = vld [vmem:[#allocation3 + $0x58] sm:$0xff]
    %v2547 = vld [vmem:[#allocation3 + $0x60] sm:$0xff]
    %v2548 = vld [vmem:[#allocation3 + $0x68] sm:$0xff]
    %v2549 = vld [vmem:[#allocation3 + $0x70] sm:$0xff]
    %v2550 = vld [vmem:[#allocation3 + $0x78] sm:$0xff]
    %v2551 = vld [vmem:[#allocation3 + $0x80] sm:$0xff]
    %v2552 = vld [vmem:[#allocation3 + $0x88] sm:$0xff]
    %v2553 = vld [vmem:[#allocation3 + $0x90] sm:$0xff]
    %v2554 = vld [vmem:[#allocation3 + $0x98] sm:$0xff]
    %v2555 = vld [vmem:[#allocation3 + $0xa0] sm:$0xff]
    %v2556 = vld [vmem:[#allocation3 + $0xa8] sm:$0xff]
    %v2557 = vld [vmem:[#allocation3 + $0xb0] sm:$0xff]
    %v2558 = vld [vmem:[#allocation3 + $0xb8] sm:$0xff]
    %v2559 = vld [vmem:[#allocation3 + $0xc0] sm:$0xff]
    %v2560 = vld [vmem:[#allocation3 + $0xc8] sm:$0xff]
    %v2561 = vld [vmem:[#allocation3 + $0xd0] sm:$0xff]
    %v2562 = vld [vmem:[#allocation3 + $0xd8] sm:$0xff]
    %v2563 = vld [vmem:[#allocation3 + $0xe0] sm:$0xff]
    %v2564 = vld [vmem:[#allocation3 + $0xe8] sm:$0xff]
    %v2565 = vld [vmem:[#allocation3 + $0xf0] sm:$0xff]
    %v2566 = vld [vmem:[#allocation3 + $0xf8] sm:$0xff]
    %v2567 = vld [vmem:[#allocation3 + $0x100] sm:$0xff]
    %v2568 = vld [vmem:[#allocation3 + $0x108] sm:$0xff]
    %v2569 = vld [vmem:[#allocation3 + $0x110] sm:$0xff]
    %v2570 = vld [vmem:[#allocation3 + $0x118] sm:$0xff]
    %v2571 = vld [vmem:[#allocation3 + $0x120] sm:$0xff]
    %v2572 = vld [vmem:[#allocation3 + $0x128] sm:$0xff]
    %v2573 = vld [vmem:[#allocation3 + $0x130] sm:$0xff]
    %v2574 = vld [vmem:[#allocation3 + $0x138] sm:$0xff]
    %v2575 = vld [vmem:[#allocation3 + $0x140] sm:$0xff]
    %v2576 = vld [vmem:[#allocation3 + $0x148] sm:$0xff]
    %v2577 = vld [vmem:[#allocation3 + $0x150] sm:$0xff]
    %v2578 = vld [vmem:[#allocation3 + $0x158] sm:$0xff]
    %v2579 = vld [vmem:[#allocation3 + $0x160] sm:$0xff]
    %v2580 = vld [vmem:[#allocation3 + $0x168] sm:$0xff]
    %v2581 = vld [vmem:[#allocation3 + $0x170] sm:$0xff]
    %v2582 = vld [vmem:[#allocation3 + $0x178] sm:$0xff]
    %v2583 = vld [vmem:[#allocation3 + $0x180] sm:$0xff]
    %v2584 = vld [vmem:[#allocation3 + $0x188] sm:$0xff]
    %v2585 = vld [vmem:[#allocation3 + $0x190] sm:$0xff]
    %v2586 = vld [vmem:[#allocation3 + $0x198] sm:$0xff]
    %v2587 = vld [vmem:[#allocation3 + $0x1a0] sm:$0xff]
    %v2588 = vld [vmem:[#allocation3 + $0x1a8] sm:$0xff]
    %v2589 = vld [vmem:[#allocation3 + $0x1b0] sm:$0xff]
    %v2590 = vld [vmem:[#allocation3 + $0x1b8] sm:$0xff]
    %v2591 = vld [vmem:[#allocation3 + $0x1c0] sm:$0xff]
    %v2592 = vld [vmem:[#allocation3 + $0x1c8] sm:$0xff]
    %v2593 = vld [vmem:[#allocation3 + $0x1d0] sm:$0xff]
    %v2594 = vld [vmem:[#allocation3 + $0x1d8] sm:$0xff]
    %v2595 = vld [vmem:[#allocation3 + $0x1e0] sm:$0xff]
    %v2596 = vld [vmem:[#allocation3 + $0x1e8] sm:$0xff]
    %v2597 = vld [vmem:[#allocation3 + $0x1f0] sm:$0xff]
    %v2598 = vld [vmem:[#allocation3 + $0x1f8] sm:$0xff]
    %v2599 = vadd.f32 %v2535, %v2344
    %v2600 = vadd.f32 %v2536, %v2347
    %v2601 = vadd.f32 %v2537, %v2350
    %v2602 = vadd.f32 %v2538, %v2353
    %v2603 = vadd.f32 %v2539, %v2356
    %v2604 = vadd.f32 %v2540, %v2359
    %v2605 = vadd.f32 %v2541, %v2362
    %v2606 = vadd.f32 %v2542, %v2365
    %v2607 = vadd.f32 %v2543, %v2368
    %v2608 = vadd.f32 %v2544, %v2371
    %v2609 = vadd.f32 %v2545, %v2374
    %v2610 = vadd.f32 %v2546, %v2377
    %v2611 = vadd.f32 %v2547, %v2380
    %v2612 = vadd.f32 %v2548, %v2383
    %v2613 = vadd.f32 %v2549, %v2386
    %v2614 = vadd.f32 %v2550, %v2389
    %v2615 = vadd.f32 %v2551, %v2392
    %v2616 = vadd.f32 %v2552, %v2395
    %v2617 = vadd.f32 %v2553, %v2398
    %v2618 = vadd.f32 %v2554, %v2401
    %v2619 = vadd.f32 %v2555, %v2404
    %v2620 = vadd.f32 %v2556, %v2407
    %v2621 = vadd.f32 %v2557, %v2410
    %v2622 = vadd.f32 %v2558, %v2413
    %v2623 = vadd.f32 %v2559, %v2416
    %v2624 = vadd.f32 %v2560, %v2419
    %v2625 = vadd.f32 %v2561, %v2422
    %v2626 = vadd.f32 %v2562, %v2425
    %v2627 = vadd.f32 %v2563, %v2428
    %v2628 = vadd.f32 %v2564, %v2431
    %v2629 = vadd.f32 %v2565, %v2434
    %v2630 = vadd.f32 %v2566, %v2437
    %v2631 = vadd.f32 %v2567, %v2440
    %v2632 = vadd.f32 %v2568, %v2443
    %v2633 = vadd.f32 %v2569, %v2446
    %v2634 = vadd.f32 %v2570, %v2449
    %v2635 = vadd.f32 %v2571, %v2452
    %v2636 = vadd.f32 %v2572, %v2455
    %v2637 = vadd.f32 %v2573, %v2458
    %v2638 = vadd.f32 %v2574, %v2461
    %v2639 = vadd.f32 %v2575, %v2464
    %v2640 = vadd.f32 %v2576, %v2467
    %v2641 = vadd.f32 %v2577, %v2470
    %v2642 = vadd.f32 %v2578, %v2473
    %v2643 = vadd.f32 %v2579, %v2476
    %v2644 = vadd.f32 %v2580, %v2479
    %v2645 = vadd.f32 %v2581, %v2482
    %v2646 = vadd.f32 %v2582, %v2485
    %v2647 = vadd.f32 %v2583, %v2488
    %v2648 = vadd.f32 %v2584, %v2491
    %v2649 = vadd.f32 %v2585, %v2494
    %v2650 = vadd.f32 %v2586, %v2497
    %v2651 = vadd.f32 %v2587, %v2500
    %v2652 = vadd.f32 %v2588, %v2503
    %v2653 = vadd.f32 %v2589, %v2506
    %v2654 = vadd.f32 %v2590, %v2509
    %v2655 = vadd.f32 %v2591, %v2512
    %v2656 = vadd.f32 %v2592, %v2515
    %v2657 = vadd.f32 %v2593, %v2518
    %v2658 = vadd.f32 %v2594, %v2521
    %v2659 = vadd.f32 %v2595, %v2524
    %v2660 = vadd.f32 %v2596, %v2527
    %v2661 = vadd.f32 %v2597, %v2530
    %v2662 = vadd.f32 %v2598, %v2533
    %2663 = vst [vmem:[#allocation3] sm:$0xff] %v2599
    %2664 = vst [vmem:[#allocation3 + $0x8] sm:$0xff] %v2600
    %2665 = vst [vmem:[#allocation3 + $0x10] sm:$0xff] %v2601
    %2666 = vst [vmem:[#allocation3 + $0x18] sm:$0xff] %v2602
    %2667 = vst [vmem:[#allocation3 + $0x20] sm:$0xff] %v2603
    %2668 = vst [vmem:[#allocation3 + $0x28] sm:$0xff] %v2604
    %2669 = vst [vmem:[#allocation3 + $0x30] sm:$0xff] %v2605
    %2670 = vst [vmem:[#allocation3 + $0x38] sm:$0xff] %v2606
    %2671 = vst [vmem:[#allocation3 + $0x40] sm:$0xff] %v2607
    %2672 = vst [vmem:[#allocation3 + $0x48] sm:$0xff] %v2608
    %2673 = vst [vmem:[#allocation3 + $0x50] sm:$0xff] %v2609
    %2674 = vst [vmem:[#allocation3 + $0x58] sm:$0xff] %v2610
    %2675 = vst [vmem:[#allocation3 + $0x60] sm:$0xff] %v2611
    %2676 = vst [vmem:[#allocation3 + $0x68] sm:$0xff] %v2612
    %2677 = vst [vmem:[#allocation3 + $0x70] sm:$0xff] %v2613
    %2678 = vst [vmem:[#allocation3 + $0x78] sm:$0xff] %v2614
    %2679 = vst [vmem:[#allocation3 + $0x80] sm:$0xff] %v2615
    %2680 = vst [vmem:[#allocation3 + $0x88] sm:$0xff] %v2616
    %2681 = vst [vmem:[#allocation3 + $0x90] sm:$0xff] %v2617
    %2682 = vst [vmem:[#allocation3 + $0x98] sm:$0xff] %v2618
    %2683 = vst [vmem:[#allocation3 + $0xa0] sm:$0xff] %v2619
    %2684 = vst [vmem:[#allocation3 + $0xa8] sm:$0xff] %v2620
    %2685 = vst [vmem:[#allocation3 + $0xb0] sm:$0xff] %v2621
    %2686 = vst [vmem:[#allocation3 + $0xb8] sm:$0xff] %v2622
    %2687 = vst [vmem:[#allocation3 + $0xc0] sm:$0xff] %v2623
    %2688 = vst [vmem:[#allocation3 + $0xc8] sm:$0xff] %v2624
    %2689 = vst [vmem:[#allocation3 + $0xd0] sm:$0xff] %v2625
    %2690 = vst [vmem:[#allocation3 + $0xd8] sm:$0xff] %v2626
    %2691 = vst [vmem:[#allocation3 + $0xe0] sm:$0xff] %v2627
    %2692 = vst [vmem:[#allocation3 + $0xe8] sm:$0xff] %v2628
    %2693 = vst [vmem:[#allocation3 + $0xf0] sm:$0xff] %v2629
    %2694 = vst [vmem:[#allocation3 + $0xf8] sm:$0xff] %v2630
    %2695 = vst [vmem:[#allocation3 + $0x100] sm:$0xff] %v2631
    %2696 = vst [vmem:[#allocation3 + $0x108] sm:$0xff] %v2632
    %2697 = vst [vmem:[#allocation3 + $0x110] sm:$0xff] %v2633
    %2698 = vst [vmem:[#allocation3 + $0x118] sm:$0xff] %v2634
    %2699 = vst [vmem:[#allocation3 + $0x120] sm:$0xff] %v2635
    %2700 = vst [vmem:[#allocation3 + $0x128] sm:$0xff] %v2636
    %2701 = vst [vmem:[#allocation3 + $0x130] sm:$0xff] %v2637
    %2702 = vst [vmem:[#allocation3 + $0x138] sm:$0xff] %v2638
    %2703 = vst [vmem:[#allocation3 + $0x140] sm:$0xff] %v2639
    %2704 = vst [vmem:[#allocation3 + $0x148] sm:$0xff] %v2640
    %2705 = vst [vmem:[#allocation3 + $0x150] sm:$0xff] %v2641
    %2706 = vst [vmem:[#allocation3 + $0x158] sm:$0xff] %v2642
    %2707 = vst [vmem:[#allocation3 + $0x160] sm:$0xff] %v2643
    %2708 = vst [vmem:[#allocation3 + $0x168] sm:$0xff] %v2644
    %2709 = vst [vmem:[#allocation3 + $0x170] sm:$0xff] %v2645
    %2710 = vst [vmem:[#allocation3 + $0x178] sm:$0xff] %v2646
    %2711 = vst [vmem:[#allocation3 + $0x180] sm:$0xff] %v2647
    %2712 = vst [vmem:[#allocation3 + $0x188] sm:$0xff] %v2648
    %2713 = vst [vmem:[#allocation3 + $0x190] sm:$0xff] %v2649
    %2714 = vst [vmem:[#allocation3 + $0x198] sm:$0xff] %v2650
    %2715 = vst [vmem:[#allocation3 + $0x1a0] sm:$0xff] %v2651
    %2716 = vst [vmem:[#allocation3 + $0x1a8] sm:$0xff] %v2652
    %2717 = vst [vmem:[#allocation3 + $0x1b0] sm:$0xff] %v2653
    %2718 = vst [vmem:[#allocation3 + $0x1b8] sm:$0xff] %v2654
    %2719 = vst [vmem:[#allocation3 + $0x1c0] sm:$0xff] %v2655
    %2720 = vst [vmem:[#allocation3 + $0x1c8] sm:$0xff] %v2656
    %2721 = vst [vmem:[#allocation3 + $0x1d0] sm:$0xff] %v2657
    %2722 = vst [vmem:[#allocation3 + $0x1d8] sm:$0xff] %v2658
    %2723 = vst [vmem:[#allocation3 + $0x1e0] sm:$0xff] %v2659
    %2724 = vst [vmem:[#allocation3 + $0x1e8] sm:$0xff] %v2660
    %2725 = vst [vmem:[#allocation3 + $0x1f0] sm:$0xff] %v2661
    %2726 = vst [vmem:[#allocation3 + $0x1f8] sm:$0xff] %v2662
    %s2727 = scalar_lea.vmem [#allocation4], 160
    %v2728 = vld [vmem:[%s2727] sm:$0xff]
    %v2729 = vld [vmem:[%s2727 + $0x8] sm:$0xff]
    %v2730 = vld [vmem:[%s2727 + $0x10] sm:$0xff]
    %v2731 = vld [vmem:[%s2727 + $0x18] sm:$0xff]
    %v2732 = vld [vmem:[%s2727 + $0x20] sm:$0xf]
    %v2734 = vsel %vm34, %v2085, 0
    %v2737 = vsel %vm34, %v2086, 0
    %v2740 = vsel %vm34, %v2121, 0
    %v2743 = vsel %vm34, %v2122, 0
    %v2746 = vsel %vm932, %v2732, 0
    %2748 = vmatpush.msra.mxu0 0.0
    %2749 = vmatpush.msra.mxu0 0.0
    %2750 = vmatpush.msra.mxu0 0.0
    %2751 = vmatpush.msra.mxu0 0.0
    %2752 = vmatpush.msra.mxu0 0.0
    %2753 = vmatpush.msra.mxu0 0.0
    %2754 = vmatpush.msra.mxu0 0.0
    %2755 = vmatpush.msra.mxu0 0.0
    %2756 = vmatpush.msra.mxu0 0.0
    %2757 = vmatpush.msra.mxu0 0.0
    %2758 = vmatpush.msra.mxu0 0.0
    %2759 = vmatpush.msra.mxu0 %v2746
    %2760 = vmatpush.msra.mxu0 %v2731
    %2761 = vmatpush.msra.mxu0 %v2730
    %2762 = vmatpush.msra.mxu0 %v2729
    %2763 = vmatpush.msra.mxu0 %v2728
    %2764 = vmatmul.f32.gmra.mxu0 %v2138
    %v2765 = vpop.f32.mrf.mxu0
    %v2766 = vadd.f32 0.0, %v2765
    %2767 = vmatmul.f32.gmra.mxu0 %v2141
    %v2768 = vpop.f32.mrf.mxu0
    %v2769 = vadd.f32 0.0, %v2768
    %2770 = vmatmul.f32.gmra.mxu0 %v2144
    %v2771 = vpop.f32.mrf.mxu0
    %v2772 = vadd.f32 0.0, %v2771
    %2773 = vmatmul.f32.gmra.mxu0 %v2147
    %v2774 = vpop.f32.mrf.mxu0
    %v2775 = vadd.f32 0.0, %v2774
    %2776 = vmatmul.f32.gmra.mxu0 %v2150
    %v2777 = vpop.f32.mrf.mxu0
    %v2778 = vadd.f32 0.0, %v2777
    %2779 = vmatmul.f32.gmra.mxu0 %v2153
    %v2780 = vpop.f32.mrf.mxu0
    %v2781 = vadd.f32 0.0, %v2780
    %2782 = vmatmul.f32.gmra.mxu0 %v2156
    %v2783 = vpop.f32.mrf.mxu0
    %v2784 = vadd.f32 0.0, %v2783
    %2785 = vmatmul.f32.gmra.mxu0 %v2159
    %v2786 = vpop.f32.mrf.mxu0
    %v2787 = vadd.f32 0.0, %v2786
    %2788 = vmatmul.f32.gmra.mxu0 %v2162
    %v2789 = vpop.f32.mrf.mxu0
    %v2790 = vadd.f32 0.0, %v2789
    %2791 = vmatmul.f32.gmra.mxu0 %v2165
    %v2792 = vpop.f32.mrf.mxu0
    %v2793 = vadd.f32 0.0, %v2792
    %2794 = vmatmul.f32.gmra.mxu0 %v2168
    %v2795 = vpop.f32.mrf.mxu0
    %v2796 = vadd.f32 0.0, %v2795
    %2797 = vmatmul.f32.gmra.mxu0 %v2171
    %v2798 = vpop.f32.mrf.mxu0
    %v2799 = vadd.f32 0.0, %v2798
    %2800 = vmatmul.f32.gmra.mxu0 %v2174
    %v2801 = vpop.f32.mrf.mxu0
    %v2802 = vadd.f32 0.0, %v2801
    %2803 = vmatmul.f32.gmra.mxu0 %v2177
    %v2804 = vpop.f32.mrf.mxu0
    %v2805 = vadd.f32 0.0, %v2804
    %2806 = vmatmul.f32.gmra.mxu0 %v2180
    %v2807 = vpop.f32.mrf.mxu0
    %v2808 = vadd.f32 0.0, %v2807
    %2809 = vmatmul.f32.gmra.mxu0 %v2183
    %v2810 = vpop.f32.mrf.mxu0
    %v2811 = vadd.f32 0.0, %v2810
    %2812 = vmatmul.f32.gmra.mxu0 %v2186
    %v2813 = vpop.f32.mrf.mxu0
    %v2814 = vadd.f32 0.0, %v2813
    %2815 = vmatmul.f32.gmra.mxu0 %v2189
    %v2816 = vpop.f32.mrf.mxu0
    %v2817 = vadd.f32 0.0, %v2816
    %2818 = vmatmul.f32.gmra.mxu0 %v2192
    %v2819 = vpop.f32.mrf.mxu0
    %v2820 = vadd.f32 0.0, %v2819
    %2821 = vmatmul.f32.gmra.mxu0 %v2195
    %v2822 = vpop.f32.mrf.mxu0
    %v2823 = vadd.f32 0.0, %v2822
    %2824 = vmatmul.f32.gmra.mxu0 %v2198
    %v2825 = vpop.f32.mrf.mxu0
    %v2826 = vadd.f32 0.0, %v2825
    %2827 = vmatmul.f32.gmra.mxu0 %v2201
    %v2828 = vpop.f32.mrf.mxu0
    %v2829 = vadd.f32 0.0, %v2828
    %2830 = vmatmul.f32.gmra.mxu0 %v2204
    %v2831 = vpop.f32.mrf.mxu0
    %v2832 = vadd.f32 0.0, %v2831
    %2833 = vmatmul.f32.gmra.mxu0 %v2207
    %v2834 = vpop.f32.mrf.mxu0
    %v2835 = vadd.f32 0.0, %v2834
    %2836 = vmatmul.f32.gmra.mxu0 %v2210
    %v2837 = vpop.f32.mrf.mxu0
    %v2838 = vadd.f32 0.0, %v2837
    %2839 = vmatmul.f32.gmra.mxu0 %v2213
    %v2840 = vpop.f32.mrf.mxu0
    %v2841 = vadd.f32 0.0, %v2840
    %2842 = vmatmul.f32.gmra.mxu0 %v2216
    %v2843 = vpop.f32.mrf.mxu0
    %v2844 = vadd.f32 0.0, %v2843
    %2845 = vmatmul.f32.gmra.mxu0 %v2219
    %v2846 = vpop.f32.mrf.mxu0
    %v2847 = vadd.f32 0.0, %v2846
    %2848 = vmatmul.f32.gmra.mxu0 %v2222
    %v2849 = vpop.f32.mrf.mxu0
    %v2850 = vadd.f32 0.0, %v2849
    %2851 = vmatmul.f32.gmra.mxu0 %v2225
    %v2852 = vpop.f32.mrf.mxu0
    %v2853 = vadd.f32 0.0, %v2852
    %2854 = vmatmul.f32.gmra.mxu0 %v2734
    %v2855 = vpop.f32.mrf.mxu0
    %v2856 = vadd.f32 0.0, %v2855
    %2857 = vmatmul.f32.gmra.mxu0 %v2737
    %v2858 = vpop.f32.mrf.mxu0
    %v2859 = vadd.f32 0.0, %v2858
    %2860 = vmatmul.f32.gmra.mxu0 %v2234
    %v2861 = vpop.f32.mrf.mxu0
    %v2862 = vadd.f32 0.0, %v2861
    %2863 = vmatmul.f32.gmra.mxu0 %v2237
    %v2864 = vpop.f32.mrf.mxu0
    %v2865 = vadd.f32 0.0, %v2864
    %2866 = vmatmul.f32.gmra.mxu0 %v2240
    %v2867 = vpop.f32.mrf.mxu0
    %v2868 = vadd.f32 0.0, %v2867
    %2869 = vmatmul.f32.gmra.mxu0 %v2243
    %v2870 = vpop.f32.mrf.mxu0
    %v2871 = vadd.f32 0.0, %v2870
    %2872 = vmatmul.f32.gmra.mxu0 %v2246
    %v2873 = vpop.f32.mrf.mxu0
    %v2874 = vadd.f32 0.0, %v2873
    %2875 = vmatmul.f32.gmra.mxu0 %v2249
    %v2876 = vpop.f32.mrf.mxu0
    %v2877 = vadd.f32 0.0, %v2876
    %2878 = vmatmul.f32.gmra.mxu0 %v2252
    %v2879 = vpop.f32.mrf.mxu0
    %v2880 = vadd.f32 0.0, %v2879
    %2881 = vmatmul.f32.gmra.mxu0 %v2255
    %v2882 = vpop.f32.mrf.mxu0
    %v2883 = vadd.f32 0.0, %v2882
    %2884 = vmatmul.f32.gmra.mxu0 %v2258
    %v2885 = vpop.f32.mrf.mxu0
    %v2886 = vadd.f32 0.0, %v2885
    %2887 = vmatmul.f32.gmra.mxu0 %v2261
    %v2888 = vpop.f32.mrf.mxu0
    %v2889 = vadd.f32 0.0, %v2888
    %2890 = vmatmul.f32.gmra.mxu0 %v2264
    %v2891 = vpop.f32.mrf.mxu0
    %v2892 = vadd.f32 0.0, %v2891
    %2893 = vmatmul.f32.gmra.mxu0 %v2267
    %v2894 = vpop.f32.mrf.mxu0
    %v2895 = vadd.f32 0.0, %v2894
    %2896 = vmatmul.f32.gmra.mxu0 %v2270
    %v2897 = vpop.f32.mrf.mxu0
    %v2898 = vadd.f32 0.0, %v2897
    %2899 = vmatmul.f32.gmra.mxu0 %v2273
    %v2900 = vpop.f32.mrf.mxu0
    %v2901 = vadd.f32 0.0, %v2900
    %2902 = vmatmul.f32.gmra.mxu0 %v2276
    %v2903 = vpop.f32.mrf.mxu0
    %v2904 = vadd.f32 0.0, %v2903
    %2905 = vmatmul.f32.gmra.mxu0 %v2279
    %v2906 = vpop.f32.mrf.mxu0
    %v2907 = vadd.f32 0.0, %v2906
    %2908 = vmatmul.f32.gmra.mxu0 %v2282
    %v2909 = vpop.f32.mrf.mxu0
    %v2910 = vadd.f32 0.0, %v2909
    %2911 = vmatmul.f32.gmra.mxu0 %v2285
    %v2912 = vpop.f32.mrf.mxu0
    %v2913 = vadd.f32 0.0, %v2912
    %2914 = vmatmul.f32.gmra.mxu0 %v2288
    %v2915 = vpop.f32.mrf.mxu0
    %v2916 = vadd.f32 0.0, %v2915
    %2917 = vmatmul.f32.gmra.mxu0 %v2291
    %v2918 = vpop.f32.mrf.mxu0
    %v2919 = vadd.f32 0.0, %v2918
    %2920 = vmatmul.f32.gmra.mxu0 %v2294
    %v2921 = vpop.f32.mrf.mxu0
    %v2922 = vadd.f32 0.0, %v2921
    %2923 = vmatmul.f32.gmra.mxu0 %v2297
    %v2924 = vpop.f32.mrf.mxu0
    %v2925 = vadd.f32 0.0, %v2924
    %2926 = vmatmul.f32.gmra.mxu0 %v2300
    %v2927 = vpop.f32.mrf.mxu0
    %v2928 = vadd.f32 0.0, %v2927
    %2929 = vmatmul.f32.gmra.mxu0 %v2303
    %v2930 = vpop.f32.mrf.mxu0
    %v2931 = vadd.f32 0.0, %v2930
    %2932 = vmatmul.f32.gmra.mxu0 %v2306
    %v2933 = vpop.f32.mrf.mxu0
    %v2934 = vadd.f32 0.0, %v2933
    %2935 = vmatmul.f32.gmra.mxu0 %v2309
    %v2936 = vpop.f32.mrf.mxu0
    %v2937 = vadd.f32 0.0, %v2936
    %2938 = vmatmul.f32.gmra.mxu0 %v2312
    %v2939 = vpop.f32.mrf.mxu0
    %v2940 = vadd.f32 0.0, %v2939
    %2941 = vmatmul.f32.gmra.mxu0 %v2315
    %v2942 = vpop.f32.mrf.mxu0
    %v2943 = vadd.f32 0.0, %v2942
    %2944 = vmatmul.f32.gmra.mxu0 %v2318
    %v2945 = vpop.f32.mrf.mxu0
    %v2946 = vadd.f32 0.0, %v2945
    %2947 = vmatmul.f32.gmra.mxu0 %v2321
    %v2948 = vpop.f32.mrf.mxu0
    %v2949 = vadd.f32 0.0, %v2948
    %2950 = vmatmul.f32.gmra.mxu0 %v2740
    %v2951 = vpop.f32.mrf.mxu0
    %v2952 = vadd.f32 0.0, %v2951
    %2953 = vmatmul.f32.gmra.mxu0 %v2743
    %v2954 = vpop.f32.mrf.mxu0
    %v2955 = vadd.f32 0.0, %v2954
    %2956 = vdwg.mxu0
    %v2957 = vld [vmem:[#allocation3] sm:$0xff]
    %v2958 = vld [vmem:[#allocation3 + $0x8] sm:$0xff]
    %v2959 = vld [vmem:[#allocation3 + $0x10] sm:$0xff]
    %v2960 = vld [vmem:[#allocation3 + $0x18] sm:$0xff]
    %v2961 = vld [vmem:[#allocation3 + $0x20] sm:$0xff]
    %v2962 = vld [vmem:[#allocation3 + $0x28] sm:$0xff]
    %v2963 = vld [vmem:[#allocation3 + $0x30] sm:$0xff]
    %v2964 = vld [vmem:[#allocation3 + $0x38] sm:$0xff]
    %v2965 = vld [vmem:[#allocation3 + $0x40] sm:$0xff]
    %v2966 = vld [vmem:[#allocation3 + $0x48] sm:$0xff]
    %v2967 = vld [vmem:[#allocation3 + $0x50] sm:$0xff]
    %v2968 = vld [vmem:[#allocation3 + $0x58] sm:$0xff]
    %v2969 = vld [vmem:[#allocation3 + $0x60] sm:$0xff]
    %v2970 = vld [vmem:[#allocation3 + $0x68] sm:$0xff]
    %v2971 = vld [vmem:[#allocation3 + $0x70] sm:$0xff]
    %v2972 = vld [vmem:[#allocation3 + $0x78] sm:$0xff]
    %v2973 = vld [vmem:[#allocation3 + $0x80] sm:$0xff]
    %v2974 = vld [vmem:[#allocation3 + $0x88] sm:$0xff]
    %v2975 = vld [vmem:[#allocation3 + $0x90] sm:$0xff]
    %v2976 = vld [vmem:[#allocation3 + $0x98] sm:$0xff]
    %v2977 = vld [vmem:[#allocation3 + $0xa0] sm:$0xff]
    %v2978 = vld [vmem:[#allocation3 + $0xa8] sm:$0xff]
    %v2979 = vld [vmem:[#allocation3 + $0xb0] sm:$0xff]
    %v2980 = vld [vmem:[#allocation3 + $0xb8] sm:$0xff]
    %v2981 = vld [vmem:[#allocation3 + $0xc0] sm:$0xff]
    %v2982 = vld [vmem:[#allocation3 + $0xc8] sm:$0xff]
    %v2983 = vld [vmem:[#allocation3 + $0xd0] sm:$0xff]
    %v2984 = vld [vmem:[#allocation3 + $0xd8] sm:$0xff]
    %v2985 = vld [vmem:[#allocation3 + $0xe0] sm:$0xff]
    %v2986 = vld [vmem:[#allocation3 + $0xe8] sm:$0xff]
    %v2987 = vld [vmem:[#allocation3 + $0xf0] sm:$0xff]
    %v2988 = vld [vmem:[#allocation3 + $0xf8] sm:$0xff]
    %v2989 = vld [vmem:[#allocation3 + $0x100] sm:$0xff]
    %v2990 = vld [vmem:[#allocation3 + $0x108] sm:$0xff]
    %v2991 = vld [vmem:[#allocation3 + $0x110] sm:$0xff]
    %v2992 = vld [vmem:[#allocation3 + $0x118] sm:$0xff]
    %v2993 = vld [vmem:[#allocation3 + $0x120] sm:$0xff]
    %v2994 = vld [vmem:[#allocation3 + $0x128] sm:$0xff]
    %v2995 = vld [vmem:[#allocation3 + $0x130] sm:$0xff]
    %v2996 = vld [vmem:[#allocation3 + $0x138] sm:$0xff]
    %v2997 = vld [vmem:[#allocation3 + $0x140] sm:$0xff]
    %v2998 = vld [vmem:[#allocation3 + $0x148] sm:$0xff]
    %v2999 = vld [vmem:[#allocation3 + $0x150] sm:$0xff]
    %v3000 = vld [vmem:[#allocation3 + $0x158] sm:$0xff]
    %v3001 = vld [vmem:[#allocation3 + $0x160] sm:$0xff]
    %v3002 = vld [vmem:[#allocation3 + $0x168] sm:$0xff]
    %v3003 = vld [vmem:[#allocation3 + $0x170] sm:$0xff]
    %v3004 = vld [vmem:[#allocation3 + $0x178] sm:$0xff]
    %v3005 = vld [vmem:[#allocation3 + $0x180] sm:$0xff]
    %v3006 = vld [vmem:[#allocation3 + $0x188] sm:$0xff]
    %v3007 = vld [vmem:[#allocation3 + $0x190] sm:$0xff]
    %v3008 = vld [vmem:[#allocation3 + $0x198] sm:$0xff]
    %v3009 = vld [vmem:[#allocation3 + $0x1a0] sm:$0xff]
    %v3010 = vld [vmem:[#allocation3 + $0x1a8] sm:$0xff]
    %v3011 = vld [vmem:[#allocation3 + $0x1b0] sm:$0xff]
    %v3012 = vld [vmem:[#allocation3 + $0x1b8] sm:$0xff]
    %v3013 = vld [vmem:[#allocation3 + $0x1c0] sm:$0xff]
    %v3014 = vld [vmem:[#allocation3 + $0x1c8] sm:$0xff]
    %v3015 = vld [vmem:[#allocation3 + $0x1d0] sm:$0xff]
    %v3016 = vld [vmem:[#allocation3 + $0x1d8] sm:$0xff]
    %v3017 = vld [vmem:[#allocation3 + $0x1e0] sm:$0xff]
    %v3018 = vld [vmem:[#allocation3 + $0x1e8] sm:$0xff]
    %v3019 = vld [vmem:[#allocation3 + $0x1f0] sm:$0xff]
    %v3020 = vld [vmem:[#allocation3 + $0x1f8] sm:$0xff]
    %v3021 = vadd.f32 %v2957, %v2766
    %v3022 = vadd.f32 %v2958, %v2769
    %v3023 = vadd.f32 %v2959, %v2772
    %v3024 = vadd.f32 %v2960, %v2775
    %v3025 = vadd.f32 %v2961, %v2778
    %v3026 = vadd.f32 %v2962, %v2781
    %v3027 = vadd.f32 %v2963, %v2784
    %v3028 = vadd.f32 %v2964, %v2787
    %v3029 = vadd.f32 %v2965, %v2790
    %v3030 = vadd.f32 %v2966, %v2793
    %v3031 = vadd.f32 %v2967, %v2796
    %v3032 = vadd.f32 %v2968, %v2799
    %v3033 = vadd.f32 %v2969, %v2802
    %v3034 = vadd.f32 %v2970, %v2805
    %v3035 = vadd.f32 %v2971, %v2808
    %v3036 = vadd.f32 %v2972, %v2811
    %v3037 = vadd.f32 %v2973, %v2814
    %v3038 = vadd.f32 %v2974, %v2817
    %v3039 = vadd.f32 %v2975, %v2820
    %v3040 = vadd.f32 %v2976, %v2823
    %v3041 = vadd.f32 %v2977, %v2826
    %v3042 = vadd.f32 %v2978, %v2829
    %v3043 = vadd.f32 %v2979, %v2832
    %v3044 = vadd.f32 %v2980, %v2835
    %v3045 = vadd.f32 %v2981, %v2838
    %v3046 = vadd.f32 %v2982, %v2841
    %v3047 = vadd.f32 %v2983, %v2844
    %v3048 = vadd.f32 %v2984, %v2847
    %v3049 = vadd.f32 %v2985, %v2850
    %v3050 = vadd.f32 %v2986, %v2853
    %v3051 = vadd.f32 %v2987, %v2856
    %v3052 = vadd.f32 %v2988, %v2859
    %v3053 = vadd.f32 %v2989, %v2862
    %v3054 = vadd.f32 %v2990, %v2865
    %v3055 = vadd.f32 %v2991, %v2868
    %v3056 = vadd.f32 %v2992, %v2871
    %v3057 = vadd.f32 %v2993, %v2874
    %v3058 = vadd.f32 %v2994, %v2877
    %v3059 = vadd.f32 %v2995, %v2880
    %v3060 = vadd.f32 %v2996, %v2883
    %v3061 = vadd.f32 %v2997, %v2886
    %v3062 = vadd.f32 %v2998, %v2889
    %v3063 = vadd.f32 %v2999, %v2892
    %v3064 = vadd.f32 %v3000, %v2895
    %v3065 = vadd.f32 %v3001, %v2898
    %v3066 = vadd.f32 %v3002, %v2901
    %v3067 = vadd.f32 %v3003, %v2904
    %v3068 = vadd.f32 %v3004, %v2907
    %v3069 = vadd.f32 %v3005, %v2910
    %v3070 = vadd.f32 %v3006, %v2913
    %v3071 = vadd.f32 %v3007, %v2916
    %v3072 = vadd.f32 %v3008, %v2919
    %v3073 = vadd.f32 %v3009, %v2922
    %v3074 = vadd.f32 %v3010, %v2925
    %v3075 = vadd.f32 %v3011, %v2928
    %v3076 = vadd.f32 %v3012, %v2931
    %v3077 = vadd.f32 %v3013, %v2934
    %v3078 = vadd.f32 %v3014, %v2937
    %v3079 = vadd.f32 %v3015, %v2940
    %v3080 = vadd.f32 %v3016, %v2943
    %v3081 = vadd.f32 %v3017, %v2946
    %v3082 = vadd.f32 %v3018, %v2949
    %v3083 = vadd.f32 %v3019, %v2952
    %v3084 = vadd.f32 %v3020, %v2955
    %3085 = vst [vmem:[#allocation3] sm:$0xff] %v3021
    %3086 = vst [vmem:[#allocation3 + $0x8] sm:$0xff] %v3022
    %3087 = vst [vmem:[#allocation3 + $0x10] sm:$0xff] %v3023
    %3088 = vst [vmem:[#allocation3 + $0x18] sm:$0xff] %v3024
    %3089 = vst [vmem:[#allocation3 + $0x20] sm:$0xff] %v3025
    %3090 = vst [vmem:[#allocation3 + $0x28] sm:$0xff] %v3026
    %3091 = vst [vmem:[#allocation3 + $0x30] sm:$0xff] %v3027
    %3092 = vst [vmem:[#allocation3 + $0x38] sm:$0xff] %v3028
    %3093 = vst [vmem:[#allocation3 + $0x40] sm:$0xff] %v3029
    %3094 = vst [vmem:[#allocation3 + $0x48] sm:$0xff] %v3030
    %3095 = vst [vmem:[#allocation3 + $0x50] sm:$0xff] %v3031
    %3096 = vst [vmem:[#allocation3 + $0x58] sm:$0xff] %v3032
    %3097 = vst [vmem:[#allocation3 + $0x60] sm:$0xff] %v3033
    %3098 = vst [vmem:[#allocation3 + $0x68] sm:$0xff] %v3034
    %3099 = vst [vmem:[#allocation3 + $0x70] sm:$0xff] %v3035
    %3100 = vst [vmem:[#allocation3 + $0x78] sm:$0xff] %v3036
    %3101 = vst [vmem:[#allocation3 + $0x80] sm:$0xff] %v3037
    %3102 = vst [vmem:[#allocation3 + $0x88] sm:$0xff] %v3038
    %3103 = vst [vmem:[#allocation3 + $0x90] sm:$0xff] %v3039
    %3104 = vst [vmem:[#allocation3 + $0x98] sm:$0xff] %v3040
    %3105 = vst [vmem:[#allocation3 + $0xa0] sm:$0xff] %v3041
    %3106 = vst [vmem:[#allocation3 + $0xa8] sm:$0xff] %v3042
    %3107 = vst [vmem:[#allocation3 + $0xb0] sm:$0xff] %v3043
    %3108 = vst [vmem:[#allocation3 + $0xb8] sm:$0xff] %v3044
    %3109 = vst [vmem:[#allocation3 + $0xc0] sm:$0xff] %v3045
    %3110 = vst [vmem:[#allocation3 + $0xc8] sm:$0xff] %v3046
    %3111 = vst [vmem:[#allocation3 + $0xd0] sm:$0xff] %v3047
    %3112 = vst [vmem:[#allocation3 + $0xd8] sm:$0xff] %v3048
    %3113 = vst [vmem:[#allocation3 + $0xe0] sm:$0xff] %v3049
    %3114 = vst [vmem:[#allocation3 + $0xe8] sm:$0xff] %v3050
    %3115 = vst [vmem:[#allocation3 + $0xf0] sm:$0xff] %v3051
    %3116 = vst [vmem:[#allocation3 + $0xf8] sm:$0xff] %v3052
    %3117 = vst [vmem:[#allocation3 + $0x100] sm:$0xff] %v3053
    %3118 = vst [vmem:[#allocation3 + $0x108] sm:$0xff] %v3054
    %3119 = vst [vmem:[#allocation3 + $0x110] sm:$0xff] %v3055
    %3120 = vst [vmem:[#allocation3 + $0x118] sm:$0xff] %v3056
    %3121 = vst [vmem:[#allocation3 + $0x120] sm:$0xff] %v3057
    %3122 = vst [vmem:[#allocation3 + $0x128] sm:$0xff] %v3058
    %3123 = vst [vmem:[#allocation3 + $0x130] sm:$0xff] %v3059
    %3124 = vst [vmem:[#allocation3 + $0x138] sm:$0xff] %v3060
    %3125 = vst [vmem:[#allocation3 + $0x140] sm:$0xff] %v3061
    %3126 = vst [vmem:[#allocation3 + $0x148] sm:$0xff] %v3062
    %3127 = vst [vmem:[#allocation3 + $0x150] sm:$0xff] %v3063
    %3128 = vst [vmem:[#allocation3 + $0x158] sm:$0xff] %v3064
    %3129 = vst [vmem:[#allocation3 + $0x160] sm:$0xff] %v3065
    %3130 = vst [vmem:[#allocation3 + $0x168] sm:$0xff] %v3066
    %3131 = vst [vmem:[#allocation3 + $0x170] sm:$0xff] %v3067
    %3132 = vst [vmem:[#allocation3 + $0x178] sm:$0xff] %v3068
    %3133 = vst [vmem:[#allocation3 + $0x180] sm:$0xff] %v3069
    %3134 = vst [vmem:[#allocation3 + $0x188] sm:$0xff] %v3070
    %3135 = vst [vmem:[#allocation3 + $0x190] sm:$0xff] %v3071
    %3136 = vst [vmem:[#allocation3 + $0x198] sm:$0xff] %v3072
    %3137 = vst [vmem:[#allocation3 + $0x1a0] sm:$0xff] %v3073
    %3138 = vst [vmem:[#allocation3 + $0x1a8] sm:$0xff] %v3074
    %3139 = vst [vmem:[#allocation3 + $0x1b0] sm:$0xff] %v3075
    %3140 = vst [vmem:[#allocation3 + $0x1b8] sm:$0xff] %v3076
    %3141 = vst [vmem:[#allocation3 + $0x1c0] sm:$0xff] %v3077
    %3142 = vst [vmem:[#allocation3 + $0x1c8] sm:$0xff] %v3078
    %3143 = vst [vmem:[#allocation3 + $0x1d0] sm:$0xff] %v3079
    %3144 = vst [vmem:[#allocation3 + $0x1d8] sm:$0xff] %v3080
    %3145 = vst [vmem:[#allocation3 + $0x1e0] sm:$0xff] %v3081
    %3146 = vst [vmem:[#allocation3 + $0x1e8] sm:$0xff] %v3082
    %3147 = vst [vmem:[#allocation3 + $0x1f0] sm:$0xff] %v3083
    %3148 = vst [vmem:[#allocation3 + $0x1f8] sm:$0xff] %v3084
    %s3149 = scalar_lea.vmem [#allocation4], 280
    %v3150 = vld [vmem:[%s3149] sm:$0xff]
    %v3151 = vld [vmem:[%s3149 + $0x8] sm:$0xff]
    %v3152 = vld [vmem:[%s3149 + $0x10] sm:$0xff]
    %v3153 = vld [vmem:[%s3149 + $0x18] sm:$0xff]
    %v3154 = vld [vmem:[%s3149 + $0x20] sm:$0xf]
    %v3156 = vsel %vm34, %v2087, 0
    %v3159 = vsel %vm34, %v2088, 0
    %v3162 = vsel %vm34, %v2123, 0
    %v3165 = vsel %vm34, %v2124, 0
    %v3168 = vsel %vm932, %v3154, 0
    %3170 = vmatpush.msra.mxu0 0.0
    %3171 = vmatpush.msra.mxu0 0.0
    %3172 = vmatpush.msra.mxu0 0.0
    %3173 = vmatpush.msra.mxu0 0.0
    %3174 = vmatpush.msra.mxu0 0.0
    %3175 = vmatpush.msra.mxu0 0.0
    %3176 = vmatpush.msra.mxu0 0.0
    %3177 = vmatpush.msra.mxu0 0.0
    %3178 = vmatpush.msra.mxu0 0.0
    %3179 = vmatpush.msra.mxu0 0.0
    %3180 = vmatpush.msra.mxu0 0.0
    %3181 = vmatpush.msra.mxu0 %v3168
    %3182 = vmatpush.msra.mxu0 %v3153
    %3183 = vmatpush.msra.mxu0 %v3152
    %3184 = vmatpush.msra.mxu0 %v3151
    %3185 = vmatpush.msra.mxu0 %v3150
    %3186 = vmatmul.f32.gmra.mxu0 %v2144
    %v3187 = vpop.f32.mrf.mxu0
    %v3188 = vadd.f32 0.0, %v3187
    %3189 = vmatmul.f32.gmra.mxu0 %v2147
    %v3190 = vpop.f32.mrf.mxu0
    %v3191 = vadd.f32 0.0, %v3190
    %3192 = vmatmul.f32.gmra.mxu0 %v2150
    %v3193 = vpop.f32.mrf.mxu0
    %v3194 = vadd.f32 0.0, %v3193
    %3195 = vmatmul.f32.gmra.mxu0 %v2153
    %v3196 = vpop.f32.mrf.mxu0
    %v3197 = vadd.f32 0.0, %v3196
    %3198 = vmatmul.f32.gmra.mxu0 %v2156
    %v3199 = vpop.f32.mrf.mxu0
    %v3200 = vadd.f32 0.0, %v3199
    %3201 = vmatmul.f32.gmra.mxu0 %v2159
    %v3202 = vpop.f32.mrf.mxu0
    %v3203 = vadd.f32 0.0, %v3202
    %3204 = vmatmul.f32.gmra.mxu0 %v2162
    %v3205 = vpop.f32.mrf.mxu0
    %v3206 = vadd.f32 0.0, %v3205
    %3207 = vmatmul.f32.gmra.mxu0 %v2165
    %v3208 = vpop.f32.mrf.mxu0
    %v3209 = vadd.f32 0.0, %v3208
    %3210 = vmatmul.f32.gmra.mxu0 %v2168
    %v3211 = vpop.f32.mrf.mxu0
    %v3212 = vadd.f32 0.0, %v3211
    %3213 = vmatmul.f32.gmra.mxu0 %v2171
    %v3214 = vpop.f32.mrf.mxu0
    %v3215 = vadd.f32 0.0, %v3214
    %3216 = vmatmul.f32.gmra.mxu0 %v2174
    %v3217 = vpop.f32.mrf.mxu0
    %v3218 = vadd.f32 0.0, %v3217
    %3219 = vmatmul.f32.gmra.mxu0 %v2177
    %v3220 = vpop.f32.mrf.mxu0
    %v3221 = vadd.f32 0.0, %v3220
    %3222 = vmatmul.f32.gmra.mxu0 %v2180
    %v3223 = vpop.f32.mrf.mxu0
    %v3224 = vadd.f32 0.0, %v3223
    %3225 = vmatmul.f32.gmra.mxu0 %v2183
    %v3226 = vpop.f32.mrf.mxu0
    %v3227 = vadd.f32 0.0, %v3226
    %3228 = vmatmul.f32.gmra.mxu0 %v2186
    %v3229 = vpop.f32.mrf.mxu0
    %v3230 = vadd.f32 0.0, %v3229
    %3231 = vmatmul.f32.gmra.mxu0 %v2189
    %v3232 = vpop.f32.mrf.mxu0
    %v3233 = vadd.f32 0.0, %v3232
    %3234 = vmatmul.f32.gmra.mxu0 %v2192
    %v3235 = vpop.f32.mrf.mxu0
    %v3236 = vadd.f32 0.0, %v3235
    %3237 = vmatmul.f32.gmra.mxu0 %v2195
    %v3238 = vpop.f32.mrf.mxu0
    %v3239 = vadd.f32 0.0, %v3238
    %3240 = vmatmul.f32.gmra.mxu0 %v2198
    %v3241 = vpop.f32.mrf.mxu0
    %v3242 = vadd.f32 0.0, %v3241
    %3243 = vmatmul.f32.gmra.mxu0 %v2201
    %v3244 = vpop.f32.mrf.mxu0
    %v3245 = vadd.f32 0.0, %v3244
    %3246 = vmatmul.f32.gmra.mxu0 %v2204
    %v3247 = vpop.f32.mrf.mxu0
    %v3248 = vadd.f32 0.0, %v3247
    %3249 = vmatmul.f32.gmra.mxu0 %v2207
    %v3250 = vpop.f32.mrf.mxu0
    %v3251 = vadd.f32 0.0, %v3250
    %3252 = vmatmul.f32.gmra.mxu0 %v2210
    %v3253 = vpop.f32.mrf.mxu0
    %v3254 = vadd.f32 0.0, %v3253
    %3255 = vmatmul.f32.gmra.mxu0 %v2213
    %v3256 = vpop.f32.mrf.mxu0
    %v3257 = vadd.f32 0.0, %v3256
    %3258 = vmatmul.f32.gmra.mxu0 %v2216
    %v3259 = vpop.f32.mrf.mxu0
    %v3260 = vadd.f32 0.0, %v3259
    %3261 = vmatmul.f32.gmra.mxu0 %v2219
    %v3262 = vpop.f32.mrf.mxu0
    %v3263 = vadd.f32 0.0, %v3262
    %3264 = vmatmul.f32.gmra.mxu0 %v2222
    %v3265 = vpop.f32.mrf.mxu0
    %v3266 = vadd.f32 0.0, %v3265
    %3267 = vmatmul.f32.gmra.mxu0 %v2225
    %v3268 = vpop.f32.mrf.mxu0
    %v3269 = vadd.f32 0.0, %v3268
    %3270 = vmatmul.f32.gmra.mxu0 %v2734
    %v3271 = vpop.f32.mrf.mxu0
    %v3272 = vadd.f32 0.0, %v3271
    %3273 = vmatmul.f32.gmra.mxu0 %v2737
    %v3274 = vpop.f32.mrf.mxu0
    %v3275 = vadd.f32 0.0, %v3274
    %3276 = vmatmul.f32.gmra.mxu0 %v3156
    %v3277 = vpop.f32.mrf.mxu0
    %v3278 = vadd.f32 0.0, %v3277
    %3279 = vmatmul.f32.gmra.mxu0 %v3159
    %v3280 = vpop.f32.mrf.mxu0
    %v3281 = vadd.f32 0.0, %v3280
    %3282 = vmatmul.f32.gmra.mxu0 %v2240
    %v3283 = vpop.f32.mrf.mxu0
    %v3284 = vadd.f32 0.0, %v3283
    %3285 = vmatmul.f32.gmra.mxu0 %v2243
    %v3286 = vpop.f32.mrf.mxu0
    %v3287 = vadd.f32 0.0, %v3286
    %3288 = vmatmul.f32.gmra.mxu0 %v2246
    %v3289 = vpop.f32.mrf.mxu0
    %v3290 = vadd.f32 0.0, %v3289
    %3291 = vmatmul.f32.gmra.mxu0 %v2249
    %v3292 = vpop.f32.mrf.mxu0
    %v3293 = vadd.f32 0.0, %v3292
    %3294 = vmatmul.f32.gmra.mxu0 %v2252
    %v3295 = vpop.f32.mrf.mxu0
    %v3296 = vadd.f32 0.0, %v3295
    %3297 = vmatmul.f32.gmra.mxu0 %v2255
    %v3298 = vpop.f32.mrf.mxu0
    %v3299 = vadd.f32 0.0, %v3298
    %3300 = vmatmul.f32.gmra.mxu0 %v2258
    %v3301 = vpop.f32.mrf.mxu0
    %v3302 = vadd.f32 0.0, %v3301
    %3303 = vmatmul.f32.gmra.mxu0 %v2261
    %v3304 = vpop.f32.mrf.mxu0
    %v3305 = vadd.f32 0.0, %v3304
    %3306 = vmatmul.f32.gmra.mxu0 %v2264
    %v3307 = vpop.f32.mrf.mxu0
    %v3308 = vadd.f32 0.0, %v3307
    %3309 = vmatmul.f32.gmra.mxu0 %v2267
    %v3310 = vpop.f32.mrf.mxu0
    %v3311 = vadd.f32 0.0, %v3310
    %3312 = vmatmul.f32.gmra.mxu0 %v2270
    %v3313 = vpop.f32.mrf.mxu0
    %v3314 = vadd.f32 0.0, %v3313
    %3315 = vmatmul.f32.gmra.mxu0 %v2273
    %v3316 = vpop.f32.mrf.mxu0
    %v3317 = vadd.f32 0.0, %v3316
    %3318 = vmatmul.f32.gmra.mxu0 %v2276
    %v3319 = vpop.f32.mrf.mxu0
    %v3320 = vadd.f32 0.0, %v3319
    %3321 = vmatmul.f32.gmra.mxu0 %v2279
    %v3322 = vpop.f32.mrf.mxu0
    %v3323 = vadd.f32 0.0, %v3322
    %3324 = vmatmul.f32.gmra.mxu0 %v2282
    %v3325 = vpop.f32.mrf.mxu0
    %v3326 = vadd.f32 0.0, %v3325
    %3327 = vmatmul.f32.gmra.mxu0 %v2285
    %v3328 = vpop.f32.mrf.mxu0
    %v3329 = vadd.f32 0.0, %v3328
    %3330 = vmatmul.f32.gmra.mxu0 %v2288
    %v3331 = vpop.f32.mrf.mxu0
    %v3332 = vadd.f32 0.0, %v3331
    %3333 = vmatmul.f32.gmra.mxu0 %v2291
    %v3334 = vpop.f32.mrf.mxu0
    %v3335 = vadd.f32 0.0, %v3334
    %3336 = vmatmul.f32.gmra.mxu0 %v2294
    %v3337 = vpop.f32.mrf.mxu0
    %v3338 = vadd.f32 0.0, %v3337
    %3339 = vmatmul.f32.gmra.mxu0 %v2297
    %v3340 = vpop.f32.mrf.mxu0
    %v3341 = vadd.f32 0.0, %v3340
    %3342 = vmatmul.f32.gmra.mxu0 %v2300
    %v3343 = vpop.f32.mrf.mxu0
    %v3344 = vadd.f32 0.0, %v3343
    %3345 = vmatmul.f32.gmra.mxu0 %v2303
    %v3346 = vpop.f32.mrf.mxu0
    %v3347 = vadd.f32 0.0, %v3346
    %3348 = vmatmul.f32.gmra.mxu0 %v2306
    %v3349 = vpop.f32.mrf.mxu0
    %v3350 = vadd.f32 0.0, %v3349
    %3351 = vmatmul.f32.gmra.mxu0 %v2309
    %v3352 = vpop.f32.mrf.mxu0
    %v3353 = vadd.f32 0.0, %v3352
    %3354 = vmatmul.f32.gmra.mxu0 %v2312
    %v3355 = vpop.f32.mrf.mxu0
    %v3356 = vadd.f32 0.0, %v3355
    %3357 = vmatmul.f32.gmra.mxu0 %v2315
    %v3358 = vpop.f32.mrf.mxu0
    %v3359 = vadd.f32 0.0, %v3358
    %3360 = vmatmul.f32.gmra.mxu0 %v2318
    %v3361 = vpop.f32.mrf.mxu0
    %v3362 = vadd.f32 0.0, %v3361
    %3363 = vmatmul.f32.gmra.mxu0 %v2321
    %v3364 = vpop.f32.mrf.mxu0
    %v3365 = vadd.f32 0.0, %v3364
    %3366 = vmatmul.f32.gmra.mxu0 %v2740
    %v3367 = vpop.f32.mrf.mxu0
    %v3368 = vadd.f32 0.0, %v3367
    %3369 = vmatmul.f32.gmra.mxu0 %v2743
    %v3370 = vpop.f32.mrf.mxu0
    %v3371 = vadd.f32 0.0, %v3370
    %3372 = vmatmul.f32.gmra.mxu0 %v3162
    %v3373 = vpop.f32.mrf.mxu0
    %v3374 = vadd.f32 0.0, %v3373
    %3375 = vmatmul.f32.gmra.mxu0 %v3165
    %v3376 = vpop.f32.mrf.mxu0
    %v3377 = vadd.f32 0.0, %v3376
    %3378 = vdwg.mxu0
    %v3379 = vld [vmem:[#allocation3] sm:$0xff]
    %v3380 = vld [vmem:[#allocation3 + $0x8] sm:$0xff]
    %v3381 = vld [vmem:[#allocation3 + $0x10] sm:$0xff]
    %v3382 = vld [vmem:[#allocation3 + $0x18] sm:$0xff]
    %v3383 = vld [vmem:[#allocation3 + $0x20] sm:$0xff]
    %v3384 = vld [vmem:[#allocation3 + $0x28] sm:$0xff]
    %v3385 = vld [vmem:[#allocation3 + $0x30] sm:$0xff]
    %v3386 = vld [vmem:[#allocation3 + $0x38] sm:$0xff]
    %v3387 = vld [vmem:[#allocation3 + $0x40] sm:$0xff]
    %v3388 = vld [vmem:[#allocation3 + $0x48] sm:$0xff]
    %v3389 = vld [vmem:[#allocation3 + $0x50] sm:$0xff]
    %v3390 = vld [vmem:[#allocation3 + $0x58] sm:$0xff]
    %v3391 = vld [vmem:[#allocation3 + $0x60] sm:$0xff]
    %v3392 = vld [vmem:[#allocation3 + $0x68] sm:$0xff]
    %v3393 = vld [vmem:[#allocation3 + $0x70] sm:$0xff]
    %v3394 = vld [vmem:[#allocation3 + $0x78] sm:$0xff]
    %v3395 = vld [vmem:[#allocation3 + $0x80] sm:$0xff]
    %v3396 = vld [vmem:[#allocation3 + $0x88] sm:$0xff]
    %v3397 = vld [vmem:[#allocation3 + $0x90] sm:$0xff]
    %v3398 = vld [vmem:[#allocation3 + $0x98] sm:$0xff]
    %v3399 = vld [vmem:[#allocation3 + $0xa0] sm:$0xff]
    %v3400 = vld [vmem:[#allocation3 + $0xa8] sm:$0xff]
    %v3401 = vld [vmem:[#allocation3 + $0xb0] sm:$0xff]
    %v3402 = vld [vmem:[#allocation3 + $0xb8] sm:$0xff]
    %v3403 = vld [vmem:[#allocation3 + $0xc0] sm:$0xff]
    %v3404 = vld [vmem:[#allocation3 + $0xc8] sm:$0xff]
    %v3405 = vld [vmem:[#allocation3 + $0xd0] sm:$0xff]
    %v3406 = vld [vmem:[#allocation3 + $0xd8] sm:$0xff]
    %v3407 = vld [vmem:[#allocation3 + $0xe0] sm:$0xff]
    %v3408 = vld [vmem:[#allocation3 + $0xe8] sm:$0xff]
    %v3409 = vld [vmem:[#allocation3 + $0xf0] sm:$0xff]
    %v3410 = vld [vmem:[#allocation3 + $0xf8] sm:$0xff]
    %v3411 = vld [vmem:[#allocation3 + $0x100] sm:$0xff]
    %v3412 = vld [vmem:[#allocation3 + $0x108] sm:$0xff]
    %v3413 = vld [vmem:[#allocation3 + $0x110] sm:$0xff]
    %v3414 = vld [vmem:[#allocation3 + $0x118] sm:$0xff]
    %v3415 = vld [vmem:[#allocation3 + $0x120] sm:$0xff]
    %v3416 = vld [vmem:[#allocation3 + $0x128] sm:$0xff]
    %v3417 = vld [vmem:[#allocation3 + $0x130] sm:$0xff]
    %v3418 = vld [vmem:[#allocation3 + $0x138] sm:$0xff]
    %v3419 = vld [vmem:[#allocation3 + $0x140] sm:$0xff]
    %v3420 = vld [vmem:[#allocation3 + $0x148] sm:$0xff]
    %v3421 = vld [vmem:[#allocation3 + $0x150] sm:$0xff]
    %v3422 = vld [vmem:[#allocation3 + $0x158] sm:$0xff]
    %v3423 = vld [vmem:[#allocation3 + $0x160] sm:$0xff]
    %v3424 = vld [vmem:[#allocation3 + $0x168] sm:$0xff]
    %v3425 = vld [vmem:[#allocation3 + $0x170] sm:$0xff]
    %v3426 = vld [vmem:[#allocation3 + $0x178] sm:$0xff]
    %v3427 = vld [vmem:[#allocation3 + $0x180] sm:$0xff]
    %v3428 = vld [vmem:[#allocation3 + $0x188] sm:$0xff]
    %v3429 = vld [vmem:[#allocation3 + $0x190] sm:$0xff]
    %v3430 = vld [vmem:[#allocation3 + $0x198] sm:$0xff]
    %v3431 = vld [vmem:[#allocation3 + $0x1a0] sm:$0xff]
    %v3432 = vld [vmem:[#allocation3 + $0x1a8] sm:$0xff]
    %v3433 = vld [vmem:[#allocation3 + $0x1b0] sm:$0xff]
    %v3434 = vld [vmem:[#allocation3 + $0x1b8] sm:$0xff]
    %v3435 = vld [vmem:[#allocation3 + $0x1c0] sm:$0xff]
    %v3436 = vld [vmem:[#allocation3 + $0x1c8] sm:$0xff]
    %v3437 = vld [vmem:[#allocation3 + $0x1d0] sm:$0xff]
    %v3438 = vld [vmem:[#allocation3 + $0x1d8] sm:$0xff]
    %v3439 = vld [vmem:[#allocation3 + $0x1e0] sm:$0xff]
    %v3440 = vld [vmem:[#allocation3 + $0x1e8] sm:$0xff]
    %v3441 = vld [vmem:[#allocation3 + $0x1f0] sm:$0xff]
    %v3442 = vld [vmem:[#allocation3 + $0x1f8] sm:$0xff]
    %v3443 = vadd.f32 %v3379, %v3188
    %v3444 = vadd.f32 %v3380, %v3191
    %v3445 = vadd.f32 %v3381, %v3194
    %v3446 = vadd.f32 %v3382, %v3197
    %v3447 = vadd.f32 %v3383, %v3200
    %v3448 = vadd.f32 %v3384, %v3203
    %v3449 = vadd.f32 %v3385, %v3206
    %v3450 = vadd.f32 %v3386, %v3209
    %v3451 = vadd.f32 %v3387, %v3212
    %v3452 = vadd.f32 %v3388, %v3215
    %v3453 = vadd.f32 %v3389, %v3218
    %v3454 = vadd.f32 %v3390, %v3221
    %v3455 = vadd.f32 %v3391, %v3224
    %v3456 = vadd.f32 %v3392, %v3227
    %v3457 = vadd.f32 %v3393, %v3230
    %v3458 = vadd.f32 %v3394, %v3233
    %v3459 = vadd.f32 %v3395, %v3236
    %v3460 = vadd.f32 %v3396, %v3239
    %v3461 = vadd.f32 %v3397, %v3242
    %v3462 = vadd.f32 %v3398, %v3245
    %v3463 = vadd.f32 %v3399, %v3248
    %v3464 = vadd.f32 %v3400, %v3251
    %v3465 = vadd.f32 %v3401, %v3254
    %v3466 = vadd.f32 %v3402, %v3257
    %v3467 = vadd.f32 %v3403, %v3260
    %v3468 = vadd.f32 %v3404, %v3263
    %v3469 = vadd.f32 %v3405, %v3266
    %v3470 = vadd.f32 %v3406, %v3269
    %v3471 = vadd.f32 %v3407, %v3272
    %v3472 = vadd.f32 %v3408, %v3275
    %v3473 = vadd.f32 %v3409, %v3278
    %v3474 = vadd.f32 %v3410, %v3281
    %v3475 = vadd.f32 %v3411, %v3284
    %v3476 = vadd.f32 %v3412, %v3287
    %v3477 = vadd.f32 %v3413, %v3290
    %v3478 = vadd.f32 %v3414, %v3293
    %v3479 = vadd.f32 %v3415, %v3296
    %v3480 = vadd.f32 %v3416, %v3299
    %v3481 = vadd.f32 %v3417, %v3302
    %v3482 = vadd.f32 %v3418, %v3305
    %v3483 = vadd.f32 %v3419, %v3308
    %v3484 = vadd.f32 %v3420, %v3311
    %v3485 = vadd.f32 %v3421, %v3314
    %v3486 = vadd.f32 %v3422, %v3317
    %v3487 = vadd.f32 %v3423, %v3320
    %v3488 = vadd.f32 %v3424, %v3323
    %v3489 = vadd.f32 %v3425, %v3326
    %v3490 = vadd.f32 %v3426, %v3329
    %v3491 = vadd.f32 %v3427, %v3332
    %v3492 = vadd.f32 %v3428, %v3335
    %v3493 = vadd.f32 %v3429, %v3338
    %v3494 = vadd.f32 %v3430, %v3341
    %v3495 = vadd.f32 %v3431, %v3344
    %v3496 = vadd.f32 %v3432, %v3347
    %v3497 = vadd.f32 %v3433, %v3350
    %v3498 = vadd.f32 %v3434, %v3353
    %v3499 = vadd.f32 %v3435, %v3356
    %v3500 = vadd.f32 %v3436, %v3359
    %v3501 = vadd.f32 %v3437, %v3362
    %v3502 = vadd.f32 %v3438, %v3365
    %v3503 = vadd.f32 %v3439, %v3368
    %v3504 = vadd.f32 %v3440, %v3371
    %v3505 = vadd.f32 %v3441, %v3374
    %v3506 = vadd.f32 %v3442, %v3377
    %3507 = vst [vmem:[#allocation3] sm:$0xff] %v3443
    %3508 = vst [vmem:[#allocation3 + $0x8] sm:$0xff] %v3444
    %3509 = vst [vmem:[#allocation3 + $0x10] sm:$0xff] %v3445
    %3510 = vst [vmem:[#allocation3 + $0x18] sm:$0xff] %v3446
    %3511 = vst [vmem:[#allocation3 + $0x20] sm:$0xff] %v3447
    %3512 = vst [vmem:[#allocation3 + $0x28] sm:$0xff] %v3448
    %3513 = vst [vmem:[#allocation3 + $0x30] sm:$0xff] %v3449
    %3514 = vst [vmem:[#allocation3 + $0x38] sm:$0xff] %v3450
    %3515 = vst [vmem:[#allocation3 + $0x40] sm:$0xff] %v3451
    %3516 = vst [vmem:[#allocation3 + $0x48] sm:$0xff] %v3452
    %3517 = vst [vmem:[#allocation3 + $0x50] sm:$0xff] %v3453
    %3518 = vst [vmem:[#allocation3 + $0x58] sm:$0xff] %v3454
    %3519 = vst [vmem:[#allocation3 + $0x60] sm:$0xff] %v3455
    %3520 = vst [vmem:[#allocation3 + $0x68] sm:$0xff] %v3456
    %3521 = vst [vmem:[#allocation3 + $0x70] sm:$0xff] %v3457
    %3522 = vst [vmem:[#allocation3 + $0x78] sm:$0xff] %v3458
    %3523 = vst [vmem:[#allocation3 + $0x80] sm:$0xff] %v3459
    %3524 = vst [vmem:[#allocation3 + $0x88] sm:$0xff] %v3460
    %3525 = vst [vmem:[#allocation3 + $0x90] sm:$0xff] %v3461
    %3526 = vst [vmem:[#allocation3 + $0x98] sm:$0xff] %v3462
    %3527 = vst [vmem:[#allocation3 + $0xa0] sm:$0xff] %v3463
    %3528 = vst [vmem:[#allocation3 + $0xa8] sm:$0xff] %v3464
    %3529 = vst [vmem:[#allocation3 + $0xb0] sm:$0xff] %v3465
    %3530 = vst [vmem:[#allocation3 + $0xb8] sm:$0xff] %v3466
    %3531 = vst [vmem:[#allocation3 + $0xc0] sm:$0xff] %v3467
    %3532 = vst [vmem:[#allocation3 + $0xc8] sm:$0xff] %v3468
    %3533 = vst [vmem:[#allocation3 + $0xd0] sm:$0xff] %v3469
    %3534 = vst [vmem:[#allocation3 + $0xd8] sm:$0xff] %v3470
    %3535 = vst [vmem:[#allocation3 + $0xe0] sm:$0xff] %v3471
    %3536 = vst [vmem:[#allocation3 + $0xe8] sm:$0xff] %v3472
    %3537 = vst [vmem:[#allocation3 + $0xf0] sm:$0xff] %v3473
    %3538 = vst [vmem:[#allocation3 + $0xf8] sm:$0xff] %v3474
    %3539 = vst [vmem:[#allocation3 + $0x100] sm:$0xff] %v3475
    %3540 = vst [vmem:[#allocation3 + $0x108] sm:$0xff] %v3476
    %3541 = vst [vmem:[#allocation3 + $0x110] sm:$0xff] %v3477
    %3542 = vst [vmem:[#allocation3 + $0x118] sm:$0xff] %v3478
    %3543 = vst [vmem:[#allocation3 + $0x120] sm:$0xff] %v3479
    %3544 = vst [vmem:[#allocation3 + $0x128] sm:$0xff] %v3480
    %3545 = vst [vmem:[#allocation3 + $0x130] sm:$0xff] %v3481
    %3546 = vst [vmem:[#allocation3 + $0x138] sm:$0xff] %v3482
    %3547 = vst [vmem:[#allocation3 + $0x140] sm:$0xff] %v3483
    %3548 = vst [vmem:[#allocation3 + $0x148] sm:$0xff] %v3484
    %3549 = vst [vmem:[#allocation3 + $0x150] sm:$0xff] %v3485
    %3550 = vst [vmem:[#allocation3 + $0x158] sm:$0xff] %v3486
    %3551 = vst [vmem:[#allocation3 + $0x160] sm:$0xff] %v3487
    %3552 = vst [vmem:[#allocation3 + $0x168] sm:$0xff] %v3488
    %3553 = vst [vmem:[#allocation3 + $0x170] sm:$0xff] %v3489
    %3554 = vst [vmem:[#allocation3 + $0x178] sm:$0xff] %v3490
    %3555 = vst [vmem:[#allocation3 + $0x180] sm:$0xff] %v3491
    %3556 = vst [vmem:[#allocation3 + $0x188] sm:$0xff] %v3492
    %3557 = vst [vmem:[#allocation3 + $0x190] sm:$0xff] %v3493
    %3558 = vst [vmem:[#allocation3 + $0x198] sm:$0xff] %v3494
    %3559 = vst [vmem:[#allocation3 + $0x1a0] sm:$0xff] %v3495
    %3560 = vst [vmem:[#allocation3 + $0x1a8] sm:$0xff] %v3496
    %3561 = vst [vmem:[#allocation3 + $0x1b0] sm:$0xff] %v3497
    %3562 = vst [vmem:[#allocation3 + $0x1b8] sm:$0xff] %v3498
    %3563 = vst [vmem:[#allocation3 + $0x1c0] sm:$0xff] %v3499
    %3564 = vst [vmem:[#allocation3 + $0x1c8] sm:$0xff] %v3500
    %3565 = vst [vmem:[#allocation3 + $0x1d0] sm:$0xff] %v3501
    %3566 = vst [vmem:[#allocation3 + $0x1d8] sm:$0xff] %v3502
    %3567 = vst [vmem:[#allocation3 + $0x1e0] sm:$0xff] %v3503
    %3568 = vst [vmem:[#allocation3 + $0x1e8] sm:$0xff] %v3504
    %3569 = vst [vmem:[#allocation3 + $0x1f0] sm:$0xff] %v3505
    %3570 = vst [vmem:[#allocation3 + $0x1f8] sm:$0xff] %v3506
    %v3571 = vld [vmem:[#allocation2 + $0x2] sm:$0xff]
    %v3572 = vld [vmem:[#allocation2 + $0xa] sm:$0xff]
    %v3573 = vld [vmem:[#allocation2 + $0x1a] sm:$0xff]
    %v3574 = vld [vmem:[#allocation2 + $0x22] sm:$0xff]
    %v3575 = vld [vmem:[#allocation2 + $0x32] sm:$0xff]
    %v3576 = vld [vmem:[#allocation2 + $0x3a] sm:$0xff]
    %v3577 = vld [vmem:[#allocation2 + $0x4a] sm:$0xff]
    %v3578 = vld [vmem:[#allocation2 + $0x52] sm:$0xff]
    %v3579 = vld [vmem:[#allocation2 + $0x62] sm:$0xff]
    %v3580 = vld [vmem:[#allocation2 + $0x6a] sm:$0xff]
    %v3581 = vld [vmem:[#allocation2 + $0x7a] sm:$0xff]
    %v3582 = vld [vmem:[#allocation2 + $0x82] sm:$0xff]
    %v3583 = vld [vmem:[#allocation2 + $0x92] sm:$0xff]
    %v3584 = vld [vmem:[#allocation2 + $0x9a] sm:$0xff]
    %v3585 = vld [vmem:[#allocation2 + $0xaa] sm:$0xff]
    %v3586 = vld [vmem:[#allocation2 + $0xb2] sm:$0xff]
    %v3587 = vld [vmem:[#allocation2 + $0xc2] sm:$0xff]
    %v3588 = vld [vmem:[#allocation2 + $0xca] sm:$0xff]
    %v3589 = vld [vmem:[#allocation2 + $0xda] sm:$0xff]
    %v3590 = vld [vmem:[#allocation2 + $0xe2] sm:$0xff]
    %v3591 = vld [vmem:[#allocation2 + $0xf2] sm:$0xff]
    %v3592 = vld [vmem:[#allocation2 + $0xfa] sm:$0xff]
    %v3593 = vld [vmem:[#allocation2 + $0x10a] sm:$0xff]
    %v3594 = vld [vmem:[#allocation2 + $0x112] sm:$0xff]
    %v3595 = vld [vmem:[#allocation2 + $0x122] sm:$0xff]
    %v3596 = vld [vmem:[#allocation2 + $0x12a] sm:$0xff]
    %v3597 = vld [vmem:[#allocation2 + $0x13a] sm:$0xff]
    %v3598 = vld [vmem:[#allocation2 + $0x142] sm:$0xff]
    %v3599 = vld [vmem:[#allocation2 + $0x152] sm:$0xff]
    %v3600 = vld [vmem:[#allocation2 + $0x15a] sm:$0xff]
    %v3601 = vld [vmem:[#allocation2 + $0x16a] sm:$0xff]
    %v3602 = vld [vmem:[#allocation2 + $0x172] sm:$0xff]
    %v3603 = vld [vmem:[#allocation2 + $0x182] sm:$0xff]
    %v3604 = vld [vmem:[#allocation2 + $0x18a] sm:$0xff]
    %v3605 = vld [vmem:[#allocation2 + $0x19a] sm:$0xff]
    %v3606 = vld [vmem:[#allocation2 + $0x1a2] sm:$0xff]
    %v3607 = vld [vmem:[#allocation2 + $0x1b2] sm:$0xff]
    %v3608 = vld [vmem:[#allocation2 + $0x1ba] sm:$0xff]
    %v3609 = vld [vmem:[#allocation2 + $0x1ca] sm:$0xff]
    %v3610 = vld [vmem:[#allocation2 + $0x1d2] sm:$0xff]
    %v3611 = vld [vmem:[#allocation2 + $0x1e2] sm:$0xff]
    %v3612 = vld [vmem:[#allocation2 + $0x1ea] sm:$0xff]
    %v3613 = vld [vmem:[#allocation2 + $0x1fa] sm:$0xff]
    %v3614 = vld [vmem:[#allocation2 + $0x202] sm:$0xff]
    %v3615 = vld [vmem:[#allocation2 + $0x212] sm:$0xff]
    %v3616 = vld [vmem:[#allocation2 + $0x21a] sm:$0xff]
    %v3617 = vld [vmem:[#allocation2 + $0x22a] sm:$0xff]
    %v3618 = vld [vmem:[#allocation2 + $0x232] sm:$0xff]
    %v3619 = vld [vmem:[#allocation2 + $0x242] sm:$0xff]
    %v3620 = vld [vmem:[#allocation2 + $0x24a] sm:$0xff]
    %v3621 = vld [vmem:[#allocation2 + $0x25a] sm:$0xff]
    %v3622 = vld [vmem:[#allocation2 + $0x262] sm:$0xff]
    %v3623 = vld [vmem:[#allocation2 + $0x272] sm:$0xff]
    %v3624 = vld [vmem:[#allocation2 + $0x27a] sm:$0xff]
    %v3625 = vld [vmem:[#allocation2 + $0x28a] sm:$0xff]
    %v3626 = vld [vmem:[#allocation2 + $0x292] sm:$0xff]
    %v3627 = vld [vmem:[#allocation2 + $0x2a2] sm:$0xff]
    %v3628 = vld [vmem:[#allocation2 + $0x2aa] sm:$0xff]
    %v3629 = vld [vmem:[#allocation2 + $0x2ba] sm:$0xff]
    %v3630 = vld [vmem:[#allocation2 + $0x2c2] sm:$0xff]
    %v3631 = vld [vmem:[#allocation2 + $0x2d2] sm:$0xff]
    %v3632 = vld [vmem:[#allocation2 + $0x2da] sm:$0xff]
    %v3633 = vld [vmem:[#allocation2 + $0x2ea] sm:$0xff]
    %v3634 = vld [vmem:[#allocation2 + $0x2f2] sm:$0xff]
    %v3635 = vld [vmem:[#allocation2 + $0x302] sm:$0xff]
    %v3636 = vld [vmem:[#allocation2 + $0x30a] sm:$0xff]
    %v3637 = vld [vmem:[#allocation2 + $0x31a] sm:$0xff]
    %v3638 = vld [vmem:[#allocation2 + $0x322] sm:$0xff]
    %v3639 = vld [vmem:[#allocation2 + $0x332] sm:$0xff]
    %v3640 = vld [vmem:[#allocation2 + $0x33a] sm:$0xff]
    %v3641 = vld [vmem:[#allocation2 + $0x34a] sm:$0xff]
    %v3642 = vld [vmem:[#allocation2 + $0x352] sm:$0xff]
    %s3643 = scalar_lea.vmem [#allocation4], 80
    %v3644 = vld [vmem:[%s3643] sm:$0xff]
    %v3645 = vld [vmem:[%s3643 + $0x8] sm:$0xff]
    %v3646 = vld [vmem:[%s3643 + $0x10] sm:$0xff]
    %v3647 = vld [vmem:[%s3643 + $0x18] sm:$0xff]
    %v3648 = vld [vmem:[%s3643 + $0x20] sm:$0xf]
    %v3650 = vsel %vm34, %v3571, 0
    %v3653 = vsel %vm34, %v3572, 0
    %v3656 = vsel %vm34, %v3573, 0
    %v3659 = vsel %vm34, %v3574, 0
    %v3662 = vsel %vm34, %v3575, 0
    %v3665 = vsel %vm34, %v3576, 0
    %v3668 = vsel %vm34, %v3577, 0
    %v3671 = vsel %vm34, %v3578, 0
    %v3674 = vsel %vm34, %v3579, 0
    %v3677 = vsel %vm34, %v3580, 0
    %v3680 = vsel %vm34, %v3581, 0
    %v3683 = vsel %vm34, %v3582, 0
    %v3686 = vsel %vm34, %v3583, 0
    %v3689 = vsel %vm34, %v3584, 0
    %v3692 = vsel %vm34, %v3585, 0
    %v3695 = vsel %vm34, %v3586, 0
    %v3698 = vsel %vm34, %v3587, 0
    %v3701 = vsel %vm34, %v3588, 0
    %v3704 = vsel %vm34, %v3589, 0
    %v3707 = vsel %vm34, %v3590, 0
    %v3710 = vsel %vm34, %v3591, 0
    %v3713 = vsel %vm34, %v3592, 0
    %v3716 = vsel %vm34, %v3593, 0
    %v3719 = vsel %vm34, %v3594, 0
    %v3722 = vsel %vm34, %v3595, 0
    %v3725 = vsel %vm34, %v3596, 0
    %v3728 = vsel %vm34, %v3597, 0
    %v3731 = vsel %vm34, %v3598, 0
    %v3734 = vsel %vm34, %v3599, 0
    %v3737 = vsel %vm34, %v3600, 0
    %v3740 = vsel %vm34, %v3601, 0
    %v3743 = vsel %vm34, %v3602, 0
    %v3746 = vsel %vm34, %v3607, 0
    %v3749 = vsel %vm34, %v3608, 0
    %v3752 = vsel %vm34, %v3609, 0
    %v3755 = vsel %vm34, %v3610, 0
    %v3758 = vsel %vm34, %v3611, 0
    %v3761 = vsel %vm34, %v3612, 0
    %v3764 = vsel %vm34, %v3613, 0
    %v3767 = vsel %vm34, %v3614, 0
    %v3770 = vsel %vm34, %v3615, 0
    %v3773 = vsel %vm34, %v3616, 0
    %v3776 = vsel %vm34, %v3617, 0
    %v3779 = vsel %vm34, %v3618, 0
    %v3782 = vsel %vm34, %v3619, 0
    %v3785 = vsel %vm34, %v3620, 0
    %v3788 = vsel %vm34, %v3621, 0
    %v3791 = vsel %vm34, %v3622, 0
    %v3794 = vsel %vm34, %v3623, 0
    %v3797 = vsel %vm34, %v3624, 0
    %v3800 = vsel %vm34, %v3625, 0
    %v3803 = vsel %vm34, %v3626, 0
    %v3806 = vsel %vm34, %v3627, 0
    %v3809 = vsel %vm34, %v3628, 0
    %v3812 = vsel %vm34, %v3629, 0
    %v3815 = vsel %vm34, %v3630, 0
    %v3818 = vsel %vm34, %v3631, 0
    %v3821 = vsel %vm34, %v3632, 0
    %v3824 = vsel %vm34, %v3633, 0
    %v3827 = vsel %vm34, %v3634, 0
    %v3830 = vsel %vm34, %v3635, 0
    %v3833 = vsel %vm34, %v3636, 0
    %v3836 = vsel %vm34, %v3637, 0
    %v3839 = vsel %vm34, %v3638, 0
    %v3842 = vsel %vm932, %v3648, 0
    %3844 = vmatpush.msra.mxu0 0.0
    %3845 = vmatpush.msra.mxu0 0.0
    %3846 = vmatpush.msra.mxu0 0.0
    %3847 = vmatpush.msra.mxu0 0.0
    %3848 = vmatpush.msra.mxu0 0.0
    %3849 = vmatpush.msra.mxu0 0.0
    %3850 = vmatpush.msra.mxu0 0.0
    %3851 = vmatpush.msra.mxu0 0.0
    %3852 = vmatpush.msra.mxu0 0.0
    %3853 = vmatpush.msra.mxu0 0.0
    %3854 = vmatpush.msra.mxu0 0.0
    %3855 = vmatpush.msra.mxu0 %v3842
    %3856 = vmatpush.msra.mxu0 %v3647
    %3857 = vmatpush.msra.mxu0 %v3646
    %3858 = vmatpush.msra.mxu0 %v3645
    %3859 = vmatpush.msra.mxu0 %v3644
    %3860 = vmatmul.f32.gmra.mxu0 %v3650
    %v3861 = vpop.f32.mrf.mxu0
    %v3862 = vadd.f32 0.0, %v3861
    %3863 = vmatmul.f32.gmra.mxu0 %v3653
    %v3864 = vpop.f32.mrf.mxu0
    %v3865 = vadd.f32 0.0, %v3864
    %3866 = vmatmul.f32.gmra.mxu0 %v3656
    %v3867 = vpop.f32.mrf.mxu0
    %v3868 = vadd.f32 0.0, %v3867
    %3869 = vmatmul.f32.gmra.mxu0 %v3659
    %v3870 = vpop.f32.mrf.mxu0
    %v3871 = vadd.f32 0.0, %v3870
    %3872 = vmatmul.f32.gmra.mxu0 %v3662
    %v3873 = vpop.f32.mrf.mxu0
    %v3874 = vadd.f32 0.0, %v3873
    %3875 = vmatmul.f32.gmra.mxu0 %v3665
    %v3876 = vpop.f32.mrf.mxu0
    %v3877 = vadd.f32 0.0, %v3876
    %3878 = vmatmul.f32.gmra.mxu0 %v3668
    %v3879 = vpop.f32.mrf.mxu0
    %v3880 = vadd.f32 0.0, %v3879
    %3881 = vmatmul.f32.gmra.mxu0 %v3671
    %v3882 = vpop.f32.mrf.mxu0
    %v3883 = vadd.f32 0.0, %v3882
    %3884 = vmatmul.f32.gmra.mxu0 %v3674
    %v3885 = vpop.f32.mrf.mxu0
    %v3886 = vadd.f32 0.0, %v3885
    %3887 = vmatmul.f32.gmra.mxu0 %v3677
    %v3888 = vpop.f32.mrf.mxu0
    %v3889 = vadd.f32 0.0, %v3888
    %3890 = vmatmul.f32.gmra.mxu0 %v3680
    %v3891 = vpop.f32.mrf.mxu0
    %v3892 = vadd.f32 0.0, %v3891
    %3893 = vmatmul.f32.gmra.mxu0 %v3683
    %v3894 = vpop.f32.mrf.mxu0
    %v3895 = vadd.f32 0.0, %v3894
    %3896 = vmatmul.f32.gmra.mxu0 %v3686
    %v3897 = vpop.f32.mrf.mxu0
    %v3898 = vadd.f32 0.0, %v3897
    %3899 = vmatmul.f32.gmra.mxu0 %v3689
    %v3900 = vpop.f32.mrf.mxu0
    %v3901 = vadd.f32 0.0, %v3900
    %3902 = vmatmul.f32.gmra.mxu0 %v3692
    %v3903 = vpop.f32.mrf.mxu0
    %v3904 = vadd.f32 0.0, %v3903
    %3905 = vmatmul.f32.gmra.mxu0 %v3695
    %v3906 = vpop.f32.mrf.mxu0
    %v3907 = vadd.f32 0.0, %v3906
    %3908 = vmatmul.f32.gmra.mxu0 %v3698
    %v3909 = vpop.f32.mrf.mxu0
    %v3910 = vadd.f32 0.0, %v3909
    %3911 = vmatmul.f32.gmra.mxu0 %v3701
    %v3912 = vpop.f32.mrf.mxu0
    %v3913 = vadd.f32 0.0, %v3912
    %3914 = vmatmul.f32.gmra.mxu0 %v3704
    %v3915 = vpop.f32.mrf.mxu0
    %v3916 = vadd.f32 0.0, %v3915
    %3917 = vmatmul.f32.gmra.mxu0 %v3707
    %v3918 = vpop.f32.mrf.mxu0
    %v3919 = vadd.f32 0.0, %v3918
    %3920 = vmatmul.f32.gmra.mxu0 %v3710
    %v3921 = vpop.f32.mrf.mxu0
    %v3922 = vadd.f32 0.0, %v3921
    %3923 = vmatmul.f32.gmra.mxu0 %v3713
    %v3924 = vpop.f32.mrf.mxu0
    %v3925 = vadd.f32 0.0, %v3924
    %3926 = vmatmul.f32.gmra.mxu0 %v3716
    %v3927 = vpop.f32.mrf.mxu0
    %v3928 = vadd.f32 0.0, %v3927
    %3929 = vmatmul.f32.gmra.mxu0 %v3719
    %v3930 = vpop.f32.mrf.mxu0
    %v3931 = vadd.f32 0.0, %v3930
    %3932 = vmatmul.f32.gmra.mxu0 %v3722
    %v3933 = vpop.f32.mrf.mxu0
    %v3934 = vadd.f32 0.0, %v3933
    %3935 = vmatmul.f32.gmra.mxu0 %v3725
    %v3936 = vpop.f32.mrf.mxu0
    %v3937 = vadd.f32 0.0, %v3936
    %3938 = vmatmul.f32.gmra.mxu0 %v3728
    %v3939 = vpop.f32.mrf.mxu0
    %v3940 = vadd.f32 0.0, %v3939
    %3941 = vmatmul.f32.gmra.mxu0 %v3731
    %v3942 = vpop.f32.mrf.mxu0
    %v3943 = vadd.f32 0.0, %v3942
    %3944 = vmatmul.f32.gmra.mxu0 %v3734
    %v3945 = vpop.f32.mrf.mxu0
    %v3946 = vadd.f32 0.0, %v3945
    %3947 = vmatmul.f32.gmra.mxu0 %v3737
    %v3948 = vpop.f32.mrf.mxu0
    %v3949 = vadd.f32 0.0, %v3948
    %3950 = vmatmul.f32.gmra.mxu0 %v3740
    %v3951 = vpop.f32.mrf.mxu0
    %v3952 = vadd.f32 0.0, %v3951
    %3953 = vmatmul.f32.gmra.mxu0 %v3743
    %v3954 = vpop.f32.mrf.mxu0
    %v3955 = vadd.f32 0.0, %v3954
    %3956 = vmatmul.f32.gmra.mxu0 %v3746
    %v3957 = vpop.f32.mrf.mxu0
    %v3958 = vadd.f32 0.0, %v3957
    %3959 = vmatmul.f32.gmra.mxu0 %v3749
    %v3960 = vpop.f32.mrf.mxu0
    %v3961 = vadd.f32 0.0, %v3960
    %3962 = vmatmul.f32.gmra.mxu0 %v3752
    %v3963 = vpop.f32.mrf.mxu0
    %v3964 = vadd.f32 0.0, %v3963
    %3965 = vmatmul.f32.gmra.mxu0 %v3755
    %v3966 = vpop.f32.mrf.mxu0
    %v3967 = vadd.f32 0.0, %v3966
    %3968 = vmatmul.f32.gmra.mxu0 %v3758
    %v3969 = vpop.f32.mrf.mxu0
    %v3970 = vadd.f32 0.0, %v3969
    %3971 = vmatmul.f32.gmra.mxu0 %v3761
    %v3972 = vpop.f32.mrf.mxu0
    %v3973 = vadd.f32 0.0, %v3972
    %3974 = vmatmul.f32.gmra.mxu0 %v3764
    %v3975 = vpop.f32.mrf.mxu0
    %v3976 = vadd.f32 0.0, %v3975
    %3977 = vmatmul.f32.gmra.mxu0 %v3767
    %v3978 = vpop.f32.mrf.mxu0
    %v3979 = vadd.f32 0.0, %v3978
    %3980 = vmatmul.f32.gmra.mxu0 %v3770
    %v3981 = vpop.f32.mrf.mxu0
    %v3982 = vadd.f32 0.0, %v3981
    %3983 = vmatmul.f32.gmra.mxu0 %v3773
    %v3984 = vpop.f32.mrf.mxu0
    %v3985 = vadd.f32 0.0, %v3984
    %3986 = vmatmul.f32.gmra.mxu0 %v3776
    %v3987 = vpop.f32.mrf.mxu0
    %v3988 = vadd.f32 0.0, %v3987
    %3989 = vmatmul.f32.gmra.mxu0 %v3779
    %v3990 = vpop.f32.mrf.mxu0
    %v3991 = vadd.f32 0.0, %v3990
    %3992 = vmatmul.f32.gmra.mxu0 %v3782
    %v3993 = vpop.f32.mrf.mxu0
    %v3994 = vadd.f32 0.0, %v3993
    %3995 = vmatmul.f32.gmra.mxu0 %v3785
    %v3996 = vpop.f32.mrf.mxu0
    %v3997 = vadd.f32 0.0, %v3996
    %3998 = vmatmul.f32.gmra.mxu0 %v3788
    %v3999 = vpop.f32.mrf.mxu0
    %v4000 = vadd.f32 0.0, %v3999
    %4001 = vmatmul.f32.gmra.mxu0 %v3791
    %v4002 = vpop.f32.mrf.mxu0
    %v4003 = vadd.f32 0.0, %v4002
    %4004 = vmatmul.f32.gmra.mxu0 %v3794
    %v4005 = vpop.f32.mrf.mxu0
    %v4006 = vadd.f32 0.0, %v4005
    %4007 = vmatmul.f32.gmra.mxu0 %v3797
    %v4008 = vpop.f32.mrf.mxu0
    %v4009 = vadd.f32 0.0, %v4008
    %4010 = vmatmul.f32.gmra.mxu0 %v3800
    %v4011 = vpop.f32.mrf.mxu0
    %v4012 = vadd.f32 0.0, %v4011
    %4013 = vmatmul.f32.gmra.mxu0 %v3803
    %v4014 = vpop.f32.mrf.mxu0
    %v4015 = vadd.f32 0.0, %v4014
    %4016 = vmatmul.f32.gmra.mxu0 %v3806
    %v4017 = vpop.f32.mrf.mxu0
    %v4018 = vadd.f32 0.0, %v4017
    %4019 = vmatmul.f32.gmra.mxu0 %v3809
    %v4020 = vpop.f32.mrf.mxu0
    %v4021 = vadd.f32 0.0, %v4020
    %4022 = vmatmul.f32.gmra.mxu0 %v3812
    %v4023 = vpop.f32.mrf.mxu0
    %v4024 = vadd.f32 0.0, %v4023
    %4025 = vmatmul.f32.gmra.mxu0 %v3815
    %v4026 = vpop.f32.mrf.mxu0
    %v4027 = vadd.f32 0.0, %v4026
    %4028 = vmatmul.f32.gmra.mxu0 %v3818
    %v4029 = vpop.f32.mrf.mxu0
    %v4030 = vadd.f32 0.0, %v4029
    %4031 = vmatmul.f32.gmra.mxu0 %v3821
    %v4032 = vpop.f32.mrf.mxu0
    %v4033 = vadd.f32 0.0, %v4032
    %4034 = vmatmul.f32.gmra.mxu0 %v3824
    %v4035 = vpop.f32.mrf.mxu0
    %v4036 = vadd.f32 0.0, %v4035
    %4037 = vmatmul.f32.gmra.mxu0 %v3827
    %v4038 = vpop.f32.mrf.mxu0
    %v4039 = vadd.f32 0.0, %v4038
    %4040 = vmatmul.f32.gmra.mxu0 %v3830
    %v4041 = vpop.f32.mrf.mxu0
    %v4042 = vadd.f32 0.0, %v4041
    %4043 = vmatmul.f32.gmra.mxu0 %v3833
    %v4044 = vpop.f32.mrf.mxu0
    %v4045 = vadd.f32 0.0, %v4044
    %4046 = vmatmul.f32.gmra.mxu0 %v3836
    %v4047 = vpop.f32.mrf.mxu0
    %v4048 = vadd.f32 0.0, %v4047
    %4049 = vmatmul.f32.gmra.mxu0 %v3839
    %v4050 = vpop.f32.mrf.mxu0
    %v4051 = vadd.f32 0.0, %v4050
    %4052 = vdwg.mxu0
    %v4053 = vld [vmem:[#allocation3] sm:$0xff]
    %v4054 = vld [vmem:[#allocation3 + $0x8] sm:$0xff]
    %v4055 = vld [vmem:[#allocation3 + $0x10] sm:$0xff]
    %v4056 = vld [vmem:[#allocation3 + $0x18] sm:$0xff]
    %v4057 = vld [vmem:[#allocation3 + $0x20] sm:$0xff]
    %v4058 = vld [vmem:[#allocation3 + $0x28] sm:$0xff]
    %v4059 = vld [vmem:[#allocation3 + $0x30] sm:$0xff]
    %v4060 = vld [vmem:[#allocation3 + $0x38] sm:$0xff]
    %v4061 = vld [vmem:[#allocation3 + $0x40] sm:$0xff]
    %v4062 = vld [vmem:[#allocation3 + $0x48] sm:$0xff]
    %v4063 = vld [vmem:[#allocation3 + $0x50] sm:$0xff]
    %v4064 = vld [vmem:[#allocation3 + $0x58] sm:$0xff]
    %v4065 = vld [vmem:[#allocation3 + $0x60] sm:$0xff]
    %v4066 = vld [vmem:[#allocation3 + $0x68] sm:$0xff]
    %v4067 = vld [vmem:[#allocation3 + $0x70] sm:$0xff]
    %v4068 = vld [vmem:[#allocation3 + $0x78] sm:$0xff]
    %v4069 = vld [vmem:[#allocation3 + $0x80] sm:$0xff]
    %v4070 = vld [vmem:[#allocation3 + $0x88] sm:$0xff]
    %v4071 = vld [vmem:[#allocation3 + $0x90] sm:$0xff]
    %v4072 = vld [vmem:[#allocation3 + $0x98] sm:$0xff]
    %v4073 = vld [vmem:[#allocation3 + $0xa0] sm:$0xff]
    %v4074 = vld [vmem:[#allocation3 + $0xa8] sm:$0xff]
    %v4075 = vld [vmem:[#allocation3 + $0xb0] sm:$0xff]
    %v4076 = vld [vmem:[#allocation3 + $0xb8] sm:$0xff]
    %v4077 = vld [vmem:[#allocation3 + $0xc0] sm:$0xff]
    %v4078 = vld [vmem:[#allocation3 + $0xc8] sm:$0xff]
    %v4079 = vld [vmem:[#allocation3 + $0xd0] sm:$0xff]
    %v4080 = vld [vmem:[#allocation3 + $0xd8] sm:$0xff]
    %v4081 = vld [vmem:[#allocation3 + $0xe0] sm:$0xff]
    %v4082 = vld [vmem:[#allocation3 + $0xe8] sm:$0xff]
    %v4083 = vld [vmem:[#allocation3 + $0xf0] sm:$0xff]
    %v4084 = vld [vmem:[#allocation3 + $0xf8] sm:$0xff]
    %v4085 = vld [vmem:[#allocation3 + $0x100] sm:$0xff]
    %v4086 = vld [vmem:[#allocation3 + $0x108] sm:$0xff]
    %v4087 = vld [vmem:[#allocation3 + $0x110] sm:$0xff]
    %v4088 = vld [vmem:[#allocation3 + $0x118] sm:$0xff]
    %v4089 = vld [vmem:[#allocation3 + $0x120] sm:$0xff]
    %v4090 = vld [vmem:[#allocation3 + $0x128] sm:$0xff]
    %v4091 = vld [vmem:[#allocation3 + $0x130] sm:$0xff]
    %v4092 = vld [vmem:[#allocation3 + $0x138] sm:$0xff]
    %v4093 = vld [vmem:[#allocation3 + $0x140] sm:$0xff]
    %v4094 = vld [vmem:[#allocation3 + $0x148] sm:$0xff]
    %v4095 = vld [vmem:[#allocation3 + $0x150] sm:$0xff]
    %v4096 = vld [vmem:[#allocation3 + $0x158] sm:$0xff]
    %v4097 = vld [vmem:[#allocation3 + $0x160] sm:$0xff]
    %v4098 = vld [vmem:[#allocation3 + $0x168] sm:$0xff]
    %v4099 = vld [vmem:[#allocation3 + $0x170] sm:$0xff]
    %v4100 = vld [vmem:[#allocation3 + $0x178] sm:$0xff]
    %v4101 = vld [vmem:[#allocation3 + $0x180] sm:$0xff]
    %v4102 = vld [vmem:[#allocation3 + $0x188] sm:$0xff]
    %v4103 = vld [vmem:[#allocation3 + $0x190] sm:$0xff]
    %v4104 = vld [vmem:[#allocation3 + $0x198] sm:$0xff]
    %v4105 = vld [vmem:[#allocation3 + $0x1a0] sm:$0xff]
    %v4106 = vld [vmem:[#allocation3 + $0x1a8] sm:$0xff]
    %v4107 = vld [vmem:[#allocation3 + $0x1b0] sm:$0xff]
    %v4108 = vld [vmem:[#allocation3 + $0x1b8] sm:$0xff]
    %v4109 = vld [vmem:[#allocation3 + $0x1c0] sm:$0xff]
    %v4110 = vld [vmem:[#allocation3 + $0x1c8] sm:$0xff]
    %v4111 = vld [vmem:[#allocation3 + $0x1d0] sm:$0xff]
    %v4112 = vld [vmem:[#allocation3 + $0x1d8] sm:$0xff]
    %v4113 = vld [vmem:[#allocation3 + $0x1e0] sm:$0xff]
    %v4114 = vld [vmem:[#allocation3 + $0x1e8] sm:$0xff]
    %v4115 = vld [vmem:[#allocation3 + $0x1f0] sm:$0xff]
    %v4116 = vld [vmem:[#allocation3 + $0x1f8] sm:$0xff]
    %v4117 = vadd.f32 %v4053, %v3862
    %v4118 = vadd.f32 %v4054, %v3865
    %v4119 = vadd.f32 %v4055, %v3868
    %v4120 = vadd.f32 %v4056, %v3871
    %v4121 = vadd.f32 %v4057, %v3874
    %v4122 = vadd.f32 %v4058, %v3877
    %v4123 = vadd.f32 %v4059, %v3880
    %v4124 = vadd.f32 %v4060, %v3883
    %v4125 = vadd.f32 %v4061, %v3886
    %v4126 = vadd.f32 %v4062, %v3889
    %v4127 = vadd.f32 %v4063, %v3892
    %v4128 = vadd.f32 %v4064, %v3895
    %v4129 = vadd.f32 %v4065, %v3898
    %v4130 = vadd.f32 %v4066, %v3901
    %v4131 = vadd.f32 %v4067, %v3904
    %v4132 = vadd.f32 %v4068, %v3907
    %v4133 = vadd.f32 %v4069, %v3910
    %v4134 = vadd.f32 %v4070, %v3913
    %v4135 = vadd.f32 %v4071, %v3916
    %v4136 = vadd.f32 %v4072, %v3919
    %v4137 = vadd.f32 %v4073, %v3922
    %v4138 = vadd.f32 %v4074, %v3925
    %v4139 = vadd.f32 %v4075, %v3928
    %v4140 = vadd.f32 %v4076, %v3931
    %v4141 = vadd.f32 %v4077, %v3934
    %v4142 = vadd.f32 %v4078, %v3937
    %v4143 = vadd.f32 %v4079, %v3940
    %v4144 = vadd.f32 %v4080, %v3943
    %v4145 = vadd.f32 %v4081, %v3946
    %v4146 = vadd.f32 %v4082, %v3949
    %v4147 = vadd.f32 %v4083, %v3952
    %v4148 = vadd.f32 %v4084, %v3955
    %v4149 = vadd.f32 %v4085, %v3958
    %v4150 = vadd.f32 %v4086, %v3961
    %v4151 = vadd.f32 %v4087, %v3964
    %v4152 = vadd.f32 %v4088, %v3967
    %v4153 = vadd.f32 %v4089, %v3970
    %v4154 = vadd.f32 %v4090, %v3973
    %v4155 = vadd.f32 %v4091, %v3976
    %v4156 = vadd.f32 %v4092, %v3979
    %v4157 = vadd.f32 %v4093, %v3982
    %v4158 = vadd.f32 %v4094, %v3985
    %v4159 = vadd.f32 %v4095, %v3988
    %v4160 = vadd.f32 %v4096, %v3991
    %v4161 = vadd.f32 %v4097, %v3994
    %v4162 = vadd.f32 %v4098, %v3997
    %v4163 = vadd.f32 %v4099, %v4000
    %v4164 = vadd.f32 %v4100, %v4003
    %v4165 = vadd.f32 %v4101, %v4006
    %v4166 = vadd.f32 %v4102, %v4009
    %v4167 = vadd.f32 %v4103, %v4012
    %v4168 = vadd.f32 %v4104, %v4015
    %v4169 = vadd.f32 %v4105, %v4018
    %v4170 = vadd.f32 %v4106, %v4021
    %v4171 = vadd.f32 %v4107, %v4024
    %v4172 = vadd.f32 %v4108, %v4027
    %v4173 = vadd.f32 %v4109, %v4030
    %v4174 = vadd.f32 %v4110, %v4033
    %v4175 = vadd.f32 %v4111, %v4036
    %v4176 = vadd.f32 %v4112, %v4039
    %v4177 = vadd.f32 %v4113, %v4042
    %v4178 = vadd.f32 %v4114, %v4045
    %v4179 = vadd.f32 %v4115, %v4048
    %v4180 = vadd.f32 %v4116, %v4051
    %4181 = vst [vmem:[#allocation3] sm:$0xff] %v4117
    %4182 = vst [vmem:[#allocation3 + $0x8] sm:$0xff] %v4118
    %4183 = vst [vmem:[#allocation3 + $0x10] sm:$0xff] %v4119
    %4184 = vst [vmem:[#allocation3 + $0x18] sm:$0xff] %v4120
    %4185 = vst [vmem:[#allocation3 + $0x20] sm:$0xff] %v4121
    %4186 = vst [vmem:[#allocation3 + $0x28] sm:$0xff] %v4122
    %4187 = vst [vmem:[#allocation3 + $0x30] sm:$0xff] %v4123
    %4188 = vst [vmem:[#allocation3 + $0x38] sm:$0xff] %v4124
    %4189 = vst [vmem:[#allocation3 + $0x40] sm:$0xff] %v4125
    %4190 = vst [vmem:[#allocation3 + $0x48] sm:$0xff] %v4126
    %4191 = vst [vmem:[#allocation3 + $0x50] sm:$0xff] %v4127
    %4192 = vst [vmem:[#allocation3 + $0x58] sm:$0xff] %v4128
    %4193 = vst [vmem:[#allocation3 + $0x60] sm:$0xff] %v4129
    %4194 = vst [vmem:[#allocation3 + $0x68] sm:$0xff] %v4130
    %4195 = vst [vmem:[#allocation3 + $0x70] sm:$0xff] %v4131
    %4196 = vst [vmem:[#allocation3 + $0x78] sm:$0xff] %v4132
    %4197 = vst [vmem:[#allocation3 + $0x80] sm:$0xff] %v4133
    %4198 = vst [vmem:[#allocation3 + $0x88] sm:$0xff] %v4134
    %4199 = vst [vmem:[#allocation3 + $0x90] sm:$0xff] %v4135
    %4200 = vst [vmem:[#allocation3 + $0x98] sm:$0xff] %v4136
    %4201 = vst [vmem:[#allocation3 + $0xa0] sm:$0xff] %v4137
    %4202 = vst [vmem:[#allocation3 + $0xa8] sm:$0xff] %v4138
    %4203 = vst [vmem:[#allocation3 + $0xb0] sm:$0xff] %v4139
    %4204 = vst [vmem:[#allocation3 + $0xb8] sm:$0xff] %v4140
    %4205 = vst [vmem:[#allocation3 + $0xc0] sm:$0xff] %v4141
    %4206 = vst [vmem:[#allocation3 + $0xc8] sm:$0xff] %v4142
    %4207 = vst [vmem:[#allocation3 + $0xd0] sm:$0xff] %v4143
    %4208 = vst [vmem:[#allocation3 + $0xd8] sm:$0xff] %v4144
    %4209 = vst [vmem:[#allocation3 + $0xe0] sm:$0xff] %v4145
    %4210 = vst [vmem:[#allocation3 + $0xe8] sm:$0xff] %v4146
    %4211 = vst [vmem:[#allocation3 + $0xf0] sm:$0xff] %v4147
    %4212 = vst [vmem:[#allocation3 + $0xf8] sm:$0xff] %v4148
    %4213 = vst [vmem:[#allocation3 + $0x100] sm:$0xff] %v4149
    %4214 = vst [vmem:[#allocation3 + $0x108] sm:$0xff] %v4150
    %4215 = vst [vmem:[#allocation3 + $0x110] sm:$0xff] %v4151
    %4216 = vst [vmem:[#allocation3 + $0x118] sm:$0xff] %v4152
    %4217 = vst [vmem:[#allocation3 + $0x120] sm:$0xff] %v4153
    %4218 = vst [vmem:[#allocation3 + $0x128] sm:$0xff] %v4154
    %4219 = vst [vmem:[#allocation3 + $0x130] sm:$0xff] %v4155
    %4220 = vst [vmem:[#allocation3 + $0x138] sm:$0xff] %v4156
    %4221 = vst [vmem:[#allocation3 + $0x140] sm:$0xff] %v4157
    %4222 = vst [vmem:[#allocation3 + $0x148] sm:$0xff] %v4158
    %4223 = vst [vmem:[#allocation3 + $0x150] sm:$0xff] %v4159
    %4224 = vst [vmem:[#allocation3 + $0x158] sm:$0xff] %v4160
    %4225 = vst [vmem:[#allocation3 + $0x160] sm:$0xff] %v4161
    %4226 = vst [vmem:[#allocation3 + $0x168] sm:$0xff] %v4162
    %4227 = vst [vmem:[#allocation3 + $0x170] sm:$0xff] %v4163
    %4228 = vst [vmem:[#allocation3 + $0x178] sm:$0xff] %v4164
    %4229 = vst [vmem:[#allocation3 + $0x180] sm:$0xff] %v4165
    %4230 = vst [vmem:[#allocation3 + $0x188] sm:$0xff] %v4166
    %4231 = vst [vmem:[#allocation3 + $0x190] sm:$0xff] %v4167
    %4232 = vst [vmem:[#allocation3 + $0x198] sm:$0xff] %v4168
    %4233 = vst [vmem:[#allocation3 + $0x1a0] sm:$0xff] %v4169
    %4234 = vst [vmem:[#allocation3 + $0x1a8] sm:$0xff] %v4170
    %4235 = vst [vmem:[#allocation3 + $0x1b0] sm:$0xff] %v4171
    %4236 = vst [vmem:[#allocation3 + $0x1b8] sm:$0xff] %v4172
    %4237 = vst [vmem:[#allocation3 + $0x1c0] sm:$0xff] %v4173
    %4238 = vst [vmem:[#allocation3 + $0x1c8] sm:$0xff] %v4174
    %4239 = vst [vmem:[#allocation3 + $0x1d0] sm:$0xff] %v4175
    %4240 = vst [vmem:[#allocation3 + $0x1d8] sm:$0xff] %v4176
    %4241 = vst [vmem:[#allocation3 + $0x1e0] sm:$0xff] %v4177
    %4242 = vst [vmem:[#allocation3 + $0x1e8] sm:$0xff] %v4178
    %4243 = vst [vmem:[#allocation3 + $0x1f0] sm:$0xff] %v4179
    %4244 = vst [vmem:[#allocation3 + $0x1f8] sm:$0xff] %v4180
    %s4245 = scalar_lea.vmem [#allocation4], 200
    %v4246 = vld [vmem:[%s4245] sm:$0xff]
    %v4247 = vld [vmem:[%s4245 + $0x8] sm:$0xff]
    %v4248 = vld [vmem:[%s4245 + $0x10] sm:$0xff]
    %v4249 = vld [vmem:[%s4245 + $0x18] sm:$0xff]
    %v4250 = vld [vmem:[%s4245 + $0x20] sm:$0xf]
    %v4252 = vsel %vm34, %v3603, 0
    %v4255 = vsel %vm34, %v3604, 0
    %v4258 = vsel %vm34, %v3639, 0
    %v4261 = vsel %vm34, %v3640, 0
    %v4264 = vsel %vm932, %v4250, 0
    %4266 = vmatpush.msra.mxu0 0.0
    %4267 = vmatpush.msra.mxu0 0.0
    %4268 = vmatpush.msra.mxu0 0.0
    %4269 = vmatpush.msra.mxu0 0.0
    %4270 = vmatpush.msra.mxu0 0.0
    %4271 = vmatpush.msra.mxu0 0.0
    %4272 = vmatpush.msra.mxu0 0.0
    %4273 = vmatpush.msra.mxu0 0.0
    %4274 = vmatpush.msra.mxu0 0.0
    %4275 = vmatpush.msra.mxu0 0.0
    %4276 = vmatpush.msra.mxu0 0.0
    %4277 = vmatpush.msra.mxu0 %v4264
    %4278 = vmatpush.msra.mxu0 %v4249
    %4279 = vmatpush.msra.mxu0 %v4248
    %4280 = vmatpush.msra.mxu0 %v4247
    %4281 = vmatpush.msra.mxu0 %v4246
    %4282 = vmatmul.f32.gmra.mxu0 %v3656
    %v4283 = vpop.f32.mrf.mxu0
    %v4284 = vadd.f32 0.0, %v4283
    %4285 = vmatmul.f32.gmra.mxu0 %v3659
    %v4286 = vpop.f32.mrf.mxu0
    %v4287 = vadd.f32 0.0, %v4286
    %4288 = vmatmul.f32.gmra.mxu0 %v3662
    %v4289 = vpop.f32.mrf.mxu0
    %v4290 = vadd.f32 0.0, %v4289
    %4291 = vmatmul.f32.gmra.mxu0 %v3665
    %v4292 = vpop.f32.mrf.mxu0
    %v4293 = vadd.f32 0.0, %v4292
    %4294 = vmatmul.f32.gmra.mxu0 %v3668
    %v4295 = vpop.f32.mrf.mxu0
    %v4296 = vadd.f32 0.0, %v4295
    %4297 = vmatmul.f32.gmra.mxu0 %v3671
    %v4298 = vpop.f32.mrf.mxu0
    %v4299 = vadd.f32 0.0, %v4298
    %4300 = vmatmul.f32.gmra.mxu0 %v3674
    %v4301 = vpop.f32.mrf.mxu0
    %v4302 = vadd.f32 0.0, %v4301
    %4303 = vmatmul.f32.gmra.mxu0 %v3677
    %v4304 = vpop.f32.mrf.mxu0
    %v4305 = vadd.f32 0.0, %v4304
    %4306 = vmatmul.f32.gmra.mxu0 %v3680
    %v4307 = vpop.f32.mrf.mxu0
    %v4308 = vadd.f32 0.0, %v4307
    %4309 = vmatmul.f32.gmra.mxu0 %v3683
    %v4310 = vpop.f32.mrf.mxu0
    %v4311 = vadd.f32 0.0, %v4310
    %4312 = vmatmul.f32.gmra.mxu0 %v3686
    %v4313 = vpop.f32.mrf.mxu0
    %v4314 = vadd.f32 0.0, %v4313
    %4315 = vmatmul.f32.gmra.mxu0 %v3689
    %v4316 = vpop.f32.mrf.mxu0
    %v4317 = vadd.f32 0.0, %v4316
    %4318 = vmatmul.f32.gmra.mxu0 %v3692
    %v4319 = vpop.f32.mrf.mxu0
    %v4320 = vadd.f32 0.0, %v4319
    %4321 = vmatmul.f32.gmra.mxu0 %v3695
    %v4322 = vpop.f32.mrf.mxu0
    %v4323 = vadd.f32 0.0, %v4322
    %4324 = vmatmul.f32.gmra.mxu0 %v3698
    %v4325 = vpop.f32.mrf.mxu0
    %v4326 = vadd.f32 0.0, %v4325
    %4327 = vmatmul.f32.gmra.mxu0 %v3701
    %v4328 = vpop.f32.mrf.mxu0
    %v4329 = vadd.f32 0.0, %v4328
    %4330 = vmatmul.f32.gmra.mxu0 %v3704
    %v4331 = vpop.f32.mrf.mxu0
    %v4332 = vadd.f32 0.0, %v4331
    %4333 = vmatmul.f32.gmra.mxu0 %v3707
    %v4334 = vpop.f32.mrf.mxu0
    %v4335 = vadd.f32 0.0, %v4334
    %4336 = vmatmul.f32.gmra.mxu0 %v3710
    %v4337 = vpop.f32.mrf.mxu0
    %v4338 = vadd.f32 0.0, %v4337
    %4339 = vmatmul.f32.gmra.mxu0 %v3713
    %v4340 = vpop.f32.mrf.mxu0
    %v4341 = vadd.f32 0.0, %v4340
    %4342 = vmatmul.f32.gmra.mxu0 %v3716
    %v4343 = vpop.f32.mrf.mxu0
    %v4344 = vadd.f32 0.0, %v4343
    %4345 = vmatmul.f32.gmra.mxu0 %v3719
    %v4346 = vpop.f32.mrf.mxu0
    %v4347 = vadd.f32 0.0, %v4346
    %4348 = vmatmul.f32.gmra.mxu0 %v3722
    %v4349 = vpop.f32.mrf.mxu0
    %v4350 = vadd.f32 0.0, %v4349
    %4351 = vmatmul.f32.gmra.mxu0 %v3725
    %v4352 = vpop.f32.mrf.mxu0
    %v4353 = vadd.f32 0.0, %v4352
    %4354 = vmatmul.f32.gmra.mxu0 %v3728
    %v4355 = vpop.f32.mrf.mxu0
    %v4356 = vadd.f32 0.0, %v4355
    %4357 = vmatmul.f32.gmra.mxu0 %v3731
    %v4358 = vpop.f32.mrf.mxu0
    %v4359 = vadd.f32 0.0, %v4358
    %4360 = vmatmul.f32.gmra.mxu0 %v3734
    %v4361 = vpop.f32.mrf.mxu0
    %v4362 = vadd.f32 0.0, %v4361
    %4363 = vmatmul.f32.gmra.mxu0 %v3737
    %v4364 = vpop.f32.mrf.mxu0
    %v4365 = vadd.f32 0.0, %v4364
    %4366 = vmatmul.f32.gmra.mxu0 %v3740
    %v4367 = vpop.f32.mrf.mxu0
    %v4368 = vadd.f32 0.0, %v4367
    %4369 = vmatmul.f32.gmra.mxu0 %v3743
    %v4370 = vpop.f32.mrf.mxu0
    %v4371 = vadd.f32 0.0, %v4370
    %4372 = vmatmul.f32.gmra.mxu0 %v4252
    %v4373 = vpop.f32.mrf.mxu0
    %v4374 = vadd.f32 0.0, %v4373
    %4375 = vmatmul.f32.gmra.mxu0 %v4255
    %v4376 = vpop.f32.mrf.mxu0
    %v4377 = vadd.f32 0.0, %v4376
    %4378 = vmatmul.f32.gmra.mxu0 %v3752
    %v4379 = vpop.f32.mrf.mxu0
    %v4380 = vadd.f32 0.0, %v4379
    %4381 = vmatmul.f32.gmra.mxu0 %v3755
    %v4382 = vpop.f32.mrf.mxu0
    %v4383 = vadd.f32 0.0, %v4382
    %4384 = vmatmul.f32.gmra.mxu0 %v3758
    %v4385 = vpop.f32.mrf.mxu0
    %v4386 = vadd.f32 0.0, %v4385
    %4387 = vmatmul.f32.gmra.mxu0 %v3761
    %v4388 = vpop.f32.mrf.mxu0
    %v4389 = vadd.f32 0.0, %v4388
    %4390 = vmatmul.f32.gmra.mxu0 %v3764
    %v4391 = vpop.f32.mrf.mxu0
    %v4392 = vadd.f32 0.0, %v4391
    %4393 = vmatmul.f32.gmra.mxu0 %v3767
    %v4394 = vpop.f32.mrf.mxu0
    %v4395 = vadd.f32 0.0, %v4394
    %4396 = vmatmul.f32.gmra.mxu0 %v3770
    %v4397 = vpop.f32.mrf.mxu0
    %v4398 = vadd.f32 0.0, %v4397
    %4399 = vmatmul.f32.gmra.mxu0 %v3773
    %v4400 = vpop.f32.mrf.mxu0
    %v4401 = vadd.f32 0.0, %v4400
    %4402 = vmatmul.f32.gmra.mxu0 %v3776
    %v4403 = vpop.f32.mrf.mxu0
    %v4404 = vadd.f32 0.0, %v4403
    %4405 = vmatmul.f32.gmra.mxu0 %v3779
    %v4406 = vpop.f32.mrf.mxu0
    %v4407 = vadd.f32 0.0, %v4406
    %4408 = vmatmul.f32.gmra.mxu0 %v3782
    %v4409 = vpop.f32.mrf.mxu0
    %v4410 = vadd.f32 0.0, %v4409
    %4411 = vmatmul.f32.gmra.mxu0 %v3785
    %v4412 = vpop.f32.mrf.mxu0
    %v4413 = vadd.f32 0.0, %v4412
    %4414 = vmatmul.f32.gmra.mxu0 %v3788
    %v4415 = vpop.f32.mrf.mxu0
    %v4416 = vadd.f32 0.0, %v4415
    %4417 = vmatmul.f32.gmra.mxu0 %v3791
    %v4418 = vpop.f32.mrf.mxu0
    %v4419 = vadd.f32 0.0, %v4418
    %4420 = vmatmul.f32.gmra.mxu0 %v3794
    %v4421 = vpop.f32.mrf.mxu0
    %v4422 = vadd.f32 0.0, %v4421
    %4423 = vmatmul.f32.gmra.mxu0 %v3797
    %v4424 = vpop.f32.mrf.mxu0
    %v4425 = vadd.f32 0.0, %v4424
    %4426 = vmatmul.f32.gmra.mxu0 %v3800
    %v4427 = vpop.f32.mrf.mxu0
    %v4428 = vadd.f32 0.0, %v4427
    %4429 = vmatmul.f32.gmra.mxu0 %v3803
    %v4430 = vpop.f32.mrf.mxu0
    %v4431 = vadd.f32 0.0, %v4430
    %4432 = vmatmul.f32.gmra.mxu0 %v3806
    %v4433 = vpop.f32.mrf.mxu0
    %v4434 = vadd.f32 0.0, %v4433
    %4435 = vmatmul.f32.gmra.mxu0 %v3809
    %v4436 = vpop.f32.mrf.mxu0
    %v4437 = vadd.f32 0.0, %v4436
    %4438 = vmatmul.f32.gmra.mxu0 %v3812
    %v4439 = vpop.f32.mrf.mxu0
    %v4440 = vadd.f32 0.0, %v4439
    %4441 = vmatmul.f32.gmra.mxu0 %v3815
    %v4442 = vpop.f32.mrf.mxu0
    %v4443 = vadd.f32 0.0, %v4442
    %4444 = vmatmul.f32.gmra.mxu0 %v3818
    %v4445 = vpop.f32.mrf.mxu0
    %v4446 = vadd.f32 0.0, %v4445
    %4447 = vmatmul.f32.gmra.mxu0 %v3821
    %v4448 = vpop.f32.mrf.mxu0
    %v4449 = vadd.f32 0.0, %v4448
    %4450 = vmatmul.f32.gmra.mxu0 %v3824
    %v4451 = vpop.f32.mrf.mxu0
    %v4452 = vadd.f32 0.0, %v4451
    %4453 = vmatmul.f32.gmra.mxu0 %v3827
    %v4454 = vpop.f32.mrf.mxu0
    %v4455 = vadd.f32 0.0, %v4454
    %4456 = vmatmul.f32.gmra.mxu0 %v3830
    %v4457 = vpop.f32.mrf.mxu0
    %v4458 = vadd.f32 0.0, %v4457
    %4459 = vmatmul.f32.gmra.mxu0 %v3833
    %v4460 = vpop.f32.mrf.mxu0
    %v4461 = vadd.f32 0.0, %v4460
    %4462 = vmatmul.f32.gmra.mxu0 %v3836
    %v4463 = vpop.f32.mrf.mxu0
    %v4464 = vadd.f32 0.0, %v4463
    %4465 = vmatmul.f32.gmra.mxu0 %v3839
    %v4466 = vpop.f32.mrf.mxu0
    %v4467 = vadd.f32 0.0, %v4466
    %4468 = vmatmul.f32.gmra.mxu0 %v4258
    %v4469 = vpop.f32.mrf.mxu0
    %v4470 = vadd.f32 0.0, %v4469
    %4471 = vmatmul.f32.gmra.mxu0 %v4261
    %v4472 = vpop.f32.mrf.mxu0
    %v4473 = vadd.f32 0.0, %v4472
    %4474 = vdwg.mxu0
    %v4475 = vld [vmem:[#allocation3] sm:$0xff]
    %v4476 = vld [vmem:[#allocation3 + $0x8] sm:$0xff]
    %v4477 = vld [vmem:[#allocation3 + $0x10] sm:$0xff]
    %v4478 = vld [vmem:[#allocation3 + $0x18] sm:$0xff]
    %v4479 = vld [vmem:[#allocation3 + $0x20] sm:$0xff]
    %v4480 = vld [vmem:[#allocation3 + $0x28] sm:$0xff]
    %v4481 = vld [vmem:[#allocation3 + $0x30] sm:$0xff]
    %v4482 = vld [vmem:[#allocation3 + $0x38] sm:$0xff]
    %v4483 = vld [vmem:[#allocation3 + $0x40] sm:$0xff]
    %v4484 = vld [vmem:[#allocation3 + $0x48] sm:$0xff]
    %v4485 = vld [vmem:[#allocation3 + $0x50] sm:$0xff]
    %v4486 = vld [vmem:[#allocation3 + $0x58] sm:$0xff]
    %v4487 = vld [vmem:[#allocation3 + $0x60] sm:$0xff]
    %v4488 = vld [vmem:[#allocation3 + $0x68] sm:$0xff]
    %v4489 = vld [vmem:[#allocation3 + $0x70] sm:$0xff]
    %v4490 = vld [vmem:[#allocation3 + $0x78] sm:$0xff]
    %v4491 = vld [vmem:[#allocation3 + $0x80] sm:$0xff]
    %v4492 = vld [vmem:[#allocation3 + $0x88] sm:$0xff]
    %v4493 = vld [vmem:[#allocation3 + $0x90] sm:$0xff]
    %v4494 = vld [vmem:[#allocation3 + $0x98] sm:$0xff]
    %v4495 = vld [vmem:[#allocation3 + $0xa0] sm:$0xff]
    %v4496 = vld [vmem:[#allocation3 + $0xa8] sm:$0xff]
    %v4497 = vld [vmem:[#allocation3 + $0xb0] sm:$0xff]
    %v4498 = vld [vmem:[#allocation3 + $0xb8] sm:$0xff]
    %v4499 = vld [vmem:[#allocation3 + $0xc0] sm:$0xff]
    %v4500 = vld [vmem:[#allocation3 + $0xc8] sm:$0xff]
    %v4501 = vld [vmem:[#allocation3 + $0xd0] sm:$0xff]
    %v4502 = vld [vmem:[#allocation3 + $0xd8] sm:$0xff]
    %v4503 = vld [vmem:[#allocation3 + $0xe0] sm:$0xff]
    %v4504 = vld [vmem:[#allocation3 + $0xe8] sm:$0xff]
    %v4505 = vld [vmem:[#allocation3 + $0xf0] sm:$0xff]
    %v4506 = vld [vmem:[#allocation3 + $0xf8] sm:$0xff]
    %v4507 = vld [vmem:[#allocation3 + $0x100] sm:$0xff]
    %v4508 = vld [vmem:[#allocation3 + $0x108] sm:$0xff]
    %v4509 = vld [vmem:[#allocation3 + $0x110] sm:$0xff]
    %v4510 = vld [vmem:[#allocation3 + $0x118] sm:$0xff]
    %v4511 = vld [vmem:[#allocation3 + $0x120] sm:$0xff]
    %v4512 = vld [vmem:[#allocation3 + $0x128] sm:$0xff]
    %v4513 = vld [vmem:[#allocation3 + $0x130] sm:$0xff]
    %v4514 = vld [vmem:[#allocation3 + $0x138] sm:$0xff]
    %v4515 = vld [vmem:[#allocation3 + $0x140] sm:$0xff]
    %v4516 = vld [vmem:[#allocation3 + $0x148] sm:$0xff]
    %v4517 = vld [vmem:[#allocation3 + $0x150] sm:$0xff]
    %v4518 = vld [vmem:[#allocation3 + $0x158] sm:$0xff]
    %v4519 = vld [vmem:[#allocation3 + $0x160] sm:$0xff]
    %v4520 = vld [vmem:[#allocation3 + $0x168] sm:$0xff]
    %v4521 = vld [vmem:[#allocation3 + $0x170] sm:$0xff]
    %v4522 = vld [vmem:[#allocation3 + $0x178] sm:$0xff]
    %v4523 = vld [vmem:[#allocation3 + $0x180] sm:$0xff]
    %v4524 = vld [vmem:[#allocation3 + $0x188] sm:$0xff]
    %v4525 = vld [vmem:[#allocation3 + $0x190] sm:$0xff]
    %v4526 = vld [vmem:[#allocation3 + $0x198] sm:$0xff]
    %v4527 = vld [vmem:[#allocation3 + $0x1a0] sm:$0xff]
    %v4528 = vld [vmem:[#allocation3 + $0x1a8] sm:$0xff]
    %v4529 = vld [vmem:[#allocation3 + $0x1b0] sm:$0xff]
    %v4530 = vld [vmem:[#allocation3 + $0x1b8] sm:$0xff]
    %v4531 = vld [vmem:[#allocation3 + $0x1c0] sm:$0xff]
    %v4532 = vld [vmem:[#allocation3 + $0x1c8] sm:$0xff]
    %v4533 = vld [vmem:[#allocation3 + $0x1d0] sm:$0xff]
    %v4534 = vld [vmem:[#allocation3 + $0x1d8] sm:$0xff]
    %v4535 = vld [vmem:[#allocation3 + $0x1e0] sm:$0xff]
    %v4536 = vld [vmem:[#allocation3 + $0x1e8] sm:$0xff]
    %v4537 = vld [vmem:[#allocation3 + $0x1f0] sm:$0xff]
    %v4538 = vld [vmem:[#allocation3 + $0x1f8] sm:$0xff]
    %v4539 = vadd.f32 %v4475, %v4284
    %v4540 = vadd.f32 %v4476, %v4287
    %v4541 = vadd.f32 %v4477, %v4290
    %v4542 = vadd.f32 %v4478, %v4293
    %v4543 = vadd.f32 %v4479, %v4296
    %v4544 = vadd.f32 %v4480, %v4299
    %v4545 = vadd.f32 %v4481, %v4302
    %v4546 = vadd.f32 %v4482, %v4305
    %v4547 = vadd.f32 %v4483, %v4308
    %v4548 = vadd.f32 %v4484, %v4311
    %v4549 = vadd.f32 %v4485, %v4314
    %v4550 = vadd.f32 %v4486, %v4317
    %v4551 = vadd.f32 %v4487, %v4320
    %v4552 = vadd.f32 %v4488, %v4323
    %v4553 = vadd.f32 %v4489, %v4326
    %v4554 = vadd.f32 %v4490, %v4329
    %v4555 = vadd.f32 %v4491, %v4332
    %v4556 = vadd.f32 %v4492, %v4335
    %v4557 = vadd.f32 %v4493, %v4338
    %v4558 = vadd.f32 %v4494, %v4341
    %v4559 = vadd.f32 %v4495, %v4344
    %v4560 = vadd.f32 %v4496, %v4347
    %v4561 = vadd.f32 %v4497, %v4350
    %v4562 = vadd.f32 %v4498, %v4353
    %v4563 = vadd.f32 %v4499, %v4356
    %v4564 = vadd.f32 %v4500, %v4359
    %v4565 = vadd.f32 %v4501, %v4362
    %v4566 = vadd.f32 %v4502, %v4365
    %v4567 = vadd.f32 %v4503, %v4368
    %v4568 = vadd.f32 %v4504, %v4371
    %v4569 = vadd.f32 %v4505, %v4374
    %v4570 = vadd.f32 %v4506, %v4377
    %v4571 = vadd.f32 %v4507, %v4380
    %v4572 = vadd.f32 %v4508, %v4383
    %v4573 = vadd.f32 %v4509, %v4386
    %v4574 = vadd.f32 %v4510, %v4389
    %v4575 = vadd.f32 %v4511, %v4392
    %v4576 = vadd.f32 %v4512, %v4395
    %v4577 = vadd.f32 %v4513, %v4398
    %v4578 = vadd.f32 %v4514, %v4401
    %v4579 = vadd.f32 %v4515, %v4404
    %v4580 = vadd.f32 %v4516, %v4407
    %v4581 = vadd.f32 %v4517, %v4410
    %v4582 = vadd.f32 %v4518, %v4413
    %v4583 = vadd.f32 %v4519, %v4416
    %v4584 = vadd.f32 %v4520, %v4419
    %v4585 = vadd.f32 %v4521, %v4422
    %v4586 = vadd.f32 %v4522, %v4425
    %v4587 = vadd.f32 %v4523, %v4428
    %v4588 = vadd.f32 %v4524, %v4431
    %v4589 = vadd.f32 %v4525, %v4434
    %v4590 = vadd.f32 %v4526, %v4437
    %v4591 = vadd.f32 %v4527, %v4440
    %v4592 = vadd.f32 %v4528, %v4443
    %v4593 = vadd.f32 %v4529, %v4446
    %v4594 = vadd.f32 %v4530, %v4449
    %v4595 = vadd.f32 %v4531, %v4452
    %v4596 = vadd.f32 %v4532, %v4455
    %v4597 = vadd.f32 %v4533, %v4458
    %v4598 = vadd.f32 %v4534, %v4461
    %v4599 = vadd.f32 %v4535, %v4464
    %v4600 = vadd.f32 %v4536, %v4467
    %v4601 = vadd.f32 %v4537, %v4470
    %v4602 = vadd.f32 %v4538, %v4473
    %4603 = vst [vmem:[#allocation3] sm:$0xff] %v4539
    %4604 = vst [vmem:[#allocation3 + $0x8] sm:$0xff] %v4540
    %4605 = vst [vmem:[#allocation3 + $0x10] sm:$0xff] %v4541
    %4606 = vst [vmem:[#allocation3 + $0x18] sm:$0xff] %v4542
    %4607 = vst [vmem:[#allocation3 + $0x20] sm:$0xff] %v4543
    %4608 = vst [vmem:[#allocation3 + $0x28] sm:$0xff] %v4544
    %4609 = vst [vmem:[#allocation3 + $0x30] sm:$0xff] %v4545
    %4610 = vst [vmem:[#allocation3 + $0x38] sm:$0xff] %v4546
    %4611 = vst [vmem:[#allocation3 + $0x40] sm:$0xff] %v4547
    %4612 = vst [vmem:[#allocation3 + $0x48] sm:$0xff] %v4548
    %4613 = vst [vmem:[#allocation3 + $0x50] sm:$0xff] %v4549
    %4614 = vst [vmem:[#allocation3 + $0x58] sm:$0xff] %v4550
    %4615 = vst [vmem:[#allocation3 + $0x60] sm:$0xff] %v4551
    %4616 = vst [vmem:[#allocation3 + $0x68] sm:$0xff] %v4552
    %4617 = vst [vmem:[#allocation3 + $0x70] sm:$0xff] %v4553
    %4618 = vst [vmem:[#allocation3 + $0x78] sm:$0xff] %v4554
    %4619 = vst [vmem:[#allocation3 + $0x80] sm:$0xff] %v4555
    %4620 = vst [vmem:[#allocation3 + $0x88] sm:$0xff] %v4556
    %4621 = vst [vmem:[#allocation3 + $0x90] sm:$0xff] %v4557
    %4622 = vst [vmem:[#allocation3 + $0x98] sm:$0xff] %v4558
    %4623 = vst [vmem:[#allocation3 + $0xa0] sm:$0xff] %v4559
    %4624 = vst [vmem:[#allocation3 + $0xa8] sm:$0xff] %v4560
    %4625 = vst [vmem:[#allocation3 + $0xb0] sm:$0xff] %v4561
    %4626 = vst [vmem:[#allocation3 + $0xb8] sm:$0xff] %v4562
    %4627 = vst [vmem:[#allocation3 + $0xc0] sm:$0xff] %v4563
    %4628 = vst [vmem:[#allocation3 + $0xc8] sm:$0xff] %v4564
    %4629 = vst [vmem:[#allocation3 + $0xd0] sm:$0xff] %v4565
    %4630 = vst [vmem:[#allocation3 + $0xd8] sm:$0xff] %v4566
    %4631 = vst [vmem:[#allocation3 + $0xe0] sm:$0xff] %v4567
    %4632 = vst [vmem:[#allocation3 + $0xe8] sm:$0xff] %v4568
    %4633 = vst [vmem:[#allocation3 + $0xf0] sm:$0xff] %v4569
    %4634 = vst [vmem:[#allocation3 + $0xf8] sm:$0xff] %v4570
    %4635 = vst [vmem:[#allocation3 + $0x100] sm:$0xff] %v4571
    %4636 = vst [vmem:[#allocation3 + $0x108] sm:$0xff] %v4572
    %4637 = vst [vmem:[#allocation3 + $0x110] sm:$0xff] %v4573
    %4638 = vst [vmem:[#allocation3 + $0x118] sm:$0xff] %v4574
    %4639 = vst [vmem:[#allocation3 + $0x120] sm:$0xff] %v4575
    %4640 = vst [vmem:[#allocation3 + $0x128] sm:$0xff] %v4576
    %4641 = vst [vmem:[#allocation3 + $0x130] sm:$0xff] %v4577
    %4642 = vst [vmem:[#allocation3 + $0x138] sm:$0xff] %v4578
    %4643 = vst [vmem:[#allocation3 + $0x140] sm:$0xff] %v4579
    %4644 = vst [vmem:[#allocation3 + $0x148] sm:$0xff] %v4580
    %4645 = vst [vmem:[#allocation3 + $0x150] sm:$0xff] %v4581
    %4646 = vst [vmem:[#allocation3 + $0x158] sm:$0xff] %v4582
    %4647 = vst [vmem:[#allocation3 + $0x160] sm:$0xff] %v4583
    %4648 = vst [vmem:[#allocation3 + $0x168] sm:$0xff] %v4584
    %4649 = vst [vmem:[#allocation3 + $0x170] sm:$0xff] %v4585
    %4650 = vst [vmem:[#allocation3 + $0x178] sm:$0xff] %v4586
    %4651 = vst [vmem:[#allocation3 + $0x180] sm:$0xff] %v4587
    %4652 = vst [vmem:[#allocation3 + $0x188] sm:$0xff] %v4588
    %4653 = vst [vmem:[#allocation3 + $0x190] sm:$0xff] %v4589
    %4654 = vst [vmem:[#allocation3 + $0x198] sm:$0xff] %v4590
    %4655 = vst [vmem:[#allocation3 + $0x1a0] sm:$0xff] %v4591
    %4656 = vst [vmem:[#allocation3 + $0x1a8] sm:$0xff] %v4592
    %4657 = vst [vmem:[#allocation3 + $0x1b0] sm:$0xff] %v4593
    %4658 = vst [vmem:[#allocation3 + $0x1b8] sm:$0xff] %v4594
    %4659 = vst [vmem:[#allocation3 + $0x1c0] sm:$0xff] %v4595
    %4660 = vst [vmem:[#allocation3 + $0x1c8] sm:$0xff] %v4596
    %4661 = vst [vmem:[#allocation3 + $0x1d0] sm:$0xff] %v4597
    %4662 = vst [vmem:[#allocation3 + $0x1d8] sm:$0xff] %v4598
    %4663 = vst [vmem:[#allocation3 + $0x1e0] sm:$0xff] %v4599
    %4664 = vst [vmem:[#allocation3 + $0x1e8] sm:$0xff] %v4600
    %4665 = vst [vmem:[#allocation3 + $0x1f0] sm:$0xff] %v4601
    %4666 = vst [vmem:[#allocation3 + $0x1f8] sm:$0xff] %v4602
    %s4667 = scalar_lea.vmem [#allocation4], 320
    %v4668 = vld [vmem:[%s4667] sm:$0xff]
    %v4669 = vld [vmem:[%s4667 + $0x8] sm:$0xff]
    %v4670 = vld [vmem:[%s4667 + $0x10] sm:$0xff]
    %v4671 = vld [vmem:[%s4667 + $0x18] sm:$0xff]
    %v4672 = vld [vmem:[%s4667 + $0x20] sm:$0xf]
    %v4674 = vsel %vm34, %v3605, 0
    %v4677 = vsel %vm34, %v3606, 0
    %v4680 = vsel %vm34, %v3641, 0
    %v4683 = vsel %vm34, %v3642, 0
    %v4686 = vsel %vm932, %v4672, 0
    %4688 = vmatpush.msra.mxu0 0.0
    %4689 = vmatpush.msra.mxu0 0.0
    %4690 = vmatpush.msra.mxu0 0.0
    %4691 = vmatpush.msra.mxu0 0.0
    %4692 = vmatpush.msra.mxu0 0.0
    %4693 = vmatpush.msra.mxu0 0.0
    %4694 = vmatpush.msra.mxu0 0.0
    %4695 = vmatpush.msra.mxu0 0.0
    %4696 = vmatpush.msra.mxu0 0.0
    %4697 = vmatpush.msra.mxu0 0.0
    %4698 = vmatpush.msra.mxu0 0.0
    %4699 = vmatpush.msra.mxu0 %v4686
    %4700 = vmatpush.msra.mxu0 %v4671
    %4701 = vmatpush.msra.mxu0 %v4670
    %4702 = vmatpush.msra.mxu0 %v4669
    %4703 = vmatpush.msra.mxu0 %v4668
    %4704 = vmatmul.f32.gmra.mxu0 %v3662
    %v4705 = vpop.f32.mrf.mxu0
    %v4706 = vadd.f32 0.0, %v4705
    %4707 = vmatmul.f32.gmra.mxu0 %v3665
    %v4708 = vpop.f32.mrf.mxu0
    %v4709 = vadd.f32 0.0, %v4708
    %4710 = vmatmul.f32.gmra.mxu0 %v3668
    %v4711 = vpop.f32.mrf.mxu0
    %v4712 = vadd.f32 0.0, %v4711
    %4713 = vmatmul.f32.gmra.mxu0 %v3671
    %v4714 = vpop.f32.mrf.mxu0
    %v4715 = vadd.f32 0.0, %v4714
    %4716 = vmatmul.f32.gmra.mxu0 %v3674
    %v4717 = vpop.f32.mrf.mxu0
    %v4718 = vadd.f32 0.0, %v4717
    %4719 = vmatmul.f32.gmra.mxu0 %v3677
    %v4720 = vpop.f32.mrf.mxu0
    %v4721 = vadd.f32 0.0, %v4720
    %4722 = vmatmul.f32.gmra.mxu0 %v3680
    %v4723 = vpop.f32.mrf.mxu0
    %v4724 = vadd.f32 0.0, %v4723
    %4725 = vmatmul.f32.gmra.mxu0 %v3683
    %v4726 = vpop.f32.mrf.mxu0
    %v4727 = vadd.f32 0.0, %v4726
    %4728 = vmatmul.f32.gmra.mxu0 %v3686
    %v4729 = vpop.f32.mrf.mxu0
    %v4730 = vadd.f32 0.0, %v4729
    %4731 = vmatmul.f32.gmra.mxu0 %v3689
    %v4732 = vpop.f32.mrf.mxu0
    %v4733 = vadd.f32 0.0, %v4732
    %4734 = vmatmul.f32.gmra.mxu0 %v3692
    %v4735 = vpop.f32.mrf.mxu0
    %v4736 = vadd.f32 0.0, %v4735
    %4737 = vmatmul.f32.gmra.mxu0 %v3695
    %v4738 = vpop.f32.mrf.mxu0
    %v4739 = vadd.f32 0.0, %v4738
    %4740 = vmatmul.f32.gmra.mxu0 %v3698
    %v4741 = vpop.f32.mrf.mxu0
    %v4742 = vadd.f32 0.0, %v4741
    %4743 = vmatmul.f32.gmra.mxu0 %v3701
    %v4744 = vpop.f32.mrf.mxu0
    %v4745 = vadd.f32 0.0, %v4744
    %4746 = vmatmul.f32.gmra.mxu0 %v3704
    %v4747 = vpop.f32.mrf.mxu0
    %v4748 = vadd.f32 0.0, %v4747
    %4749 = vmatmul.f32.gmra.mxu0 %v3707
    %v4750 = vpop.f32.mrf.mxu0
    %v4751 = vadd.f32 0.0, %v4750
    %4752 = vmatmul.f32.gmra.mxu0 %v3710
    %v4753 = vpop.f32.mrf.mxu0
    %v4754 = vadd.f32 0.0, %v4753
    %4755 = vmatmul.f32.gmra.mxu0 %v3713
    %v4756 = vpop.f32.mrf.mxu0
    %v4757 = vadd.f32 0.0, %v4756
    %4758 = vmatmul.f32.gmra.mxu0 %v3716
    %v4759 = vpop.f32.mrf.mxu0
    %v4760 = vadd.f32 0.0, %v4759
    %4761 = vmatmul.f32.gmra.mxu0 %v3719
    %v4762 = vpop.f32.mrf.mxu0
    %v4763 = vadd.f32 0.0, %v4762
    %4764 = vmatmul.f32.gmra.mxu0 %v3722
    %v4765 = vpop.f32.mrf.mxu0
    %v4766 = vadd.f32 0.0, %v4765
    %4767 = vmatmul.f32.gmra.mxu0 %v3725
    %v4768 = vpop.f32.mrf.mxu0
    %v4769 = vadd.f32 0.0, %v4768
    %4770 = vmatmul.f32.gmra.mxu0 %v3728
    %v4771 = vpop.f32.mrf.mxu0
    %v4772 = vadd.f32 0.0, %v4771
    %4773 = vmatmul.f32.gmra.mxu0 %v3731
    %v4774 = vpop.f32.mrf.mxu0
    %v4775 = vadd.f32 0.0, %v4774
    %4776 = vmatmul.f32.gmra.mxu0 %v3734
    %v4777 = vpop.f32.mrf.mxu0
    %v4778 = vadd.f32 0.0, %v4777
    %4779 = vmatmul.f32.gmra.mxu0 %v3737
    %v4780 = vpop.f32.mrf.mxu0
    %v4781 = vadd.f32 0.0, %v4780
    %4782 = vmatmul.f32.gmra.mxu0 %v3740
    %v4783 = vpop.f32.mrf.mxu0
    %v4784 = vadd.f32 0.0, %v4783
    %4785 = vmatmul.f32.gmra.mxu0 %v3743
    %v4786 = vpop.f32.mrf.mxu0
    %v4787 = vadd.f32 0.0, %v4786
    %4788 = vmatmul.f32.gmra.mxu0 %v4252
    %v4789 = vpop.f32.mrf.mxu0
    %v4790 = vadd.f32 0.0, %v4789
    %4791 = vmatmul.f32.gmra.mxu0 %v4255
    %v4792 = vpop.f32.mrf.mxu0
    %v4793 = vadd.f32 0.0, %v4792
    %4794 = vmatmul.f32.gmra.mxu0 %v4674
    %v4795 = vpop.f32.mrf.mxu0
    %v4796 = vadd.f32 0.0, %v4795
    %4797 = vmatmul.f32.gmra.mxu0 %v4677
    %v4798 = vpop.f32.mrf.mxu0
    %v4799 = vadd.f32 0.0, %v4798
    %4800 = vmatmul.f32.gmra.mxu0 %v3758
    %v4801 = vpop.f32.mrf.mxu0
    %v4802 = vadd.f32 0.0, %v4801
    %4803 = vmatmul.f32.gmra.mxu0 %v3761
    %v4804 = vpop.f32.mrf.mxu0
    %v4805 = vadd.f32 0.0, %v4804
    %4806 = vmatmul.f32.gmra.mxu0 %v3764
    %v4807 = vpop.f32.mrf.mxu0
    %v4808 = vadd.f32 0.0, %v4807
    %4809 = vmatmul.f32.gmra.mxu0 %v3767
    %v4810 = vpop.f32.mrf.mxu0
    %v4811 = vadd.f32 0.0, %v4810
    %4812 = vmatmul.f32.gmra.mxu0 %v3770
    %v4813 = vpop.f32.mrf.mxu0
    %v4814 = vadd.f32 0.0, %v4813
    %4815 = vmatmul.f32.gmra.mxu0 %v3773
    %v4816 = vpop.f32.mrf.mxu0
    %v4817 = vadd.f32 0.0, %v4816
    %4818 = vmatmul.f32.gmra.mxu0 %v3776
    %v4819 = vpop.f32.mrf.mxu0
    %v4820 = vadd.f32 0.0, %v4819
    %4821 = vmatmul.f32.gmra.mxu0 %v3779
    %v4822 = vpop.f32.mrf.mxu0
    %v4823 = vadd.f32 0.0, %v4822
    %4824 = vmatmul.f32.gmra.mxu0 %v3782
    %v4825 = vpop.f32.mrf.mxu0
    %v4826 = vadd.f32 0.0, %v4825
    %4827 = vmatmul.f32.gmra.mxu0 %v3785
    %v4828 = vpop.f32.mrf.mxu0
    %v4829 = vadd.f32 0.0, %v4828
    %4830 = vmatmul.f32.gmra.mxu0 %v3788
    %v4831 = vpop.f32.mrf.mxu0
    %v4832 = vadd.f32 0.0, %v4831
    %4833 = vmatmul.f32.gmra.mxu0 %v3791
    %v4834 = vpop.f32.mrf.mxu0
    %v4835 = vadd.f32 0.0, %v4834
    %4836 = vmatmul.f32.gmra.mxu0 %v3794
    %v4837 = vpop.f32.mrf.mxu0
    %v4838 = vadd.f32 0.0, %v4837
    %4839 = vmatmul.f32.gmra.mxu0 %v3797
    %v4840 = vpop.f32.mrf.mxu0
    %v4841 = vadd.f32 0.0, %v4840
    %4842 = vmatmul.f32.gmra.mxu0 %v3800
    %v4843 = vpop.f32.mrf.mxu0
    %v4844 = vadd.f32 0.0, %v4843
    %4845 = vmatmul.f32.gmra.mxu0 %v3803
    %v4846 = vpop.f32.mrf.mxu0
    %v4847 = vadd.f32 0.0, %v4846
    %4848 = vmatmul.f32.gmra.mxu0 %v3806
    %v4849 = vpop.f32.mrf.mxu0
    %v4850 = vadd.f32 0.0, %v4849
    %4851 = vmatmul.f32.gmra.mxu0 %v3809
    %v4852 = vpop.f32.mrf.mxu0
    %v4853 = vadd.f32 0.0, %v4852
    %4854 = vmatmul.f32.gmra.mxu0 %v3812
    %v4855 = vpop.f32.mrf.mxu0
    %v4856 = vadd.f32 0.0, %v4855
    %4857 = vmatmul.f32.gmra.mxu0 %v3815
    %v4858 = vpop.f32.mrf.mxu0
    %v4859 = vadd.f32 0.0, %v4858
    %4860 = vmatmul.f32.gmra.mxu0 %v3818
    %v4861 = vpop.f32.mrf.mxu0
    %v4862 = vadd.f32 0.0, %v4861
    %4863 = vmatmul.f32.gmra.mxu0 %v3821
    %v4864 = vpop.f32.mrf.mxu0
    %v4865 = vadd.f32 0.0, %v4864
    %4866 = vmatmul.f32.gmra.mxu0 %v3824
    %v4867 = vpop.f32.mrf.mxu0
    %v4868 = vadd.f32 0.0, %v4867
    %4869 = vmatmul.f32.gmra.mxu0 %v3827
    %v4870 = vpop.f32.mrf.mxu0
    %v4871 = vadd.f32 0.0, %v4870
    %4872 = vmatmul.f32.gmra.mxu0 %v3830
    %v4873 = vpop.f32.mrf.mxu0
    %v4874 = vadd.f32 0.0, %v4873
    %4875 = vmatmul.f32.gmra.mxu0 %v3833
    %v4876 = vpop.f32.mrf.mxu0
    %v4877 = vadd.f32 0.0, %v4876
    %4878 = vmatmul.f32.gmra.mxu0 %v3836
    %v4879 = vpop.f32.mrf.mxu0
    %v4880 = vadd.f32 0.0, %v4879
    %4881 = vmatmul.f32.gmra.mxu0 %v3839
    %v4882 = vpop.f32.mrf.mxu0
    %v4883 = vadd.f32 0.0, %v4882
    %4884 = vmatmul.f32.gmra.mxu0 %v4258
    %v4885 = vpop.f32.mrf.mxu0
    %v4886 = vadd.f32 0.0, %v4885
    %4887 = vmatmul.f32.gmra.mxu0 %v4261
    %v4888 = vpop.f32.mrf.mxu0
    %v4889 = vadd.f32 0.0, %v4888
    %4890 = vmatmul.f32.gmra.mxu0 %v4680
    %v4891 = vpop.f32.mrf.mxu0
    %v4892 = vadd.f32 0.0, %v4891
    %4893 = vmatmul.f32.gmra.mxu0 %v4683
    %v4894 = vpop.f32.mrf.mxu0
    %v4895 = vadd.f32 0.0, %v4894
    %4896 = vdwg.mxu0
    %v4897 = vld [vmem:[#allocation3] sm:$0xff]
    %v4898 = vld [vmem:[#allocation3 + $0x8] sm:$0xff]
    %v4899 = vld [vmem:[#allocation3 + $0x10] sm:$0xff]
    %v4900 = vld [vmem:[#allocation3 + $0x18] sm:$0xff]
    %v4901 = vld [vmem:[#allocation3 + $0x20] sm:$0xff]
    %v4902 = vld [vmem:[#allocation3 + $0x28] sm:$0xff]
    %v4903 = vld [vmem:[#allocation3 + $0x30] sm:$0xff]
    %v4904 = vld [vmem:[#allocation3 + $0x38] sm:$0xff]
    %v4905 = vld [vmem:[#allocation3 + $0x40] sm:$0xff]
    %v4906 = vld [vmem:[#allocation3 + $0x48] sm:$0xff]
    %v4907 = vld [vmem:[#allocation3 + $0x50] sm:$0xff]
    %v4908 = vld [vmem:[#allocation3 + $0x58] sm:$0xff]
    %v4909 = vld [vmem:[#allocation3 + $0x60] sm:$0xff]
    %v4910 = vld [vmem:[#allocation3 + $0x68] sm:$0xff]
    %v4911 = vld [vmem:[#allocation3 + $0x70] sm:$0xff]
    %v4912 = vld [vmem:[#allocation3 + $0x78] sm:$0xff]
    %v4913 = vld [vmem:[#allocation3 + $0x80] sm:$0xff]
    %v4914 = vld [vmem:[#allocation3 + $0x88] sm:$0xff]
    %v4915 = vld [vmem:[#allocation3 + $0x90] sm:$0xff]
    %v4916 = vld [vmem:[#allocation3 + $0x98] sm:$0xff]
    %v4917 = vld [vmem:[#allocation3 + $0xa0] sm:$0xff]
    %v4918 = vld [vmem:[#allocation3 + $0xa8] sm:$0xff]
    %v4919 = vld [vmem:[#allocation3 + $0xb0] sm:$0xff]
    %v4920 = vld [vmem:[#allocation3 + $0xb8] sm:$0xff]
    %v4921 = vld [vmem:[#allocation3 + $0xc0] sm:$0xff]
    %v4922 = vld [vmem:[#allocation3 + $0xc8] sm:$0xff]
    %v4923 = vld [vmem:[#allocation3 + $0xd0] sm:$0xff]
    %v4924 = vld [vmem:[#allocation3 + $0xd8] sm:$0xff]
    %v4925 = vld [vmem:[#allocation3 + $0xe0] sm:$0xff]
    %v4926 = vld [vmem:[#allocation3 + $0xe8] sm:$0xff]
    %v4927 = vld [vmem:[#allocation3 + $0xf0] sm:$0xff]
    %v4928 = vld [vmem:[#allocation3 + $0xf8] sm:$0xff]
    %v4929 = vld [vmem:[#allocation3 + $0x100] sm:$0xff]
    %v4930 = vld [vmem:[#allocation3 + $0x108] sm:$0xff]
    %v4931 = vld [vmem:[#allocation3 + $0x110] sm:$0xff]
    %v4932 = vld [vmem:[#allocation3 + $0x118] sm:$0xff]
    %v4933 = vld [vmem:[#allocation3 + $0x120] sm:$0xff]
    %v4934 = vld [vmem:[#allocation3 + $0x128] sm:$0xff]
    %v4935 = vld [vmem:[#allocation3 + $0x130] sm:$0xff]
    %v4936 = vld [vmem:[#allocation3 + $0x138] sm:$0xff]
    %v4937 = vld [vmem:[#allocation3 + $0x140] sm:$0xff]
    %v4938 = vld [vmem:[#allocation3 + $0x148] sm:$0xff]
    %v4939 = vld [vmem:[#allocation3 + $0x150] sm:$0xff]
    %v4940 = vld [vmem:[#allocation3 + $0x158] sm:$0xff]
    %v4941 = vld [vmem:[#allocation3 + $0x160] sm:$0xff]
    %v4942 = vld [vmem:[#allocation3 + $0x168] sm:$0xff]
    %v4943 = vld [vmem:[#allocation3 + $0x170] sm:$0xff]
    %v4944 = vld [vmem:[#allocation3 + $0x178] sm:$0xff]
    %v4945 = vld [vmem:[#allocation3 + $0x180] sm:$0xff]
    %v4946 = vld [vmem:[#allocation3 + $0x188] sm:$0xff]
    %v4947 = vld [vmem:[#allocation3 + $0x190] sm:$0xff]
    %v4948 = vld [vmem:[#allocation3 + $0x198] sm:$0xff]
    %v4949 = vld [vmem:[#allocation3 + $0x1a0] sm:$0xff]
    %v4950 = vld [vmem:[#allocation3 + $0x1a8] sm:$0xff]
    %v4951 = vld [vmem:[#allocation3 + $0x1b0] sm:$0xff]
    %v4952 = vld [vmem:[#allocation3 + $0x1b8] sm:$0xff]
    %v4953 = vld [vmem:[#allocation3 + $0x1c0] sm:$0xff]
    %v4954 = vld [vmem:[#allocation3 + $0x1c8] sm:$0xff]
    %v4955 = vld [vmem:[#allocation3 + $0x1d0] sm:$0xff]
    %v4956 = vld [vmem:[#allocation3 + $0x1d8] sm:$0xff]
    %v4957 = vld [vmem:[#allocation3 + $0x1e0] sm:$0xff]
    %v4958 = vld [vmem:[#allocation3 + $0x1e8] sm:$0xff]
    %v4959 = vld [vmem:[#allocation3 + $0x1f0] sm:$0xff]
    %v4960 = vld [vmem:[#allocation3 + $0x1f8] sm:$0xff]
    %v4961 = vadd.f32 %v4897, %v4706
    %v4962 = vadd.f32 %v4898, %v4709
    %v4963 = vadd.f32 %v4899, %v4712
    %v4964 = vadd.f32 %v4900, %v4715
    %v4965 = vadd.f32 %v4901, %v4718
    %v4966 = vadd.f32 %v4902, %v4721
    %v4967 = vadd.f32 %v4903, %v4724
    %v4968 = vadd.f32 %v4904, %v4727
    %v4969 = vadd.f32 %v4905, %v4730
    %v4970 = vadd.f32 %v4906, %v4733
    %v4971 = vadd.f32 %v4907, %v4736
    %v4972 = vadd.f32 %v4908, %v4739
    %v4973 = vadd.f32 %v4909, %v4742
    %v4974 = vadd.f32 %v4910, %v4745
    %v4975 = vadd.f32 %v4911, %v4748
    %v4976 = vadd.f32 %v4912, %v4751
    %v4977 = vadd.f32 %v4913, %v4754
    %v4978 = vadd.f32 %v4914, %v4757
    %v4979 = vadd.f32 %v4915, %v4760
    %v4980 = vadd.f32 %v4916, %v4763
    %v4981 = vadd.f32 %v4917, %v4766
    %v4982 = vadd.f32 %v4918, %v4769
    %v4983 = vadd.f32 %v4919, %v4772
    %v4984 = vadd.f32 %v4920, %v4775
    %v4985 = vadd.f32 %v4921, %v4778
    %v4986 = vadd.f32 %v4922, %v4781
    %v4987 = vadd.f32 %v4923, %v4784
    %v4988 = vadd.f32 %v4924, %v4787
    %v4989 = vadd.f32 %v4925, %v4790
    %v4990 = vadd.f32 %v4926, %v4793
    %v4991 = vadd.f32 %v4927, %v4796
    %v4992 = vadd.f32 %v4928, %v4799
    %v4993 = vadd.f32 %v4929, %v4802
    %v4994 = vadd.f32 %v4930, %v4805
    %v4995 = vadd.f32 %v4931, %v4808
    %v4996 = vadd.f32 %v4932, %v4811
    %v4997 = vadd.f32 %v4933, %v4814
    %v4998 = vadd.f32 %v4934, %v4817
    %v4999 = vadd.f32 %v4935, %v4820
    %v5000 = vadd.f32 %v4936, %v4823
    %v5001 = vadd.f32 %v4937, %v4826
    %v5002 = vadd.f32 %v4938, %v4829
    %v5003 = vadd.f32 %v4939, %v4832
    %v5004 = vadd.f32 %v4940, %v4835
    %v5005 = vadd.f32 %v4941, %v4838
    %v5006 = vadd.f32 %v4942, %v4841
    %v5007 = vadd.f32 %v4943, %v4844
    %v5008 = vadd.f32 %v4944, %v4847
    %v5009 = vadd.f32 %v4945, %v4850
    %v5010 = vadd.f32 %v4946, %v4853
    %v5011 = vadd.f32 %v4947, %v4856
    %v5012 = vadd.f32 %v4948, %v4859
    %v5013 = vadd.f32 %v4949, %v4862
    %v5014 = vadd.f32 %v4950, %v4865
    %v5015 = vadd.f32 %v4951, %v4868
    %v5016 = vadd.f32 %v4952, %v4871
    %v5017 = vadd.f32 %v4953, %v4874
    %v5018 = vadd.f32 %v4954, %v4877
    %v5019 = vadd.f32 %v4955, %v4880
    %v5020 = vadd.f32 %v4956, %v4883
    %v5021 = vadd.f32 %v4957, %v4886
    %v5022 = vadd.f32 %v4958, %v4889
    %v5023 = vadd.f32 %v4959, %v4892
    %v5024 = vadd.f32 %v4960, %v4895
    %5025 = vst [vmem:[#allocation3] sm:$0xff] %v4961
    %5026 = vst [vmem:[#allocation3 + $0x8] sm:$0xff] %v4962
    %5027 = vst [vmem:[#allocation3 + $0x10] sm:$0xff] %v4963
    %5028 = vst [vmem:[#allocation3 + $0x18] sm:$0xff] %v4964
    %5029 = vst [vmem:[#allocation3 + $0x20] sm:$0xff] %v4965
    %5030 = vst [vmem:[#allocation3 + $0x28] sm:$0xff] %v4966
    %5031 = vst [vmem:[#allocation3 + $0x30] sm:$0xff] %v4967
    %5032 = vst [vmem:[#allocation3 + $0x38] sm:$0xff] %v4968
    %5033 = vst [vmem:[#allocation3 + $0x40] sm:$0xff] %v4969
    %5034 = vst [vmem:[#allocation3 + $0x48] sm:$0xff] %v4970
    %5035 = vst [vmem:[#allocation3 + $0x50] sm:$0xff] %v4971
    %5036 = vst [vmem:[#allocation3 + $0x58] sm:$0xff] %v4972
    %5037 = vst [vmem:[#allocation3 + $0x60] sm:$0xff] %v4973
    %5038 = vst [vmem:[#allocation3 + $0x68] sm:$0xff] %v4974
    %5039 = vst [vmem:[#allocation3 + $0x70] sm:$0xff] %v4975
    %5040 = vst [vmem:[#allocation3 + $0x78] sm:$0xff] %v4976
    %5041 = vst [vmem:[#allocation3 + $0x80] sm:$0xff] %v4977
    %5042 = vst [vmem:[#allocation3 + $0x88] sm:$0xff] %v4978
    %5043 = vst [vmem:[#allocation3 + $0x90] sm:$0xff] %v4979
    %5044 = vst [vmem:[#allocation3 + $0x98] sm:$0xff] %v4980
    %5045 = vst [vmem:[#allocation3 + $0xa0] sm:$0xff] %v4981
    %5046 = vst [vmem:[#allocation3 + $0xa8] sm:$0xff] %v4982
    %5047 = vst [vmem:[#allocation3 + $0xb0] sm:$0xff] %v4983
    %5048 = vst [vmem:[#allocation3 + $0xb8] sm:$0xff] %v4984
    %5049 = vst [vmem:[#allocation3 + $0xc0] sm:$0xff] %v4985
    %5050 = vst [vmem:[#allocation3 + $0xc8] sm:$0xff] %v4986
    %5051 = vst [vmem:[#allocation3 + $0xd0] sm:$0xff] %v4987
    %5052 = vst [vmem:[#allocation3 + $0xd8] sm:$0xff] %v4988
    %5053 = vst [vmem:[#allocation3 + $0xe0] sm:$0xff] %v4989
    %5054 = vst [vmem:[#allocation3 + $0xe8] sm:$0xff] %v4990
    %5055 = vst [vmem:[#allocation3 + $0xf0] sm:$0xff] %v4991
    %5056 = vst [vmem:[#allocation3 + $0xf8] sm:$0xff] %v4992
    %5057 = vst [vmem:[#allocation3 + $0x100] sm:$0xff] %v4993
    %5058 = vst [vmem:[#allocation3 + $0x108] sm:$0xff] %v4994
    %5059 = vst [vmem:[#allocation3 + $0x110] sm:$0xff] %v4995
    %5060 = vst [vmem:[#allocation3 + $0x118] sm:$0xff] %v4996
    %5061 = vst [vmem:[#allocation3 + $0x120] sm:$0xff] %v4997
    %5062 = vst [vmem:[#allocation3 + $0x128] sm:$0xff] %v4998
    %5063 = vst [vmem:[#allocation3 + $0x130] sm:$0xff] %v4999
    %5064 = vst [vmem:[#allocation3 + $0x138] sm:$0xff] %v5000
    %5065 = vst [vmem:[#allocation3 + $0x140] sm:$0xff] %v5001
    %5066 = vst [vmem:[#allocation3 + $0x148] sm:$0xff] %v5002
    %5067 = vst [vmem:[#allocation3 + $0x150] sm:$0xff] %v5003
    %5068 = vst [vmem:[#allocation3 + $0x158] sm:$0xff] %v5004
    %5069 = vst [vmem:[#allocation3 + $0x160] sm:$0xff] %v5005
    %5070 = vst [vmem:[#allocation3 + $0x168] sm:$0xff] %v5006
    %5071 = vst [vmem:[#allocation3 + $0x170] sm:$0xff] %v5007
    %5072 = vst [vmem:[#allocation3 + $0x178] sm:$0xff] %v5008
    %5073 = vst [vmem:[#allocation3 + $0x180] sm:$0xff] %v5009
    %5074 = vst [vmem:[#allocation3 + $0x188] sm:$0xff] %v5010
    %5075 = vst [vmem:[#allocation3 + $0x190] sm:$0xff] %v5011
    %5076 = vst [vmem:[#allocation3 + $0x198] sm:$0xff] %v5012
    %5077 = vst [vmem:[#allocation3 + $0x1a0] sm:$0xff] %v5013
    %5078 = vst [vmem:[#allocation3 + $0x1a8] sm:$0xff] %v5014
    %5079 = vst [vmem:[#allocation3 + $0x1b0] sm:$0xff] %v5015
    %5080 = vst [vmem:[#allocation3 + $0x1b8] sm:$0xff] %v5016
    %5081 = vst [vmem:[#allocation3 + $0x1c0] sm:$0xff] %v5017
    %5082 = vst [vmem:[#allocation3 + $0x1c8] sm:$0xff] %v5018
    %5083 = vst [vmem:[#allocation3 + $0x1d0] sm:$0xff] %v5019
    %5084 = vst [vmem:[#allocation3 + $0x1d8] sm:$0xff] %v5020
    %5085 = vst [vmem:[#allocation3 + $0x1e0] sm:$0xff] %v5021
    %5086 = vst [vmem:[#allocation3 + $0x1e8] sm:$0xff] %v5022
    %5087 = vst [vmem:[#allocation3 + $0x1f0] sm:$0xff] %v5023
    %5088 = vst [vmem:[#allocation3 + $0x1f8] sm:$0xff] %v5024
    %v5089 = vld [vmem:[#allocation3] sm:$0xff]
    %v5090 = vld [vmem:[#allocation3 + $0x8] sm:$0xff]
    %v5091 = vld [vmem:[#allocation3 + $0x10] sm:$0xff]
    %v5092 = vld [vmem:[#allocation3 + $0x18] sm:$0xff]
    %v5093 = vld [vmem:[#allocation3 + $0x20] sm:$0xff]
    %v5094 = vld [vmem:[#allocation3 + $0x28] sm:$0xff]
    %v5095 = vld [vmem:[#allocation3 + $0x30] sm:$0xff]
    %v5096 = vld [vmem:[#allocation3 + $0x38] sm:$0xff]
    %v5097 = vld [vmem:[#allocation3 + $0x40] sm:$0xff]
    %v5098 = vld [vmem:[#allocation3 + $0x48] sm:$0xff]
    %v5099 = vld [vmem:[#allocation3 + $0x50] sm:$0xff]
    %v5100 = vld [vmem:[#allocation3 + $0x58] sm:$0xff]
    %v5101 = vld [vmem:[#allocation3 + $0x60] sm:$0xff]
    %v5102 = vld [vmem:[#allocation3 + $0x68] sm:$0xff]
    %v5103 = vld [vmem:[#allocation3 + $0x70] sm:$0xff]
    %v5104 = vld [vmem:[#allocation3 + $0x78] sm:$0xff]
    %v5105 = vld [vmem:[#allocation3 + $0x80] sm:$0xff]
    %v5106 = vld [vmem:[#allocation3 + $0x88] sm:$0xff]
    %v5107 = vld [vmem:[#allocation3 + $0x90] sm:$0xff]
    %v5108 = vld [vmem:[#allocation3 + $0x98] sm:$0xff]
    %v5109 = vld [vmem:[#allocation3 + $0xa0] sm:$0xff]
    %v5110 = vld [vmem:[#allocation3 + $0xa8] sm:$0xff]
    %v5111 = vld [vmem:[#allocation3 + $0xb0] sm:$0xff]
    %v5112 = vld [vmem:[#allocation3 + $0xb8] sm:$0xff]
    %v5113 = vld [vmem:[#allocation3 + $0xc0] sm:$0xff]
    %v5114 = vld [vmem:[#allocation3 + $0xc8] sm:$0xff]
    %v5115 = vld [vmem:[#allocation3 + $0xd0] sm:$0xff]
    %v5116 = vld [vmem:[#allocation3 + $0xd8] sm:$0xff]
    %v5117 = vld [vmem:[#allocation3 + $0xe0] sm:$0xff]
    %v5118 = vld [vmem:[#allocation3 + $0xe8] sm:$0xff]
    %v5119 = vld [vmem:[#allocation3 + $0xf0] sm:$0xff]
    %v5120 = vld [vmem:[#allocation3 + $0xf8] sm:$0xff]
    %v5121 = vld [vmem:[#allocation3 + $0x100] sm:$0xff]
    %v5122 = vld [vmem:[#allocation3 + $0x108] sm:$0xff]
    %v5123 = vld [vmem:[#allocation3 + $0x110] sm:$0xff]
    %v5124 = vld [vmem:[#allocation3 + $0x118] sm:$0xff]
    %v5125 = vld [vmem:[#allocation3 + $0x120] sm:$0xff]
    %v5126 = vld [vmem:[#allocation3 + $0x128] sm:$0xff]
    %v5127 = vld [vmem:[#allocation3 + $0x130] sm:$0xff]
    %v5128 = vld [vmem:[#allocation3 + $0x138] sm:$0xff]
    %v5129 = vld [vmem:[#allocation3 + $0x140] sm:$0xff]
    %v5130 = vld [vmem:[#allocation3 + $0x148] sm:$0xff]
    %v5131 = vld [vmem:[#allocation3 + $0x150] sm:$0xff]
    %v5132 = vld [vmem:[#allocation3 + $0x158] sm:$0xff]
    %v5133 = vld [vmem:[#allocation3 + $0x160] sm:$0xff]
    %v5134 = vld [vmem:[#allocation3 + $0x168] sm:$0xff]
    %v5135 = vld [vmem:[#allocation3 + $0x170] sm:$0xff]
    %v5136 = vld [vmem:[#allocation3 + $0x178] sm:$0xff]
    %v5137 = vld [vmem:[#allocation3 + $0x180] sm:$0xff]
    %v5138 = vld [vmem:[#allocation3 + $0x188] sm:$0xff]
    %v5139 = vld [vmem:[#allocation3 + $0x190] sm:$0xff]
    %v5140 = vld [vmem:[#allocation3 + $0x198] sm:$0xff]
    %v5141 = vld [vmem:[#allocation3 + $0x1a0] sm:$0xff]
    %v5142 = vld [vmem:[#allocation3 + $0x1a8] sm:$0xff]
    %v5143 = vld [vmem:[#allocation3 + $0x1b0] sm:$0xff]
    %v5144 = vld [vmem:[#allocation3 + $0x1b8] sm:$0xff]
    %v5145 = vld [vmem:[#allocation3 + $0x1c0] sm:$0xff]
    %v5146 = vld [vmem:[#allocation3 + $0x1c8] sm:$0xff]
    %v5147 = vld [vmem:[#allocation3 + $0x1d0] sm:$0xff]
    %v5148 = vld [vmem:[#allocation3 + $0x1d8] sm:$0xff]
    %v5149 = vld [vmem:[#allocation3 + $0x1e0] sm:$0xff]
    %v5150 = vld [vmem:[#allocation3 + $0x1e8] sm:$0xff]
    %v5151 = vld [vmem:[#allocation3 + $0x1f0] sm:$0xff]
    %v5152 = vld [vmem:[#allocation3 + $0x1f8] sm:$0xff]
    %5153 = vxpose.xlu0.b32.start [1/16] %v5089, 128
    %5154 = vxpose.xlu0.b32.cont [2/16] %v5090, 128
    %5155 = vxpose.xlu0.b32.cont [3/16] %v5091, 128
    %5156 = vxpose.xlu0.b32.cont [4/16] %v5092, 128
    %5157 = vxpose.xlu0.b32.cont [5/16] %v5093, 128
    %5158 = vxpose.xlu0.b32.cont [6/16] %v5094, 128
    %5159 = vxpose.xlu0.b32.cont [7/16] %v5095, 128
    %5160 = vxpose.xlu0.b32.cont [8/16] %v5096, 128
    %5161 = vxpose.xlu0.b32.cont [9/16] %v5097, 128
    %5162 = vxpose.xlu0.b32.cont [10/16] %v5098, 128
    %5163 = vxpose.xlu0.b32.cont [11/16] %v5099, 128
    %5164 = vxpose.xlu0.b32.cont [12/16] %v5100, 128
    %5165 = vxpose.xlu0.b32.cont [13/16] %v5101, 128
    %5166 = vxpose.xlu0.b32.cont [14/16] %v5102, 128
    %5167 = vxpose.xlu0.b32.cont [15/16] %v5103, 128
    %5168 = vxpose.xlu0.b32.end [16/16] %v5104, 128
    %v5169 = vpop.trf.xlu0
    %v5170 = vpop.trf.xlu0
    %v5171 = vpop.trf.xlu0
    %v5172 = vpop.trf.xlu0
    %v5173 = vpop.trf.xlu0
    %v5174 = vpop.trf.xlu0
    %v5175 = vpop.trf.xlu0
    %v5176 = vpop.trf.xlu0
    %v5177 = vpop.trf.xlu0
    %v5178 = vpop.trf.xlu0
    %v5179 = vpop.trf.xlu0
    %v5180 = vpop.trf.xlu0
    %v5181 = vpop.trf.xlu0
    %v5182 = vpop.trf.xlu0
    %v5183 = vpop.trf.xlu0
    %v5184 = vpop.trf.xlu0
    %5185 = vxpose.xlu0.b32.start [1/16] %v5105, 128
    %5186 = vxpose.xlu0.b32.cont [2/16] %v5106, 128
    %5187 = vxpose.xlu0.b32.cont [3/16] %v5107, 128
    %5188 = vxpose.xlu0.b32.cont [4/16] %v5108, 128
    %5189 = vxpose.xlu0.b32.cont [5/16] %v5109, 128
    %5190 = vxpose.xlu0.b32.cont [6/16] %v5110, 128
    %5191 = vxpose.xlu0.b32.cont [7/16] %v5111, 128
    %5192 = vxpose.xlu0.b32.cont [8/16] %v5112, 128
    %5193 = vxpose.xlu0.b32.cont [9/16] %v5113, 128
    %5194 = vxpose.xlu0.b32.cont [10/16] %v5114, 128
    %5195 = vxpose.xlu0.b32.cont [11/16] %v5115, 128
    %5196 = vxpose.xlu0.b32.cont [12/16] %v5116, 128
    %5197 = vxpose.xlu0.b32.cont [13/16] %v5117, 128
    %5198 = vxpose.xlu0.b32.cont [14/16] %v5118, 128
    %5199 = vxpose.xlu0.b32.cont [15/16] %v5119, 128
    %5200 = vxpose.xlu0.b32.end [16/16] %v5120, 128
    %v5201 = vpop.trf.xlu0
    %v5202 = vpop.trf.xlu0
    %v5203 = vpop.trf.xlu0
    %v5204 = vpop.trf.xlu0
    %v5205 = vpop.trf.xlu0
    %v5206 = vpop.trf.xlu0
    %v5207 = vpop.trf.xlu0
    %v5208 = vpop.trf.xlu0
    %v5209 = vpop.trf.xlu0
    %v5210 = vpop.trf.xlu0
    %v5211 = vpop.trf.xlu0
    %v5212 = vpop.trf.xlu0
    %v5213 = vpop.trf.xlu0
    %v5214 = vpop.trf.xlu0
    %v5215 = vpop.trf.xlu0
    %v5216 = vpop.trf.xlu0
    %5217 = vxpose.xlu0.b32.start [1/16] %v5121, 128
    %5218 = vxpose.xlu0.b32.cont [2/16] %v5122, 128
    %5219 = vxpose.xlu0.b32.cont [3/16] %v5123, 128
    %5220 = vxpose.xlu0.b32.cont [4/16] %v5124, 128
    %5221 = vxpose.xlu0.b32.cont [5/16] %v5125, 128
    %5222 = vxpose.xlu0.b32.cont [6/16] %v5126, 128
    %5223 = vxpose.xlu0.b32.cont [7/16] %v5127, 128
    %5224 = vxpose.xlu0.b32.cont [8/16] %v5128, 128
    %5225 = vxpose.xlu0.b32.cont [9/16] %v5129, 128
    %5226 = vxpose.xlu0.b32.cont [10/16] %v5130, 128
    %5227 = vxpose.xlu0.b32.cont [11/16] %v5131, 128
    %5228 = vxpose.xlu0.b32.cont [12/16] %v5132, 128
    %5229 = vxpose.xlu0.b32.cont [13/16] %v5133, 128
    %5230 = vxpose.xlu0.b32.cont [14/16] %v5134, 128
    %5231 = vxpose.xlu0.b32.cont [15/16] %v5135, 128
    %5232 = vxpose.xlu0.b32.end [16/16] %v5136, 128
    %v5233 = vpop.trf.xlu0
    %v5234 = vpop.trf.xlu0
    %v5235 = vpop.trf.xlu0
    %v5236 = vpop.trf.xlu0
    %v5237 = vpop.trf.xlu0
    %v5238 = vpop.trf.xlu0
    %v5239 = vpop.trf.xlu0
    %v5240 = vpop.trf.xlu0
    %v5241 = vpop.trf.xlu0
    %v5242 = vpop.trf.xlu0
    %v5243 = vpop.trf.xlu0
    %v5244 = vpop.trf.xlu0
    %v5245 = vpop.trf.xlu0
    %v5246 = vpop.trf.xlu0
    %v5247 = vpop.trf.xlu0
    %v5248 = vpop.trf.xlu0
    %5249 = vxpose.xlu0.b32.start [1/16] %v5137, 128
    %5250 = vxpose.xlu0.b32.cont [2/16] %v5138, 128
    %5251 = vxpose.xlu0.b32.cont [3/16] %v5139, 128
    %5252 = vxpose.xlu0.b32.cont [4/16] %v5140, 128
    %5253 = vxpose.xlu0.b32.cont [5/16] %v5141, 128
    %5254 = vxpose.xlu0.b32.cont [6/16] %v5142, 128
    %5255 = vxpose.xlu0.b32.cont [7/16] %v5143, 128
    %5256 = vxpose.xlu0.b32.cont [8/16] %v5144, 128
    %5257 = vxpose.xlu0.b32.cont [9/16] %v5145, 128
    %5258 = vxpose.xlu0.b32.cont [10/16] %v5146, 128
    %5259 = vxpose.xlu0.b32.cont [11/16] %v5147, 128
    %5260 = vxpose.xlu0.b32.cont [12/16] %v5148, 128
    %5261 = vxpose.xlu0.b32.cont [13/16] %v5149, 128
    %5262 = vxpose.xlu0.b32.cont [14/16] %v5150, 128
    %5263 = vxpose.xlu0.b32.cont [15/16] %v5151, 128
    %5264 = vxpose.xlu0.b32.end [16/16] %v5152, 128
    %v5265 = vpop.trf.xlu0
    %v5266 = vpop.trf.xlu0
    %v5267 = vpop.trf.xlu0
    %v5268 = vpop.trf.xlu0
    %v5269 = vpop.trf.xlu0
    %v5270 = vpop.trf.xlu0
    %v5271 = vpop.trf.xlu0
    %v5272 = vpop.trf.xlu0
    %v5273 = vpop.trf.xlu0
    %v5274 = vpop.trf.xlu0
    %v5275 = vpop.trf.xlu0
    %v5276 = vpop.trf.xlu0
    %v5277 = vpop.trf.xlu0
    %v5278 = vpop.trf.xlu0
    %v5279 = vpop.trf.xlu0
    %v5280 = vpop.trf.xlu0
    %v5281 = vxor.u32 %v5169, 2147483648
    %v5282 = vxor.u32 %v5201, 2147483648
    %v5283 = vxor.u32 %v5233, 2147483648
    %v5284 = vxor.u32 %v5265, 2147483648
    %v5285 = vxor.u32 %v5170, 2147483648
    %v5286 = vxor.u32 %v5202, 2147483648
    %v5287 = vxor.u32 %v5234, 2147483648
    %v5288 = vxor.u32 %v5266, 2147483648
    %v5289 = vxor.u32 %v5171, 2147483648
    %v5290 = vxor.u32 %v5203, 2147483648
    %v5291 = vxor.u32 %v5235, 2147483648
    %v5292 = vxor.u32 %v5267, 2147483648
    %v5293 = vxor.u32 %v5172, 2147483648
    %v5294 = vxor.u32 %v5204, 2147483648
    %v5295 = vxor.u32 %v5236, 2147483648
    %v5296 = vxor.u32 %v5268, 2147483648
    %v5297 = vmul.f32 %v5281, 1.442695
    %v5298 = vpow.pop %v5297
    %v5299 = vmul.f32 %v5282, 1.442695
    %v5300 = vpow.pop %v5299
    %v5301 = vmul.f32 %v5283, 1.442695
    %v5302 = vpow.pop %v5301
    %v5303 = vmul.f32 %v5284, 1.442695
    %v5304 = vpow.pop %v5303
    %v5305 = vmul.f32 %v5285, 1.442695
    %v5306 = vpow.pop %v5305
    %v5307 = vmul.f32 %v5286, 1.442695
    %v5308 = vpow.pop %v5307
    %v5309 = vmul.f32 %v5287, 1.442695
    %v5310 = vpow.pop %v5309
    %v5311 = vmul.f32 %v5288, 1.442695
    %v5312 = vpow.pop %v5311
    %v5313 = vmul.f32 %v5289, 1.442695
    %v5314 = vpow.pop %v5313
    %v5315 = vmul.f32 %v5290, 1.442695
    %v5316 = vpow.pop %v5315
    %v5317 = vmul.f32 %v5291, 1.442695
    %v5318 = vpow.pop %v5317
    %v5319 = vmul.f32 %v5292, 1.442695
    %v5320 = vpow.pop %v5319
    %v5321 = vmul.f32 %v5293, 1.442695
    %v5322 = vpow.pop %v5321
    %v5323 = vmul.f32 %v5294, 1.442695
    %v5324 = vpow.pop %v5323
    %v5325 = vmul.f32 %v5295, 1.442695
    %v5326 = vpow.pop %v5325
    %v5327 = vmul.f32 %v5296, 1.442695
    %v5328 = vpow.pop %v5327
    %v5329 = vadd.f32 %v5298, 1.0
    %v5330 = vadd.f32 %v5300, 1.0
    %v5331 = vadd.f32 %v5302, 1.0
    %v5332 = vadd.f32 %v5304, 1.0
    %v5333 = vadd.f32 %v5306, 1.0
    %v5334 = vadd.f32 %v5308, 1.0
    %v5335 = vadd.f32 %v5310, 1.0
    %v5336 = vadd.f32 %v5312, 1.0
    %v5337 = vadd.f32 %v5314, 1.0
    %v5338 = vadd.f32 %v5316, 1.0
    %v5339 = vadd.f32 %v5318, 1.0
    %v5340 = vadd.f32 %v5320, 1.0
    %v5341 = vadd.f32 %v5322, 1.0
    %v5342 = vadd.f32 %v5324, 1.0
    %v5343 = vadd.f32 %v5326, 1.0
    %v5344 = vadd.f32 %v5328, 1.0
    %v5345 = vrcp.pop %v5329
    %v5346 = vmul.f32 %v5329, %v5345
    %v5347 = vsub.f32 1.0, %v5346
    %v5348 = vmul.f32 %v5345, %v5347
    %v5349 = vadd.f32 %v5345, %v5348
    %vm5350 = vweird.f32 %v5329
    %vm5351 = vweird.f32 %v5345
    %vm5352 = vmor %vm5350, %vm5351
    %v5353 = vsel %vm5352, %v5345, %v5349
    %v5354 = vand.u32 2147483647, %v5329
    %vm5355 = vcmp.eq.f32.partialorder %v5354, 8.507059e+37
    %v5356 = vand.u32 %v5329, 2147483648
    %v5357 = vor.u32 1.1754944e-38, %v5356
    %v5358 = vsel %vm5355, %v5357, %v5353
    %v5359 = vmul.f32 1.0, %v5358
    %v5360 = vrcp.pop %v5330
    %v5361 = vmul.f32 %v5330, %v5360
    %v5362 = vsub.f32 1.0, %v5361
    %v5363 = vmul.f32 %v5360, %v5362
    %v5364 = vadd.f32 %v5360, %v5363
    %vm5365 = vweird.f32 %v5330
    %vm5366 = vweird.f32 %v5360
    %vm5367 = vmor %vm5365, %vm5366
    %v5368 = vsel %vm5367, %v5360, %v5364
    %v5369 = vand.u32 2147483647, %v5330
    %vm5370 = vcmp.eq.f32.partialorder %v5369, 8.507059e+37
    %v5371 = vand.u32 %v5330, 2147483648
    %v5372 = vor.u32 1.1754944e-38, %v5371
    %v5373 = vsel %vm5370, %v5372, %v5368
    %v5374 = vmul.f32 1.0, %v5373
    %v5375 = vrcp.pop %v5331
    %v5376 = vmul.f32 %v5331, %v5375
    %v5377 = vsub.f32 1.0, %v5376
    %v5378 = vmul.f32 %v5375, %v5377
    %v5379 = vadd.f32 %v5375, %v5378
    %vm5380 = vweird.f32 %v5331
    %vm5381 = vweird.f32 %v5375
    %vm5382 = vmor %vm5380, %vm5381
    %v5383 = vsel %vm5382, %v5375, %v5379
    %v5384 = vand.u32 2147483647, %v5331
    %vm5385 = vcmp.eq.f32.partialorder %v5384, 8.507059e+37
    %v5386 = vand.u32 %v5331, 2147483648
    %v5387 = vor.u32 1.1754944e-38, %v5386
    %v5388 = vsel %vm5385, %v5387, %v5383
    %v5389 = vmul.f32 1.0, %v5388
    %v5390 = vrcp.pop %v5332
    %v5391 = vmul.f32 %v5332, %v5390
    %v5392 = vsub.f32 1.0, %v5391
    %v5393 = vmul.f32 %v5390, %v5392
    %v5394 = vadd.f32 %v5390, %v5393
    %vm5395 = vweird.f32 %v5332
    %vm5396 = vweird.f32 %v5390
    %vm5397 = vmor %vm5395, %vm5396
    %v5398 = vsel %vm5397, %v5390, %v5394
    %v5399 = vand.u32 2147483647, %v5332
    %vm5400 = vcmp.eq.f32.partialorder %v5399, 8.507059e+37
    %v5401 = vand.u32 %v5332, 2147483648
    %v5402 = vor.u32 1.1754944e-38, %v5401
    %v5403 = vsel %vm5400, %v5402, %v5398
    %v5404 = vmul.f32 1.0, %v5403
    %v5405 = vrcp.pop %v5333
    %v5406 = vmul.f32 %v5333, %v5405
    %v5407 = vsub.f32 1.0, %v5406
    %v5408 = vmul.f32 %v5405, %v5407
    %v5409 = vadd.f32 %v5405, %v5408
    %vm5410 = vweird.f32 %v5333
    %vm5411 = vweird.f32 %v5405
    %vm5412 = vmor %vm5410, %vm5411
    %v5413 = vsel %vm5412, %v5405, %v5409
    %v5414 = vand.u32 2147483647, %v5333
    %vm5415 = vcmp.eq.f32.partialorder %v5414, 8.507059e+37
    %v5416 = vand.u32 %v5333, 2147483648
    %v5417 = vor.u32 1.1754944e-38, %v5416
    %v5418 = vsel %vm5415, %v5417, %v5413
    %v5419 = vmul.f32 1.0, %v5418
    %v5420 = vrcp.pop %v5334
    %v5421 = vmul.f32 %v5334, %v5420
    %v5422 = vsub.f32 1.0, %v5421
    %v5423 = vmul.f32 %v5420, %v5422
    %v5424 = vadd.f32 %v5420, %v5423
    %vm5425 = vweird.f32 %v5334
    %vm5426 = vweird.f32 %v5420
    %vm5427 = vmor %vm5425, %vm5426
    %v5428 = vsel %vm5427, %v5420, %v5424
    %v5429 = vand.u32 2147483647, %v5334
    %vm5430 = vcmp.eq.f32.partialorder %v5429, 8.507059e+37
    %v5431 = vand.u32 %v5334, 2147483648
    %v5432 = vor.u32 1.1754944e-38, %v5431
    %v5433 = vsel %vm5430, %v5432, %v5428
    %v5434 = vmul.f32 1.0, %v5433
    %v5435 = vrcp.pop %v5335
    %v5436 = vmul.f32 %v5335, %v5435
    %v5437 = vsub.f32 1.0, %v5436
    %v5438 = vmul.f32 %v5435, %v5437
    %v5439 = vadd.f32 %v5435, %v5438
    %vm5440 = vweird.f32 %v5335
    %vm5441 = vweird.f32 %v5435
    %vm5442 = vmor %vm5440, %vm5441
    %v5443 = vsel %vm5442, %v5435, %v5439
    %v5444 = vand.u32 2147483647, %v5335
    %vm5445 = vcmp.eq.f32.partialorder %v5444, 8.507059e+37
    %v5446 = vand.u32 %v5335, 2147483648
    %v5447 = vor.u32 1.1754944e-38, %v5446
    %v5448 = vsel %vm5445, %v5447, %v5443
    %v5449 = vmul.f32 1.0, %v5448
    %v5450 = vrcp.pop %v5336
    %v5451 = vmul.f32 %v5336, %v5450
    %v5452 = vsub.f32 1.0, %v5451
    %v5453 = vmul.f32 %v5450, %v5452
    %v5454 = vadd.f32 %v5450, %v5453
    %vm5455 = vweird.f32 %v5336
    %vm5456 = vweird.f32 %v5450
    %vm5457 = vmor %vm5455, %vm5456
    %v5458 = vsel %vm5457, %v5450, %v5454
    %v5459 = vand.u32 2147483647, %v5336
    %vm5460 = vcmp.eq.f32.partialorder %v5459, 8.507059e+37
    %v5461 = vand.u32 %v5336, 2147483648
    %v5462 = vor.u32 1.1754944e-38, %v5461
    %v5463 = vsel %vm5460, %v5462, %v5458
    %v5464 = vmul.f32 1.0, %v5463
    %v5465 = vrcp.pop %v5337
    %v5466 = vmul.f32 %v5337, %v5465
    %v5467 = vsub.f32 1.0, %v5466
    %v5468 = vmul.f32 %v5465, %v5467
    %v5469 = vadd.f32 %v5465, %v5468
    %vm5470 = vweird.f32 %v5337
    %vm5471 = vweird.f32 %v5465
    %vm5472 = vmor %vm5470, %vm5471
    %v5473 = vsel %vm5472, %v5465, %v5469
    %v5474 = vand.u32 2147483647, %v5337
    %vm5475 = vcmp.eq.f32.partialorder %v5474, 8.507059e+37
    %v5476 = vand.u32 %v5337, 2147483648
    %v5477 = vor.u32 1.1754944e-38, %v5476
    %v5478 = vsel %vm5475, %v5477, %v5473
    %v5479 = vmul.f32 1.0, %v5478
    %v5480 = vrcp.pop %v5338
    %v5481 = vmul.f32 %v5338, %v5480
    %v5482 = vsub.f32 1.0, %v5481
    %v5483 = vmul.f32 %v5480, %v5482
    %v5484 = vadd.f32 %v5480, %v5483
    %vm5485 = vweird.f32 %v5338
    %vm5486 = vweird.f32 %v5480
    %vm5487 = vmor %vm5485, %vm5486
    %v5488 = vsel %vm5487, %v5480, %v5484
    %v5489 = vand.u32 2147483647, %v5338
    %vm5490 = vcmp.eq.f32.partialorder %v5489, 8.507059e+37
    %v5491 = vand.u32 %v5338, 2147483648
    %v5492 = vor.u32 1.1754944e-38, %v5491
    %v5493 = vsel %vm5490, %v5492, %v5488
    %v5494 = vmul.f32 1.0, %v5493
    %v5495 = vrcp.pop %v5339
    %v5496 = vmul.f32 %v5339, %v5495
    %v5497 = vsub.f32 1.0, %v5496
    %v5498 = vmul.f32 %v5495, %v5497
    %v5499 = vadd.f32 %v5495, %v5498
    %vm5500 = vweird.f32 %v5339
    %vm5501 = vweird.f32 %v5495
    %vm5502 = vmor %vm5500, %vm5501
    %v5503 = vsel %vm5502, %v5495, %v5499
    %v5504 = vand.u32 2147483647, %v5339
    %vm5505 = vcmp.eq.f32.partialorder %v5504, 8.507059e+37
    %v5506 = vand.u32 %v5339, 2147483648
    %v5507 = vor.u32 1.1754944e-38, %v5506
    %v5508 = vsel %vm5505, %v5507, %v5503
    %v5509 = vmul.f32 1.0, %v5508
    %v5510 = vrcp.pop %v5340
    %v5511 = vmul.f32 %v5340, %v5510
    %v5512 = vsub.f32 1.0, %v5511
    %v5513 = vmul.f32 %v5510, %v5512
    %v5514 = vadd.f32 %v5510, %v5513
    %vm5515 = vweird.f32 %v5340
    %vm5516 = vweird.f32 %v5510
    %vm5517 = vmor %vm5515, %vm5516
    %v5518 = vsel %vm5517, %v5510, %v5514
    %v5519 = vand.u32 2147483647, %v5340
    %vm5520 = vcmp.eq.f32.partialorder %v5519, 8.507059e+37
    %v5521 = vand.u32 %v5340, 2147483648
    %v5522 = vor.u32 1.1754944e-38, %v5521
    %v5523 = vsel %vm5520, %v5522, %v5518
    %v5524 = vmul.f32 1.0, %v5523
    %v5525 = vrcp.pop %v5341
    %v5526 = vmul.f32 %v5341, %v5525
    %v5527 = vsub.f32 1.0, %v5526
    %v5528 = vmul.f32 %v5525, %v5527
    %v5529 = vadd.f32 %v5525, %v5528
    %vm5530 = vweird.f32 %v5341
    %vm5531 = vweird.f32 %v5525
    %vm5532 = vmor %vm5530, %vm5531
    %v5533 = vsel %vm5532, %v5525, %v5529
    %v5534 = vand.u32 2147483647, %v5341
    %vm5535 = vcmp.eq.f32.partialorder %v5534, 8.507059e+37
    %v5536 = vand.u32 %v5341, 2147483648
    %v5537 = vor.u32 1.1754944e-38, %v5536
    %v5538 = vsel %vm5535, %v5537, %v5533
    %v5539 = vmul.f32 1.0, %v5538
    %v5540 = vrcp.pop %v5342
    %v5541 = vmul.f32 %v5342, %v5540
    %v5542 = vsub.f32 1.0, %v5541
    %v5543 = vmul.f32 %v5540, %v5542
    %v5544 = vadd.f32 %v5540, %v5543
    %vm5545 = vweird.f32 %v5342
    %vm5546 = vweird.f32 %v5540
    %vm5547 = vmor %vm5545, %vm5546
    %v5548 = vsel %vm5547, %v5540, %v5544
    %v5549 = vand.u32 2147483647, %v5342
    %vm5550 = vcmp.eq.f32.partialorder %v5549, 8.507059e+37
    %v5551 = vand.u32 %v5342, 2147483648
    %v5552 = vor.u32 1.1754944e-38, %v5551
    %v5553 = vsel %vm5550, %v5552, %v5548
    %v5554 = vmul.f32 1.0, %v5553
    %v5555 = vrcp.pop %v5343
    %v5556 = vmul.f32 %v5343, %v5555
    %v5557 = vsub.f32 1.0, %v5556
    %v5558 = vmul.f32 %v5555, %v5557
    %v5559 = vadd.f32 %v5555, %v5558
    %vm5560 = vweird.f32 %v5343
    %vm5561 = vweird.f32 %v5555
    %vm5562 = vmor %vm5560, %vm5561
    %v5563 = vsel %vm5562, %v5555, %v5559
    %v5564 = vand.u32 2147483647, %v5343
    %vm5565 = vcmp.eq.f32.partialorder %v5564, 8.507059e+37
    %v5566 = vand.u32 %v5343, 2147483648
    %v5567 = vor.u32 1.1754944e-38, %v5566
    %v5568 = vsel %vm5565, %v5567, %v5563
    %v5569 = vmul.f32 1.0, %v5568
    %v5570 = vrcp.pop %v5344
    %v5571 = vmul.f32 %v5344, %v5570
    %v5572 = vsub.f32 1.0, %v5571
    %v5573 = vmul.f32 %v5570, %v5572
    %v5574 = vadd.f32 %v5570, %v5573
    %vm5575 = vweird.f32 %v5344
    %vm5576 = vweird.f32 %v5570
    %vm5577 = vmor %vm5575, %vm5576
    %v5578 = vsel %vm5577, %v5570, %v5574
    %v5579 = vand.u32 2147483647, %v5344
    %vm5580 = vcmp.eq.f32.partialorder %v5579, 8.507059e+37
    %v5581 = vand.u32 %v5344, 2147483648
    %v5582 = vor.u32 1.1754944e-38, %v5581
    %v5583 = vsel %vm5580, %v5582, %v5578
    %v5584 = vmul.f32 1.0, %v5583
    %v5585 = vtanh.pop %v5173
    %v5586 = vtanh.pop %v5205
    %v5587 = vtanh.pop %v5237
    %v5588 = vtanh.pop %v5269
    %v5589 = vtanh.pop %v5174
    %v5590 = vtanh.pop %v5206
    %v5591 = vtanh.pop %v5238
    %v5592 = vtanh.pop %v5270
    %v5593 = vtanh.pop %v5175
    %v5594 = vtanh.pop %v5207
    %v5595 = vtanh.pop %v5239
    %v5596 = vtanh.pop %v5271
    %v5597 = vtanh.pop %v5176
    %v5598 = vtanh.pop %v5208
    %v5599 = vtanh.pop %v5240
    %v5600 = vtanh.pop %v5272
    %v5601 = vmul.f32 %v5359, %v5177
    %v5602 = vmul.f32 %v5374, %v5209
    %v5603 = vmul.f32 %v5389, %v5241
    %v5604 = vmul.f32 %v5404, %v5273
    %v5605 = vmul.f32 %v5419, %v5178
    %v5606 = vmul.f32 %v5434, %v5210
    %v5607 = vmul.f32 %v5449, %v5242
    %v5608 = vmul.f32 %v5464, %v5274
    %v5609 = vmul.f32 %v5479, %v5179
    %v5610 = vmul.f32 %v5494, %v5211
    %v5611 = vmul.f32 %v5509, %v5243
    %v5612 = vmul.f32 %v5524, %v5275
    %v5613 = vmul.f32 %v5539, %v5180
    %v5614 = vmul.f32 %v5554, %v5212
    %v5615 = vmul.f32 %v5569, %v5244
    %v5616 = vmul.f32 %v5584, %v5276
    %v5617 = vsub.f32 1.0, %v5359
    %v5618 = vsub.f32 1.0, %v5374
    %v5619 = vsub.f32 1.0, %v5389
    %v5620 = vsub.f32 1.0, %v5404
    %v5621 = vsub.f32 1.0, %v5419
    %v5622 = vsub.f32 1.0, %v5434
    %v5623 = vsub.f32 1.0, %v5449
    %v5624 = vsub.f32 1.0, %v5464
    %v5625 = vsub.f32 1.0, %v5479
    %v5626 = vsub.f32 1.0, %v5494
    %v5627 = vsub.f32 1.0, %v5509
    %v5628 = vsub.f32 1.0, %v5524
    %v5629 = vsub.f32 1.0, %v5539
    %v5630 = vsub.f32 1.0, %v5554
    %v5631 = vsub.f32 1.0, %v5569
    %v5632 = vsub.f32 1.0, %v5584
    %v5633 = vmul.f32 %v5617, %v5585
    %v5634 = vmul.f32 %v5618, %v5586
    %v5635 = vmul.f32 %v5619, %v5587
    %v5636 = vmul.f32 %v5620, %v5588
    %v5637 = vmul.f32 %v5621, %v5589
    %v5638 = vmul.f32 %v5622, %v5590
    %v5639 = vmul.f32 %v5623, %v5591
    %v5640 = vmul.f32 %v5624, %v5592
    %v5641 = vmul.f32 %v5625, %v5593
    %v5642 = vmul.f32 %v5626, %v5594
    %v5643 = vmul.f32 %v5627, %v5595
    %v5644 = vmul.f32 %v5628, %v5596
    %v5645 = vmul.f32 %v5629, %v5597
    %v5646 = vmul.f32 %v5630, %v5598
    %v5647 = vmul.f32 %v5631, %v5599
    %v5648 = vmul.f32 %v5632, %v5600
    %v5649 = vadd.f32 %v5601, %v5633
    %v5650 = vadd.f32 %v5602, %v5634
    %v5651 = vadd.f32 %v5603, %v5635
    %v5652 = vadd.f32 %v5604, %v5636
    %v5653 = vadd.f32 %v5605, %v5637
    %v5654 = vadd.f32 %v5606, %v5638
    %v5655 = vadd.f32 %v5607, %v5639
    %v5656 = vadd.f32 %v5608, %v5640
    %v5657 = vadd.f32 %v5609, %v5641
    %v5658 = vadd.f32 %v5610, %v5642
    %v5659 = vadd.f32 %v5611, %v5643
    %v5660 = vadd.f32 %v5612, %v5644
    %v5661 = vadd.f32 %v5613, %v5645
    %v5662 = vadd.f32 %v5614, %v5646
    %v5663 = vadd.f32 %v5615, %v5647
    %v5664 = vadd.f32 %v5616, %v5648
    %5665 = vst [vmem:[#allocation7] sm:$0xff] %v5649
    %5666 = vst [vmem:[#allocation7 + $0x8] sm:$0xff] %v5650
    %5667 = vst [vmem:[#allocation7 + $0x10] sm:$0xff] %v5653
    %5668 = vst [vmem:[#allocation7 + $0x18] sm:$0xff] %v5654
    %5669 = vst [vmem:[#allocation7 + $0x20] sm:$0xff] %v5657
    %5670 = vst [vmem:[#allocation7 + $0x28] sm:$0xff] %v5658
    %5671 = vst [vmem:[#allocation7 + $0x30] sm:$0xff] %v5661
    %5672 = vst [vmem:[#allocation7 + $0x38] sm:$0xff] %v5662
    %s5673 = scalar_lea.vmem [#allocation7], 64
    %5674 = vst [vmem:[%s5673] sm:$0xff] %v5651
    %5675 = vst [vmem:[%s5673 + $0x8] sm:$0xff] %v5652
    %5676 = vst [vmem:[%s5673 + $0x10] sm:$0xff] %v5655
    %5677 = vst [vmem:[%s5673 + $0x18] sm:$0xff] %v5656
    %5678 = vst [vmem:[%s5673 + $0x20] sm:$0xff] %v5659
    %5679 = vst [vmem:[%s5673 + $0x28] sm:$0xff] %v5660
    %5680 = vst [vmem:[%s5673 + $0x30] sm:$0xff] %v5663
    %5681 = vst [vmem:[%s5673 + $0x38] sm:$0xff] %v5664
    // Predicated region
    $region22: #{tpu_custom_call.1} parent=1 // pred_check
      _
    $region23: #{tpu_custom_call.1} parent=1 // pred_check_branch
      %5683 = sbr.rel (0) target = $region25
    $region24: #{tpu_custom_call.1} parent=1 // pred_region
      %5685 = vsyncadd [#allocation6], 0
      %s5686 = sshll.u32 [#allocation7], 4
      %s5687 = int_to_ptr.vmem [resolvable:$true] %s5686
      %s5688 = sshll.u32 %s4, 4
      %s5689 = int_to_ptr.hbm [resolvable:$true] %s5688
      %5694 = dma.vmem_to_hbm [thread:$0]  %s5687, 2048, %s5689, [#allocation6], 256, 256, 16
    $region25: #{tpu_custom_call.1} parent=1 // pred_fallthru
      _
    // Predicated region
    $region26: #{tpu_custom_call.1} parent=1 // pred_check
      _
    $region27: #{tpu_custom_call.1} parent=1 // pred_check_branch
      %5696 = sbr.rel (0) target = $region29
    $region28: #{tpu_custom_call.1} parent=1 // pred_region
      %5698 = dma.done [#allocation6], 2048
    $region29: #{tpu_custom_call.1} parent=1 // pred_fallthru
      _
    %5699 = vsyncpa [#allocation5], 1
    %5700 = vsyncpa [#allocation6], 1

</llo_original>
